<compile_context>
chip_gen: v6e
topology: v6e:2x2x1
jax: 0.10.0
libtpu: 0.0.40
codegen_flags: <defaults>
</compile_context>

<pallas_src>
import functools

import jax
import jax.numpy as jnp
from jax.experimental import pallas as pl
from jax.experimental.pallas import tpu as pltpu

EPS = 1e-5
KSIZE = 7
CLS_PAD = 128  # lane-dense padding for the logits output


def _bn(z2, w, b, inv_m):
    """Batch-stat BatchNorm1d over rows (one reduction pass).

    z2: (M, Cz) f32, w/b: (1, Cz).  Biased variance over M = N*T, matching
    nn.BatchNorm1d(affine=True, track_running_stats=False).
    """
    s = jnp.sum(z2, axis=0, keepdims=True)
    ss = jnp.sum(z2 * z2, axis=0, keepdims=True)
    mean = s * inv_m
    var = jnp.maximum(ss * inv_m - mean * mean, 0.0)
    scale = w * jax.lax.rsqrt(var + EPS)          # rsqrt -> EUP (free slot)
    shift = b - mean * scale
    return z2 * scale + shift


def make_wavenet_kernel(N, T, Cin, C, P, n_blocks):
    NT = N * T
    inv_m = 1.0 / NT
    bf16 = jnp.bfloat16

    def kernel(dil_ref,
               x_in_ref, stem_w_ref, bn_w_ref, bn_b_ref,
               wfg_ref, bnfg_w_ref, bnfg_b_ref,
               w1_ref, bno_w_ref, bno_b_ref,
               out_w_ref, logw_ref, logb_ref,
               logits_ref,
               x_ref, outs_ref, xp_ref):
        b = pl.program_id(0)
        d = dil_ref[b]                              # dilation of this block

        # ---------------- stem (block 0 only): tanh(bn(conv1x1(x))) ---------
        @pl.when(b == 0)
        def _stem():
            # pad regions of the time-padded scratch stay zero forever
            xp_ref[:, :P, :] = jnp.zeros((N, P, C), jnp.float32)
            xp_ref[:, P + T:, :] = jnp.zeros((N, P, C), jnp.float32)
            z = jnp.dot(x_in_ref[...].reshape(NT, Cin).astype(bf16),
                        stem_w_ref[...], preferred_element_type=jnp.float32)
            z = jnp.tanh(_bn(z, bn_w_ref[...], bn_b_ref[...], inv_m))
            x_ref[...] = z.reshape(N, T, C)
            outs_ref[...] = jnp.zeros((N, T, C), jnp.float32)

        # ---------------- ResnetBlock b --------------------------------------
        # residual stream -> center of padded scratch (emulates F.pad(x,(3d,3d)))
        xp_ref[:, P:P + T, :] = x_ref[...]

        # fused filter+gate dilated conv (k=7): 7 taps, each a bf16
        # (N*T,128)x(128,256) matmul accumulated in f32.
        acc = jnp.zeros((NT, 2 * C), jnp.float32)
        for k in range(KSIZE):
            xk = xp_ref[:, pl.ds(P + (k - 3) * d, T), :]       # (N, T, C)
            acc = acc + jnp.dot(xk.reshape(NT, C).astype(bf16), wfg_ref[k],
                                preferred_element_type=jnp.float32)

        zfg = _bn(acc, bnfg_w_ref[...], bnfg_b_ref[...], inv_m)
        h = jnp.tanh(zfg[:, :C]) * jax.nn.sigmoid(zfg[:, C:])   # gated (NT, C)

        z1 = jnp.dot(h.astype(bf16), w1_ref[...],
                     preferred_element_type=jnp.float32)
        out = jnp.tanh(_bn(z1, bno_w_ref[...], bno_b_ref[...], inv_m))
        out = out.reshape(N, T, C)

        x_ref[...] = x_ref[...] + out          # residual:  x <- out + x
        outs_ref[...] = outs_ref[...] + out    # skip sum:  outs += out

        # ---------------- head (last block only) -----------------------------
        @pl.when(b == n_blocks - 1)
        def _head():
            zo = jnp.dot(outs_ref[...].reshape(NT, C).astype(bf16),
                         out_w_ref[...], preferred_element_type=jnp.float32)
            zo = jnp.tanh(_bn(zo, bn_w_ref[...], bn_b_ref[...], inv_m))
            lg = jnp.dot(zo.astype(bf16), logw_ref[...],
                         preferred_element_type=jnp.float32) + logb_ref[...]
            logits_ref[...] = lg.reshape(N, T, CLS_PAD)

    return kernel


# --------------------------------------------------------------------- params
def init_params(key, channels_in, channels_out, num_classes, dilations, num_layers):
    C = channels_out
    n_blocks = num_layers * len(dilations)
    ks = jax.random.split(key, 8)

    def conv(k, shape, scale=0.05):
        return jax.random.normal(k, shape, jnp.float32) * scale

    wf = conv(ks[0], (n_blocks, KSIZE, C, C))
    wg = conv(ks[1], (n_blocks, KSIZE, C, C))
    return {
        # weights stored (Cin, Cout) / (K, Cin, Cout) for right-matmul
        "stem_w": conv(ks[2], (channels_in, C)),
        "bn_w": jnp.ones((1, C), jnp.float32),       # shared self.bn affine
        "bn_b": jnp.zeros((1, C), jnp.float32),
        "wfg": jnp.concatenate([wf, wg], axis=-1),   # (nb, 7, C, 2C) filter|gate
        "bnfg_w": jnp.ones((n_blocks, 1, 2 * C), jnp.float32),
        "bnfg_b": jnp.zeros((n_blocks, 1, 2 * C), jnp.float32),
        "w1": conv(ks[3], (n_blocks, C, C)),
        "bno_w": jnp.ones((n_blocks, 1, C), jnp.float32),
        "bno_b": jnp.zeros((n_blocks, 1, C), jnp.float32),
        "out_w": conv(ks[4], (C, C)),
        "logits_w": conv(ks[5], (C, num_classes)),
        "logits_b": conv(ks[6], (num_classes,)),
    }


# -------------------------------------------------------------------- wrapper
def wavenet_forward(x_nct, params, *, num_classes, block_dilations):
    # x_nct: (N, C_in, T) PyTorch layout
    x = jnp.transpose(x_nct, (0, 2, 1)).astype(jnp.float32)   # (N, T, Cin)
    N, T, Cin = x.shape
    C = params["stem_w"].shape[1]
    n_blocks = len(block_dilations)
    P = 3 * max(block_dilations)
    dils = jnp.asarray(block_dilations, jnp.int32)
    bf16 = jnp.bfloat16

    # lane-dense head weights (pad num_classes -> 128)
    logw = jnp.zeros((C, CLS_PAD), jnp.float32).at[:, :num_classes].set(params["logits_w"])
    logb = jnp.zeros((1, CLS_PAD), jnp.float32).at[:, :num_classes].set(
        params["logits_b"].reshape(1, -1))

    kernel = make_wavenet_kernel(N, T, Cin, C, P, n_blocks)

    grid_spec = pltpu.PrefetchScalarGridSpec(
        num_scalar_prefetch=1,
        grid=(n_blocks,),
        in_specs=[
            pl.BlockSpec((N, T, Cin), lambda b, d: (0, 0, 0)),                 # x_in
            pl.BlockSpec((Cin, C), lambda b, d: (0, 0)),                       # stem_w
            pl.BlockSpec((1, C), lambda b, d: (0, 0)),                         # bn_w
            pl.BlockSpec((1, C), lambda b, d: (0, 0)),                         # bn_b
            pl.BlockSpec((None, KSIZE, C, 2 * C), lambda b, d: (b, 0, 0, 0)),  # wfg
            pl.BlockSpec((None, 1, 2 * C), lambda b, d: (b, 0, 0)),            # bnfg_w
            pl.BlockSpec((None, 1, 2 * C), lambda b, d: (b, 0, 0)),            # bnfg_b
            pl.BlockSpec((None, C, C), lambda b, d: (b, 0, 0)),                # w1
            pl.BlockSpec((None, 1, C), lambda b, d: (b, 0, 0)),                # bno_w
            pl.BlockSpec((None, 1, C), lambda b, d: (b, 0, 0)),                # bno_b
            pl.BlockSpec((C, C), lambda b, d: (0, 0)),                         # out_w
            pl.BlockSpec((C, CLS_PAD), lambda b, d: (0, 0)),                   # logits_w
            pl.BlockSpec((1, CLS_PAD), lambda b, d: (0, 0)),                   # logits_b
        ],
        out_specs=pl.BlockSpec((N, T, CLS_PAD), lambda b, d: (0, 0, 0)),
        scratch_shapes=[
            pltpu.VMEM((N, T, C), jnp.float32),            # residual stream x
            pltpu.VMEM((N, T, C), jnp.float32),            # skip accumulator outs
            pltpu.VMEM((N, T + 2 * P, C), jnp.float32),    # time-padded activations
        ],
    )

    logits = pl.pallas_call(
        kernel,
        grid_spec=grid_spec,
        out_shape=jax.ShapeDtypeStruct((N, T, CLS_PAD), jnp.float32),
        compiler_params=pltpu.CompilerParams(
            dimension_semantics=("arbitrary",),            # sequential over blocks
            vmem_limit_bytes=64 * 1024 * 1024,
        ),
    )(dils, x,
      params["stem_w"].astype(bf16),
      params["bn_w"], params["bn_b"],
      params["wfg"].astype(bf16),
      params["bnfg_w"], params["bnfg_b"],
      params["w1"].astype(bf16),
      params["bno_w"], params["bno_b"],
      params["out_w"].astype(bf16),
      logw.astype(bf16), logb)

    # slice lane padding away, back to PyTorch NCT
    return jnp.transpose(logits[:, :, :num_classes], (0, 2, 1))

# TODO(synk): for large N*T (v7x 64 MiB VMEM) add a batch/time tile axis with a
# two-pass BatchNorm; at these shapes everything fits comfortably resident.


# ----------------------------------------------------------------------- main
if __name__ == "__main__":
    key = jax.random.PRNGKey(0)
    k_in, k_params = jax.random.split(key)

    N, Cin, T = 2, 64, 64
    C, num_classes = 128, 32          # channels_out must be 128 (residual add)
    dilations = [1, 2, 4, 8, 16]
    num_layers = 3
    block_dilations = tuple(dilations) * num_layers

    params = init_params(k_params, Cin, C, num_classes, dilations, num_layers)
    x = jax.random.normal(k_in, (N, Cin, T), jnp.float32)

    fwd = jax.jit(functools.partial(
        wavenet_forward,
        num_classes=num_classes,
        block_dilations=block_dilations))

    logits = fwd(x, params)
    jax.block_until_ready(logits)
    assert logits.shape == (N, num_classes, T)
    assert bool(jnp.all(jnp.isfinite(logits)))
    print("KERNEL_OK")
</pallas_src>

<mosaic_0001>
module attributes {stable_mosaic.version = 11 : i64} {
  func.func @kernel(%arg0: i32, %arg1: memref<15xi32, #tpu.memory_space<smem>>, %arg2: memref<2x64x64xf32, #tpu.memory_space<vmem>>, %arg3: memref<64x128xbf16, #tpu.memory_space<vmem>>, %arg4: memref<1x128xf32, #tpu.memory_space<vmem>>, %arg5: memref<1x128xf32, #tpu.memory_space<vmem>>, %arg6: memref<1x7x128x256xbf16, #tpu.memory_space<vmem>>, %arg7: memref<1x1x256xf32, #tpu.memory_space<vmem>>, %arg8: memref<1x1x256xf32, #tpu.memory_space<vmem>>, %arg9: memref<1x128x128xbf16, #tpu.memory_space<vmem>>, %arg10: memref<1x1x128xf32, #tpu.memory_space<vmem>>, %arg11: memref<1x1x128xf32, #tpu.memory_space<vmem>>, %arg12: memref<128x128xbf16, #tpu.memory_space<vmem>>, %arg13: memref<128x128xbf16, #tpu.memory_space<vmem>>, %arg14: memref<1x128xf32, #tpu.memory_space<vmem>>, %arg15: memref<2x64x128xf32, #tpu.memory_space<vmem>>, %arg16: memref<2x64x128xf32, #tpu.memory_space<vmem>>, %arg17: memref<2x64x128xf32, #tpu.memory_space<vmem>>, %arg18: memref<2x160x128xf32, #tpu.memory_space<vmem>>) attributes {dimension_semantics = [#tpu.dimension_semantics<arbitrary>], iteration_bounds = array<i64: 15>, scalar_prefetch = 1 : i64, scratch_operands = 3 : i64, tpu.core_type = #tpu.core_type<tc>, window_params = [{pipeline_mode = #tpu.pipeline_mode<synchronous>, transform_indices = @transform_0, window_bounds = array<i64: 2, 64, 64>}, {pipeline_mode = #tpu.pipeline_mode<synchronous>, transform_indices = @transform_1, window_bounds = array<i64: 64, 128>}, {pipeline_mode = #tpu.pipeline_mode<synchronous>, transform_indices = @transform_2, window_bounds = array<i64: 1, 128>}, {pipeline_mode = #tpu.pipeline_mode<synchronous>, transform_indices = @transform_3, window_bounds = array<i64: 1, 128>}, {transform_indices = @transform_4, window_bounds = array<i64: 1, 7, 128, 256>}, {transform_indices = @transform_5, window_bounds = array<i64: 1, 1, 256>}, {transform_indices = @transform_6, window_bounds = array<i64: 1, 1, 256>}, {transform_indices = @transform_7, window_bounds = array<i64: 1, 128, 128>}, {transform_indices = @transform_8, window_bounds = array<i64: 1, 1, 128>}, {transform_indices = @transform_9, window_bounds = array<i64: 1, 1, 128>}, {pipeline_mode = #tpu.pipeline_mode<synchronous>, transform_indices = @transform_10, window_bounds = array<i64: 128, 128>}, {pipeline_mode = #tpu.pipeline_mode<synchronous>, transform_indices = @transform_11, window_bounds = array<i64: 128, 128>}, {pipeline_mode = #tpu.pipeline_mode<synchronous>, transform_indices = @transform_12, window_bounds = array<i64: 1, 128>}, {pipeline_mode = #tpu.pipeline_mode<synchronous>, transform_indices = @transform_13, window_bounds = array<i64: 2, 64, 128>}]} {
    %0 = arith.index_cast %arg0 : i32 to index
    %1 = memref.load %arg1[%0] : memref<15xi32, #tpu.memory_space<smem>>
    %c0_i32 = arith.constant 0 : i32
    %2 = arith.cmpi eq, %arg0, %c0_i32 : i32
    %3 = arith.extui %2 : i1 to i32
    %c0_i32_0 = arith.constant 0 : i32
    %4 = arith.cmpi ne, %3, %c0_i32_0 : i32
    scf.if %4 {
      %cst_97 = arith.constant 0.000000e+00 : f32
      %156 = vector.broadcast %cst_97 : f32 to vector<2x48x128xf32>
      %c0_98 = arith.constant 0 : index
      %c0_99 = arith.constant 0 : index
      %c0_100 = arith.constant 0 : index
      %157 = vector.load %arg18[%c0_98, %c0_99, %c0_100] : memref<2x160x128xf32, #tpu.memory_space<vmem>>, vector<2x48x128xf32>
      tpu.vector_store %arg18[%c0_98, %c0_99, %c0_100], %156 {strides = array<i32>} : memref<2x160x128xf32, #tpu.memory_space<vmem>>, vector<2x48x128xf32>,
      %cst_101 = arith.constant 0.000000e+00 : f32
      %158 = vector.broadcast %cst_101 : f32 to vector<2x48x128xf32>
      %c0_102 = arith.constant 0 : index
      %c112 = arith.constant 112 : index
      %c0_103 = arith.constant 0 : index
      %159 = vector.load %arg18[%c0_102, %c112, %c0_103] : memref<2x160x128xf32, #tpu.memory_space<vmem>>, vector<2x48x128xf32>
      tpu.vector_store %arg18[%c0_102, %c112, %c0_103], %158 {strides = array<i32>} : memref<2x160x128xf32, #tpu.memory_space<vmem>>, vector<2x48x128xf32>,
      %c0_104 = arith.constant 0 : index
      %c0_105 = arith.constant 0 : index
      %c0_106 = arith.constant 0 : index
      %160 = vector.load %arg2[%c0_104, %c0_105, %c0_106] : memref<2x64x64xf32, #tpu.memory_space<vmem>>, vector<2x64x64xf32>
      %161 = vector.shape_cast %160 : vector<2x64x64xf32> to vector<128x64xf32>
      %162 = arith.truncf %161 : vector<128x64xf32> to vector<128x64xbf16>
      %c0_107 = arith.constant 0 : index
      %c0_108 = arith.constant 0 : index
      %163 = vector.load %arg3[%c0_107, %c0_108] : memref<64x128xbf16, #tpu.memory_space<vmem>>, vector<64x128xbf16>
      %cst_109 = arith.constant dense<0.000000e+00> : vector<128x128xf32>
      %164 = tpu.matmul %162, %163, %cst_109 {dimension_numbers = #tpu.dot_dimension_numbers<[1], [0], [0], [1], [0, 0, 1, 1], [], []>} : vector<128x64xbf16>, vector<64x128xbf16>, vector<128x128xf32> -> vector<128x128xf32>
      %c0_110 = arith.constant 0 : index
      %c0_111 = arith.constant 0 : index
      %165 = vector.load %arg4[%c0_110, %c0_111] : memref<1x128xf32, #tpu.memory_space<vmem>>, vector<1x128xf32>
      %c0_112 = arith.constant 0 : index
      %c0_113 = arith.constant 0 : index
      %166 = vector.load %arg5[%c0_112, %c0_113] : memref<1x128xf32, #tpu.memory_space<vmem>>, vector<1x128xf32>
      %cst_114 = arith.constant dense<0.000000e+00> : vector<128xf32>
      %167 = vector.multi_reduction <add>, %164, %cst_114 [0] : vector<128x128xf32> to vector<128xf32>
      %168 = vector.shape_cast %167 : vector<128xf32> to vector<1x128xf32>
      %169 = arith.mulf %164, %164 : vector<128x128xf32>
      %cst_115 = arith.constant dense<0.000000e+00> : vector<128xf32>
      %170 = vector.multi_reduction <add>, %169, %cst_115 [0] : vector<128x128xf32> to vector<128xf32>
      %171 = vector.shape_cast %170 : vector<128xf32> to vector<1x128xf32>
      %cst_116 = arith.constant 7.812500e-03 : f32
      %172 = vector.broadcast %cst_116 : f32 to vector<1x128xf32>
      %173 = arith.mulf %168, %172 : vector<1x128xf32>
      %cst_117 = arith.constant 7.812500e-03 : f32
      %174 = vector.broadcast %cst_117 : f32 to vector<1x128xf32>
      %175 = arith.mulf %171, %174 : vector<1x128xf32>
      %176 = arith.mulf %173, %173 : vector<1x128xf32>
      %177 = arith.subf %175, %176 : vector<1x128xf32>
      %cst_118 = arith.constant 0.000000e+00 : f32
      %178 = vector.broadcast %cst_118 : f32 to vector<1x128xf32>
      %179 = arith.maximumf %177, %178 : vector<1x128xf32>
      %cst_119 = arith.constant 9.99999974E-6 : f32
      %180 = vector.broadcast %cst_119 : f32 to vector<1x128xf32>
      %181 = arith.addf %179, %180 : vector<1x128xf32>
      %182 = math.rsqrt %181 : vector<1x128xf32>
      %183 = arith.mulf %165, %182 : vector<1x128xf32>
      %184 = arith.mulf %173, %183 : vector<1x128xf32>
      %185 = arith.subf %166, %184 : vector<1x128xf32>
      %186 = vector.broadcast %183 : vector<1x128xf32> to vector<128x128xf32>
      %187 = arith.mulf %164, %186 : vector<128x128xf32>
      %188 = vector.broadcast %185 : vector<1x128xf32> to vector<128x128xf32>
      %189 = arith.addf %187, %188 : vector<128x128xf32>
      %190 = math.tanh %189 : vector<128x128xf32>
      %191 = vector.shape_cast %190 : vector<128x128xf32> to vector<2x64x128xf32>
      %c0_120 = arith.constant 0 : index
      %c0_121 = arith.constant 0 : index
      %c0_122 = arith.constant 0 : index
      %192 = vector.load %arg16[%c0_120, %c0_121, %c0_122] : memref<2x64x128xf32, #tpu.memory_space<vmem>>, vector<2x64x128xf32>
      tpu.vector_store %arg16[%c0_120, %c0_121, %c0_122], %191 {strides = array<i32>} : memref<2x64x128xf32, #tpu.memory_space<vmem>>, vector<2x64x128xf32>,
      %cst_123 = arith.constant 0.000000e+00 : f32
      %193 = vector.broadcast %cst_123 : f32 to vector<2x64x128xf32>
      %c0_124 = arith.constant 0 : index
      %c0_125 = arith.constant 0 : index
      %c0_126 = arith.constant 0 : index
      %194 = vector.load %arg17[%c0_124, %c0_125, %c0_126] : memref<2x64x128xf32, #tpu.memory_space<vmem>>, vector<2x64x128xf32>
      tpu.vector_store %arg17[%c0_124, %c0_125, %c0_126], %193 {strides = array<i32>} : memref<2x64x128xf32, #tpu.memory_space<vmem>>, vector<2x64x128xf32>,
    } else {
    }
    %c0 = arith.constant 0 : index
    %c0_1 = arith.constant 0 : index
    %c0_2 = arith.constant 0 : index
    %5 = vector.load %arg16[%c0, %c0_1, %c0_2] : memref<2x64x128xf32, #tpu.memory_space<vmem>>, vector<2x64x128xf32>
    %c0_3 = arith.constant 0 : index
    %c48 = arith.constant 48 : index
    %c0_4 = arith.constant 0 : index
    %6 = vector.load %arg18[%c0_3, %c48, %c0_4] : memref<2x160x128xf32, #tpu.memory_space<vmem>>, vector<2x64x128xf32>
    tpu.vector_store %arg18[%c0_3, %c48, %c0_4], %5 {strides = array<i32>} : memref<2x160x128xf32, #tpu.memory_space<vmem>>, vector<2x64x128xf32>,
    %cst = arith.constant 0.000000e+00 : f32
    %7 = vector.broadcast %cst : f32 to vector<128x256xf32>
    %c-3_i32 = arith.constant -3 : i32
    %8 = arith.muli %c-3_i32, %1 : i32
    %c48_i32 = arith.constant 48 : i32
    %9 = arith.addi %c48_i32, %8 : i32
    %c0_5 = arith.constant 0 : index
    %10 = arith.index_cast %9 : i32 to index
    %c0_6 = arith.constant 0 : index
    %11 = vector.load %arg18[%c0_5, %10, %c0_6] : memref<2x160x128xf32, #tpu.memory_space<vmem>>, vector<2x64x128xf32>
    %12 = vector.shape_cast %11 : vector<2x64x128xf32> to vector<128x128xf32>
    %13 = arith.truncf %12 : vector<128x128xf32> to vector<128x128xbf16>
    %c0_7 = arith.constant 0 : index
    %c0_8 = arith.constant 0 : index
    %c0_9 = arith.constant 0 : index
    %c0_10 = arith.constant 0 : index
    %14 = vector.load %arg6[%c0_7, %c0_8, %c0_9, %c0_10] : memref<1x7x128x256xbf16, #tpu.memory_space<vmem>>, vector<1x1x128x256xbf16>
    %15 = vector.shape_cast %14 : vector<1x1x128x256xbf16> to vector<128x256xbf16>
    %cst_11 = arith.constant dense<0.000000e+00> : vector<128x256xf32>
    %16 = tpu.matmul %13, %15, %cst_11 {dimension_numbers = #tpu.dot_dimension_numbers<[1], [0], [0], [1], [0, 0, 1, 1], [], []>} : vector<128x128xbf16>, vector<128x256xbf16>, vector<128x256xf32> -> vector<128x256xf32>
    %17 = arith.addf %7, %16 : vector<128x256xf32>
    %c-2_i32 = arith.constant -2 : i32
    %18 = arith.muli %c-2_i32, %1 : i32
    %c48_i32_12 = arith.constant 48 : i32
    %19 = arith.addi %c48_i32_12, %18 : i32
    %c0_13 = arith.constant 0 : index
    %20 = arith.index_cast %19 : i32 to index
    %c0_14 = arith.constant 0 : index
    %21 = vector.load %arg18[%c0_13, %20, %c0_14] : memref<2x160x128xf32, #tpu.memory_space<vmem>>, vector<2x64x128xf32>
    %22 = vector.shape_cast %21 : vector<2x64x128xf32> to vector<128x128xf32>
    %23 = arith.truncf %22 : vector<128x128xf32> to vector<128x128xbf16>
    %c0_15 = arith.constant 0 : index
    %c1 = arith.constant 1 : index
    %c0_16 = arith.constant 0 : index
    %c0_17 = arith.constant 0 : index
    %24 = vector.load %arg6[%c0_15, %c1, %c0_16, %c0_17] : memref<1x7x128x256xbf16, #tpu.memory_space<vmem>>, vector<1x1x128x256xbf16>
    %25 = vector.shape_cast %24 : vector<1x1x128x256xbf16> to vector<128x256xbf16>
    %cst_18 = arith.constant dense<0.000000e+00> : vector<128x256xf32>
    %26 = tpu.matmul %23, %25, %cst_18 {dimension_numbers = #tpu.dot_dimension_numbers<[1], [0], [0], [1], [0, 0, 1, 1], [], []>} : vector<128x128xbf16>, vector<128x256xbf16>, vector<128x256xf32> -> vector<128x256xf32>
    %27 = arith.addf %17, %26 : vector<128x256xf32>
    %c-1_i32 = arith.constant -1 : i32
    %28 = arith.muli %c-1_i32, %1 : i32
    %c48_i32_19 = arith.constant 48 : i32
    %29 = arith.addi %c48_i32_19, %28 : i32
    %c0_20 = arith.constant 0 : index
    %30 = arith.index_cast %29 : i32 to index
    %c0_21 = arith.constant 0 : index
    %31 = vector.load %arg18[%c0_20, %30, %c0_21] : memref<2x160x128xf32, #tpu.memory_space<vmem>>, vector<2x64x128xf32>
    %32 = vector.shape_cast %31 : vector<2x64x128xf32> to vector<128x128xf32>
    %33 = arith.truncf %32 : vector<128x128xf32> to vector<128x128xbf16>
    %c0_22 = arith.constant 0 : index
    %c2 = arith.constant 2 : index
    %c0_23 = arith.constant 0 : index
    %c0_24 = arith.constant 0 : index
    %34 = vector.load %arg6[%c0_22, %c2, %c0_23, %c0_24] : memref<1x7x128x256xbf16, #tpu.memory_space<vmem>>, vector<1x1x128x256xbf16>
    %35 = vector.shape_cast %34 : vector<1x1x128x256xbf16> to vector<128x256xbf16>
    %cst_25 = arith.constant dense<0.000000e+00> : vector<128x256xf32>
    %36 = tpu.matmul %33, %35, %cst_25 {dimension_numbers = #tpu.dot_dimension_numbers<[1], [0], [0], [1], [0, 0, 1, 1], [], []>} : vector<128x128xbf16>, vector<128x256xbf16>, vector<128x256xf32> -> vector<128x256xf32>
    %37 = arith.addf %27, %36 : vector<128x256xf32>
    %c0_i32_26 = arith.constant 0 : i32
    %38 = arith.muli %c0_i32_26, %1 : i32
    %c48_i32_27 = arith.constant 48 : i32
    %39 = arith.addi %c48_i32_27, %38 : i32
    %c0_28 = arith.constant 0 : index
    %40 = arith.index_cast %39 : i32 to index
    %c0_29 = arith.constant 0 : index
    %41 = vector.load %arg18[%c0_28, %40, %c0_29] : memref<2x160x128xf32, #tpu.memory_space<vmem>>, vector<2x64x128xf32>
    %42 = vector.shape_cast %41 : vector<2x64x128xf32> to vector<128x128xf32>
    %43 = arith.truncf %42 : vector<128x128xf32> to vector<128x128xbf16>
    %c0_30 = arith.constant 0 : index
    %c3 = arith.constant 3 : index
    %c0_31 = arith.constant 0 : index
    %c0_32 = arith.constant 0 : index
    %44 = vector.load %arg6[%c0_30, %c3, %c0_31, %c0_32] : memref<1x7x128x256xbf16, #tpu.memory_space<vmem>>, vector<1x1x128x256xbf16>
    %45 = vector.shape_cast %44 : vector<1x1x128x256xbf16> to vector<128x256xbf16>
    %cst_33 = arith.constant dense<0.000000e+00> : vector<128x256xf32>
    %46 = tpu.matmul %43, %45, %cst_33 {dimension_numbers = #tpu.dot_dimension_numbers<[1], [0], [0], [1], [0, 0, 1, 1], [], []>} : vector<128x128xbf16>, vector<128x256xbf16>, vector<128x256xf32> -> vector<128x256xf32>
    %47 = arith.addf %37, %46 : vector<128x256xf32>
    %c1_i32 = arith.constant 1 : i32
    %48 = arith.muli %c1_i32, %1 : i32
    %c48_i32_34 = arith.constant 48 : i32
    %49 = arith.addi %c48_i32_34, %48 : i32
    %c0_35 = arith.constant 0 : index
    %50 = arith.index_cast %49 : i32 to index
    %c0_36 = arith.constant 0 : index
    %51 = vector.load %arg18[%c0_35, %50, %c0_36] : memref<2x160x128xf32, #tpu.memory_space<vmem>>, vector<2x64x128xf32>
    %52 = vector.shape_cast %51 : vector<2x64x128xf32> to vector<128x128xf32>
    %53 = arith.truncf %52 : vector<128x128xf32> to vector<128x128xbf16>
    %c0_37 = arith.constant 0 : index
    %c4 = arith.constant 4 : index
    %c0_38 = arith.constant 0 : index
    %c0_39 = arith.constant 0 : index
    %54 = vector.load %arg6[%c0_37, %c4, %c0_38, %c0_39] : memref<1x7x128x256xbf16, #tpu.memory_space<vmem>>, vector<1x1x128x256xbf16>
    %55 = vector.shape_cast %54 : vector<1x1x128x256xbf16> to vector<128x256xbf16>
    %cst_40 = arith.constant dense<0.000000e+00> : vector<128x256xf32>
    %56 = tpu.matmul %53, %55, %cst_40 {dimension_numbers = #tpu.dot_dimension_numbers<[1], [0], [0], [1], [0, 0, 1, 1], [], []>} : vector<128x128xbf16>, vector<128x256xbf16>, vector<128x256xf32> -> vector<128x256xf32>
    %57 = arith.addf %47, %56 : vector<128x256xf32>
    %c2_i32 = arith.constant 2 : i32
    %58 = arith.muli %c2_i32, %1 : i32
    %c48_i32_41 = arith.constant 48 : i32
    %59 = arith.addi %c48_i32_41, %58 : i32
    %c0_42 = arith.constant 0 : index
    %60 = arith.index_cast %59 : i32 to index
    %c0_43 = arith.constant 0 : index
    %61 = vector.load %arg18[%c0_42, %60, %c0_43] : memref<2x160x128xf32, #tpu.memory_space<vmem>>, vector<2x64x128xf32>
    %62 = vector.shape_cast %61 : vector<2x64x128xf32> to vector<128x128xf32>
    %63 = arith.truncf %62 : vector<128x128xf32> to vector<128x128xbf16>
    %c0_44 = arith.constant 0 : index
    %c5 = arith.constant 5 : index
    %c0_45 = arith.constant 0 : index
    %c0_46 = arith.constant 0 : index
    %64 = vector.load %arg6[%c0_44, %c5, %c0_45, %c0_46] : memref<1x7x128x256xbf16, #tpu.memory_space<vmem>>, vector<1x1x128x256xbf16>
    %65 = vector.shape_cast %64 : vector<1x1x128x256xbf16> to vector<128x256xbf16>
    %cst_47 = arith.constant dense<0.000000e+00> : vector<128x256xf32>
    %66 = tpu.matmul %63, %65, %cst_47 {dimension_numbers = #tpu.dot_dimension_numbers<[1], [0], [0], [1], [0, 0, 1, 1], [], []>} : vector<128x128xbf16>, vector<128x256xbf16>, vector<128x256xf32> -> vector<128x256xf32>
    %67 = arith.addf %57, %66 : vector<128x256xf32>
    %c3_i32 = arith.constant 3 : i32
    %68 = arith.muli %c3_i32, %1 : i32
    %c48_i32_48 = arith.constant 48 : i32
    %69 = arith.addi %c48_i32_48, %68 : i32
    %c0_49 = arith.constant 0 : index
    %70 = arith.index_cast %69 : i32 to index
    %c0_50 = arith.constant 0 : index
    %71 = vector.load %arg18[%c0_49, %70, %c0_50] : memref<2x160x128xf32, #tpu.memory_space<vmem>>, vector<2x64x128xf32>
    %72 = vector.shape_cast %71 : vector<2x64x128xf32> to vector<128x128xf32>
    %73 = arith.truncf %72 : vector<128x128xf32> to vector<128x128xbf16>
    %c0_51 = arith.constant 0 : index
    %c6 = arith.constant 6 : index
    %c0_52 = arith.constant 0 : index
    %c0_53 = arith.constant 0 : index
    %74 = vector.load %arg6[%c0_51, %c6, %c0_52, %c0_53] : memref<1x7x128x256xbf16, #tpu.memory_space<vmem>>, vector<1x1x128x256xbf16>
    %75 = vector.shape_cast %74 : vector<1x1x128x256xbf16> to vector<128x256xbf16>
    %cst_54 = arith.constant dense<0.000000e+00> : vector<128x256xf32>
    %76 = tpu.matmul %73, %75, %cst_54 {dimension_numbers = #tpu.dot_dimension_numbers<[1], [0], [0], [1], [0, 0, 1, 1], [], []>} : vector<128x128xbf16>, vector<128x256xbf16>, vector<128x256xf32> -> vector<128x256xf32>
    %77 = arith.addf %67, %76 : vector<128x256xf32>
    %c0_55 = arith.constant 0 : index
    %c0_56 = arith.constant 0 : index
    %c0_57 = arith.constant 0 : index
    %78 = vector.load %arg7[%c0_55, %c0_56, %c0_57] : memref<1x1x256xf32, #tpu.memory_space<vmem>>, vector<1x1x256xf32>
    %79 = vector.shape_cast %78 : vector<1x1x256xf32> to vector<1x256xf32>
    %c0_58 = arith.constant 0 : index
    %c0_59 = arith.constant 0 : index
    %c0_60 = arith.constant 0 : index
    %80 = vector.load %arg8[%c0_58, %c0_59, %c0_60] : memref<1x1x256xf32, #tpu.memory_space<vmem>>, vector<1x1x256xf32>
    %81 = vector.shape_cast %80 : vector<1x1x256xf32> to vector<1x256xf32>
    %cst_61 = arith.constant dense<0.000000e+00> : vector<256xf32>
    %82 = vector.multi_reduction <add>, %77, %cst_61 [0] : vector<128x256xf32> to vector<256xf32>
    %83 = vector.shape_cast %82 : vector<256xf32> to vector<1x256xf32>
    %84 = arith.mulf %77, %77 : vector<128x256xf32>
    %cst_62 = arith.constant dense<0.000000e+00> : vector<256xf32>
    %85 = vector.multi_reduction <add>, %84, %cst_62 [0] : vector<128x256xf32> to vector<256xf32>
    %86 = vector.shape_cast %85 : vector<256xf32> to vector<1x256xf32>
    %cst_63 = arith.constant 7.812500e-03 : f32
    %87 = vector.broadcast %cst_63 : f32 to vector<1x256xf32>
    %88 = arith.mulf %83, %87 : vector<1x256xf32>
    %cst_64 = arith.constant 7.812500e-03 : f32
    %89 = vector.broadcast %cst_64 : f32 to vector<1x256xf32>
    %90 = arith.mulf %86, %89 : vector<1x256xf32>
    %91 = arith.mulf %88, %88 : vector<1x256xf32>
    %92 = arith.subf %90, %91 : vector<1x256xf32>
    %cst_65 = arith.constant 0.000000e+00 : f32
    %93 = vector.broadcast %cst_65 : f32 to vector<1x256xf32>
    %94 = arith.maximumf %92, %93 : vector<1x256xf32>
    %cst_66 = arith.constant 9.99999974E-6 : f32
    %95 = vector.broadcast %cst_66 : f32 to vector<1x256xf32>
    %96 = arith.addf %94, %95 : vector<1x256xf32>
    %97 = math.rsqrt %96 : vector<1x256xf32>
    %98 = arith.mulf %79, %97 : vector<1x256xf32>
    %99 = arith.mulf %88, %98 : vector<1x256xf32>
    %100 = arith.subf %81, %99 : vector<1x256xf32>
    %101 = vector.broadcast %98 : vector<1x256xf32> to vector<128x256xf32>
    %102 = arith.mulf %77, %101 : vector<128x256xf32>
    %103 = vector.broadcast %100 : vector<1x256xf32> to vector<128x256xf32>
    %104 = arith.addf %102, %103 : vector<128x256xf32>
    %105 = vector.extract_strided_slice %104 {offsets = [0, 0], sizes = [128, 128], strides = [1, 1]} : vector<128x256xf32> to vector<128x128xf32>
    %106 = math.tanh %105 : vector<128x128xf32>
    %107 = vector.extract_strided_slice %104 {offsets = [0, 128], sizes = [128, 128], strides = [1, 1]} : vector<128x256xf32> to vector<128x128xf32>
    %108 = arith.negf %107 : vector<128x128xf32>
    %109 = math.exp %108 : vector<128x128xf32>
    %cst_67 = arith.constant 1.000000e+00 : f32
    %110 = vector.broadcast %cst_67 : f32 to vector<128x128xf32>
    %111 = arith.addf %110, %109 : vector<128x128xf32>
    %112 = arith.divf %110, %111 : vector<128x128xf32>
    %113 = arith.mulf %106, %112 : vector<128x128xf32>
    %114 = arith.truncf %113 : vector<128x128xf32> to vector<128x128xbf16>
    %c0_68 = arith.constant 0 : index
    %c0_69 = arith.constant 0 : index
    %c0_70 = arith.constant 0 : index
    %115 = vector.load %arg9[%c0_68, %c0_69, %c0_70] : memref<1x128x128xbf16, #tpu.memory_space<vmem>>, vector<1x128x128xbf16>
    %116 = vector.shape_cast %115 : vector<1x128x128xbf16> to vector<128x128xbf16>
    %cst_71 = arith.constant dense<0.000000e+00> : vector<128x128xf32>
    %117 = tpu.matmul %114, %116, %cst_71 {dimension_numbers = #tpu.dot_dimension_numbers<[1], [0], [0], [1], [0, 0, 1, 1], [], []>} : vector<128x128xbf16>, vector<128x128xbf16>, vector<128x128xf32> -> vector<128x128xf32>
    %c0_72 = arith.constant 0 : index
    %c0_73 = arith.constant 0 : index
    %c0_74 = arith.constant 0 : index
    %118 = vector.load %arg10[%c0_72, %c0_73, %c0_74] : memref<1x1x128xf32, #tpu.memory_space<vmem>>, vector<1x1x128xf32>
    %119 = vector.shape_cast %118 : vector<1x1x128xf32> to vector<1x128xf32>
    %c0_75 = arith.constant 0 : index
    %c0_76 = arith.constant 0 : index
    %c0_77 = arith.constant 0 : index
    %120 = vector.load %arg11[%c0_75, %c0_76, %c0_77] : memref<1x1x128xf32, #tpu.memory_space<vmem>>, vector<1x1x128xf32>
    %121 = vector.shape_cast %120 : vector<1x1x128xf32> to vector<1x128xf32>
    %cst_78 = arith.constant dense<0.000000e+00> : vector<128xf32>
    %122 = vector.multi_reduction <add>, %117, %cst_78 [0] : vector<128x128xf32> to vector<128xf32>
    %123 = vector.shape_cast %122 : vector<128xf32> to vector<1x128xf32>
    %124 = arith.mulf %117, %117 : vector<128x128xf32>
    %cst_79 = arith.constant dense<0.000000e+00> : vector<128xf32>
    %125 = vector.multi_reduction <add>, %124, %cst_79 [0] : vector<128x128xf32> to vector<128xf32>
    %126 = vector.shape_cast %125 : vector<128xf32> to vector<1x128xf32>
    %cst_80 = arith.constant 7.812500e-03 : f32
    %127 = vector.broadcast %cst_80 : f32 to vector<1x128xf32>
    %128 = arith.mulf %123, %127 : vector<1x128xf32>
    %cst_81 = arith.constant 7.812500e-03 : f32
    %129 = vector.broadcast %cst_81 : f32 to vector<1x128xf32>
    %130 = arith.mulf %126, %129 : vector<1x128xf32>
    %131 = arith.mulf %128, %128 : vector<1x128xf32>
    %132 = arith.subf %130, %131 : vector<1x128xf32>
    %cst_82 = arith.constant 0.000000e+00 : f32
    %133 = vector.broadcast %cst_82 : f32 to vector<1x128xf32>
    %134 = arith.maximumf %132, %133 : vector<1x128xf32>
    %cst_83 = arith.constant 9.99999974E-6 : f32
    %135 = vector.broadcast %cst_83 : f32 to vector<1x128xf32>
    %136 = arith.addf %134, %135 : vector<1x128xf32>
    %137 = math.rsqrt %136 : vector<1x128xf32>
    %138 = arith.mulf %119, %137 : vector<1x128xf32>
    %139 = arith.mulf %128, %138 : vector<1x128xf32>
    %140 = arith.subf %121, %139 : vector<1x128xf32>
    %141 = vector.broadcast %138 : vector<1x128xf32> to vector<128x128xf32>
    %142 = arith.mulf %117, %141 : vector<128x128xf32>
    %143 = vector.broadcast %140 : vector<1x128xf32> to vector<128x128xf32>
    %144 = arith.addf %142, %143 : vector<128x128xf32>
    %145 = math.tanh %144 : vector<128x128xf32>
    %146 = vector.shape_cast %145 : vector<128x128xf32> to vector<2x64x128xf32>
    %c0_84 = arith.constant 0 : index
    %c0_85 = arith.constant 0 : index
    %c0_86 = arith.constant 0 : index
    %147 = vector.load %arg16[%c0_84, %c0_85, %c0_86] : memref<2x64x128xf32, #tpu.memory_space<vmem>>, vector<2x64x128xf32>
    %148 = arith.addf %147, %146 : vector<2x64x128xf32>
    %c0_87 = arith.constant 0 : index
    %c0_88 = arith.constant 0 : index
    %c0_89 = arith.constant 0 : index
    %149 = vector.load %arg16[%c0_87, %c0_88, %c0_89] : memref<2x64x128xf32, #tpu.memory_space<vmem>>, vector<2x64x128xf32>
    tpu.vector_store %arg16[%c0_87, %c0_88, %c0_89], %148 {strides = array<i32>} : memref<2x64x128xf32, #tpu.memory_space<vmem>>, vector<2x64x128xf32>,
    %c0_90 = arith.constant 0 : index
    %c0_91 = arith.constant 0 : index
    %c0_92 = arith.constant 0 : index
    %150 = vector.load %arg17[%c0_90, %c0_91, %c0_92] : memref<2x64x128xf32, #tpu.memory_space<vmem>>, vector<2x64x128xf32>
    %151 = arith.addf %150, %146 : vector<2x64x128xf32>
    %c0_93 = arith.constant 0 : index
    %c0_94 = arith.constant 0 : index
    %c0_95 = arith.constant 0 : index
    %152 = vector.load %arg17[%c0_93, %c0_94, %c0_95] : memref<2x64x128xf32, #tpu.memory_space<vmem>>, vector<2x64x128xf32>
    tpu.vector_store %arg17[%c0_93, %c0_94, %c0_95], %151 {strides = array<i32>} : memref<2x64x128xf32, #tpu.memory_space<vmem>>, vector<2x64x128xf32>,
    %c14_i32 = arith.constant 14 : i32
    %153 = arith.cmpi eq, %arg0, %c14_i32 : i32
    %154 = arith.extui %153 : i1 to i32
    %c0_i32_96 = arith.constant 0 : i32
    %155 = arith.cmpi ne, %154, %c0_i32_96 : i32
    scf.if %155 {
      %c0_97 = arith.constant 0 : index
      %c0_98 = arith.constant 0 : index
      %c0_99 = arith.constant 0 : index
      %156 = vector.load %arg17[%c0_97, %c0_98, %c0_99] : memref<2x64x128xf32, #tpu.memory_space<vmem>>, vector<2x64x128xf32>
      %157 = vector.shape_cast %156 : vector<2x64x128xf32> to vector<128x128xf32>
      %158 = arith.truncf %157 : vector<128x128xf32> to vector<128x128xbf16>
      %c0_100 = arith.constant 0 : index
      %c0_101 = arith.constant 0 : index
      %159 = vector.load %arg12[%c0_100, %c0_101] : memref<128x128xbf16, #tpu.memory_space<vmem>>, vector<128x128xbf16>
      %cst_102 = arith.constant dense<0.000000e+00> : vector<128x128xf32>
      %160 = tpu.matmul %158, %159, %cst_102 {dimension_numbers = #tpu.dot_dimension_numbers<[1], [0], [0], [1], [0, 0, 1, 1], [], []>} : vector<128x128xbf16>, vector<128x128xbf16>, vector<128x128xf32> -> vector<128x128xf32>
      %c0_103 = arith.constant 0 : index
      %c0_104 = arith.constant 0 : index
      %161 = vector.load %arg4[%c0_103, %c0_104] : memref<1x128xf32, #tpu.memory_space<vmem>>, vector<1x128xf32>
      %c0_105 = arith.constant 0 : index
      %c0_106 = arith.constant 0 : index
      %162 = vector.load %arg5[%c0_105, %c0_106] : memref<1x128xf32, #tpu.memory_space<vmem>>, vector<1x128xf32>
      %cst_107 = arith.constant dense<0.000000e+00> : vector<128xf32>
      %163 = vector.multi_reduction <add>, %160, %cst_107 [0] : vector<128x128xf32> to vector<128xf32>
      %164 = vector.shape_cast %163 : vector<128xf32> to vector<1x128xf32>
      %165 = arith.mulf %160, %160 : vector<128x128xf32>
      %cst_108 = arith.constant dense<0.000000e+00> : vector<128xf32>
      %166 = vector.multi_reduction <add>, %165, %cst_108 [0] : vector<128x128xf32> to vector<128xf32>
      %167 = vector.shape_cast %166 : vector<128xf32> to vector<1x128xf32>
      %cst_109 = arith.constant 7.812500e-03 : f32
      %168 = vector.broadcast %cst_109 : f32 to vector<1x128xf32>
      %169 = arith.mulf %164, %168 : vector<1x128xf32>
      %cst_110 = arith.constant 7.812500e-03 : f32
      %170 = vector.broadcast %cst_110 : f32 to vector<1x128xf32>
      %171 = arith.mulf %167, %170 : vector<1x128xf32>
      %172 = arith.mulf %169, %169 : vector<1x128xf32>
      %173 = arith.subf %171, %172 : vector<1x128xf32>
      %cst_111 = arith.constant 0.000000e+00 : f32
      %174 = vector.broadcast %cst_111 : f32 to vector<1x128xf32>
      %175 = arith.maximumf %173, %174 : vector<1x128xf32>
      %cst_112 = arith.constant 9.99999974E-6 : f32
      %176 = vector.broadcast %cst_112 : f32 to vector<1x128xf32>
      %177 = arith.addf %175, %176 : vector<1x128xf32>
      %178 = math.rsqrt %177 : vector<1x128xf32>
      %179 = arith.mulf %161, %178 : vector<1x128xf32>
      %180 = arith.mulf %169, %179 : vector<1x128xf32>
      %181 = arith.subf %162, %180 : vector<1x128xf32>
      %182 = vector.broadcast %179 : vector<1x128xf32> to vector<128x128xf32>
      %183 = arith.mulf %160, %182 : vector<128x128xf32>
      %184 = vector.broadcast %181 : vector<1x128xf32> to vector<128x128xf32>
      %185 = arith.addf %183, %184 : vector<128x128xf32>
      %186 = math.tanh %185 : vector<128x128xf32>
      %187 = arith.truncf %186 : vector<128x128xf32> to vector<128x128xbf16>
      %c0_113 = arith.constant 0 : index
      %c0_114 = arith.constant 0 : index
      %188 = vector.load %arg13[%c0_113, %c0_114] : memref<128x128xbf16, #tpu.memory_space<vmem>>, vector<128x128xbf16>
      %cst_115 = arith.constant dense<0.000000e+00> : vector<128x128xf32>
      %189 = tpu.matmul %187, %188, %cst_115 {dimension_numbers = #tpu.dot_dimension_numbers<[1], [0], [0], [1], [0, 0, 1, 1], [], []>} : vector<128x128xbf16>, vector<128x128xbf16>, vector<128x128xf32> -> vector<128x128xf32>
      %c0_116 = arith.constant 0 : index
      %c0_117 = arith.constant 0 : index
      %190 = vector.load %arg14[%c0_116, %c0_117] : memref<1x128xf32, #tpu.memory_space<vmem>>, vector<1x128xf32>
      %191 = vector.broadcast %190 : vector<1x128xf32> to vector<128x128xf32>
      %192 = arith.addf %189, %191 : vector<128x128xf32>
      %193 = vector.shape_cast %192 : vector<128x128xf32> to vector<2x64x128xf32>
      %c0_118 = arith.constant 0 : index
      %c0_119 = arith.constant 0 : index
      %c0_120 = arith.constant 0 : index
      %194 = vector.load %arg15[%c0_118, %c0_119, %c0_120] : memref<2x64x128xf32, #tpu.memory_space<vmem>>, vector<2x64x128xf32>
      tpu.vector_store %arg15[%c0_118, %c0_119, %c0_120], %193 {strides = array<i32>} : memref<2x64x128xf32, #tpu.memory_space<vmem>>, vector<2x64x128xf32>,
    } else {
    }
    return
  }
  func.func @transform_0(%arg0: i32, %arg1: memref<15xi32, #tpu.memory_space<smem>>) -> (i32, i32, i32) {
    %c0_i32 = arith.constant 0 : i32
    %c0_i32_0 = arith.constant 0 : i32
    %c0_i32_1 = arith.constant 0 : i32
    %c0_i32_2 = arith.constant 0 : i32
    return %c0_i32, %c0_i32_0, %c0_i32_1 : i32, i32, i32
  }
  func.func @transform_1(%arg0: i32, %arg1: memref<15xi32, #tpu.memory_space<smem>>) -> (i32, i32) {
    %c0_i32 = arith.constant 0 : i32
    %c0_i32_0 = arith.constant 0 : i32
    %c0_i32_1 = arith.constant 0 : i32
    return %c0_i32, %c0_i32_0 : i32, i32
  }
  func.func @transform_2(%arg0: i32, %arg1: memref<15xi32, #tpu.memory_space<smem>>) -> (i32, i32) {
    %c0_i32 = arith.constant 0 : i32
    %c0_i32_0 = arith.constant 0 : i32
    %c0_i32_1 = arith.constant 0 : i32
    return %c0_i32, %c0_i32_0 : i32, i32
  }
  func.func @transform_3(%arg0: i32, %arg1: memref<15xi32, #tpu.memory_space<smem>>) -> (i32, i32) {
    %c0_i32 = arith.constant 0 : i32
    %c0_i32_0 = arith.constant 0 : i32
    %c0_i32_1 = arith.constant 0 : i32
    return %c0_i32, %c0_i32_0 : i32, i32
  }
  func.func @transform_4(%arg0: i32, %arg1: memref<15xi32, #tpu.memory_space<smem>>) -> (i32, i32, i32, i32) {
    %c0_i32 = arith.constant 0 : i32
    %c0_i32_0 = arith.constant 0 : i32
    %c0_i32_1 = arith.constant 0 : i32
    %c0_i32_2 = arith.constant 0 : i32
    return %arg0, %c0_i32, %c0_i32_0, %c0_i32_1 : i32, i32, i32, i32
  }
  func.func @transform_5(%arg0: i32, %arg1: memref<15xi32, #tpu.memory_space<smem>>) -> (i32, i32, i32) {
    %c0_i32 = arith.constant 0 : i32
    %c0_i32_0 = arith.constant 0 : i32
    %c0_i32_1 = arith.constant 0 : i32
    return %arg0, %c0_i32, %c0_i32_0 : i32, i32, i32
  }
  func.func @transform_6(%arg0: i32, %arg1: memref<15xi32, #tpu.memory_space<smem>>) -> (i32, i32, i32) {
    %c0_i32 = arith.constant 0 : i32
    %c0_i32_0 = arith.constant 0 : i32
    %c0_i32_1 = arith.constant 0 : i32
    return %arg0, %c0_i32, %c0_i32_0 : i32, i32, i32
  }
  func.func @transform_7(%arg0: i32, %arg1: memref<15xi32, #tpu.memory_space<smem>>) -> (i32, i32, i32) {
    %c0_i32 = arith.constant 0 : i32
    %c0_i32_0 = arith.constant 0 : i32
    %c0_i32_1 = arith.constant 0 : i32
    return %arg0, %c0_i32, %c0_i32_0 : i32, i32, i32
  }
  func.func @transform_8(%arg0: i32, %arg1: memref<15xi32, #tpu.memory_space<smem>>) -> (i32, i32, i32) {
    %c0_i32 = arith.constant 0 : i32
    %c0_i32_0 = arith.constant 0 : i32
    %c0_i32_1 = arith.constant 0 : i32
    return %arg0, %c0_i32, %c0_i32_0 : i32, i32, i32
  }
  func.func @transform_9(%arg0: i32, %arg1: memref<15xi32, #tpu.memory_space<smem>>) -> (i32, i32, i32) {
    %c0_i32 = arith.constant 0 : i32
    %c0_i32_0 = arith.constant 0 : i32
    %c0_i32_1 = arith.constant 0 : i32
    return %arg0, %c0_i32, %c0_i32_0 : i32, i32, i32
  }
  func.func @transform_10(%arg0: i32, %arg1: memref<15xi32, #tpu.memory_space<smem>>) -> (i32, i32) {
    %c0_i32 = arith.constant 0 : i32
    %c0_i32_0 = arith.constant 0 : i32
    %c0_i32_1 = arith.constant 0 : i32
    return %c0_i32, %c0_i32_0 : i32, i32
  }
  func.func @transform_11(%arg0: i32, %arg1: memref<15xi32, #tpu.memory_space<smem>>) -> (i32, i32) {
    %c0_i32 = arith.constant 0 : i32
    %c0_i32_0 = arith.constant 0 : i32
    %c0_i32_1 = arith.constant 0 : i32
    return %c0_i32, %c0_i32_0 : i32, i32
  }
  func.func @transform_12(%arg0: i32, %arg1: memref<15xi32, #tpu.memory_space<smem>>) -> (i32, i32) {
    %c0_i32 = arith.constant 0 : i32
    %c0_i32_0 = arith.constant 0 : i32
    %c0_i32_1 = arith.constant 0 : i32
    return %c0_i32, %c0_i32_0 : i32, i32
  }
  func.func @transform_13(%arg0: i32, %arg1: memref<15xi32, #tpu.memory_space<smem>>) -> (i32, i32, i32) {
    %c0_i32 = arith.constant 0 : i32
    %c0_i32_0 = arith.constant 0 : i32
    %c0_i32_1 = arith.constant 0 : i32
    %c0_i32_2 = arith.constant 0 : i32
    return %c0_i32, %c0_i32_0, %c0_i32_1 : i32, i32, i32
  }
}

</mosaic_0001>

<llo_original>
// kernel: wavenet_forward.1
$region0: #{wavenet_forward.1}
  #allocation0 [shape = 'u32[]', space=smem, size = 0x4, offset = 0x4, fixed_abs, tag = 'smem constant byte address 0x4 - core index']
  #allocation1 [shape = 'u32[144,128]{1,0:T(1,128)}', space=vmem, size = 0x12000, scoped, tag = 'internal scratch']
  #allocation2 [shape = 'f32[2,64,128]{2,1,0:T(8,128)}', space=vmem, size = 0x10000, scoped, tag = 'scratch operand']
  #allocation3 [shape = 'f32[2,64,128]{2,1,0:T(8,128)}', space=vmem, size = 0x10000, scoped, tag = 'scratch operand']
  #allocation4 [shape = 'f32[2,160,128]{2,1,0:T(8,128)}', space=vmem, size = 0x28000, scoped, tag = 'scratch operand']
  #allocation5 [shape = 's32[1]{0}', space=sflag, size = 0x4, scoped, tag = 'scoped memory for wavenet_forward.1']
  #allocation6 [shape = 'u8[512]{0}', space=smem, size = 0x200, scoped, tag = 'prefetched SMEM operand 0']
  %s0 = inlined_call_operand.vmem [shape: s32[15], index: 0, kind: input, shape index: {}]
  %s1 = inlined_call_operand.vmem [shape: f32[2,64,64], index: 1, kind: input, shape index: {}]
  %s2 = inlined_call_operand.vmem [shape: bf16[64,128], index: 2, kind: input, shape index: {}]
  %s3 = inlined_call_operand.vmem [shape: f32[1,128], index: 3, kind: input, shape index: {}]
  %s4 = inlined_call_operand.vmem [shape: f32[1,128], index: 4, kind: input, shape index: {}]
  %s5 = inlined_call_operand.vmem [shape: bf16[15,7,128,256], index: 5, kind: input, shape index: {}]
  %s6 = inlined_call_operand.vmem [shape: f32[15,1,256], index: 6, kind: input, shape index: {}]
  %s7 = inlined_call_operand.vmem [shape: f32[15,1,256], index: 7, kind: input, shape index: {}]
  %s8 = inlined_call_operand.vmem [shape: bf16[15,128,128], index: 8, kind: input, shape index: {}]
  %s9 = inlined_call_operand.vmem [shape: f32[15,1,128], index: 9, kind: input, shape index: {}]
  %s10 = inlined_call_operand.vmem [shape: f32[15,1,128], index: 10, kind: input, shape index: {}]
  %s11 = inlined_call_operand.vmem [shape: bf16[128,128], index: 11, kind: input, shape index: {}]
  %s12 = inlined_call_operand.vmem [shape: bf16[128,128], index: 12, kind: input, shape index: {}]
  %s13 = inlined_call_operand.vmem [shape: f32[1,128], index: 13, kind: input, shape index: {}]
  %s14 = inlined_call_operand.vmem [shape: f32[2,64,128], index: 14, kind: output, shape index: {}]
  %s15 = sld [smem:[#allocation0]]
  $region93: #{wavenet_forward.1} parent=0
    _
  %s17 = ssub.s32 1, %s15
  %s18 = scalar_select 0, %s17, %s15
  %s19 = sshll.u32 %s0, 4
  %s20 = int_to_ptr.vmem [resolvable:$true] %s19
  %22 = dma.vmem_to_smem %s20, 16, [#allocation6], [#allocation5]
  %23 = dma.done [#allocation5], 16
  %24 = sfence
  loop: start=0, step=1, limit=17
  $region2: #{wavenet_forward.1} parent=0 // loop_pre_header
    _
  $region3: #{wavenet_forward.1} parent=0 // loop_header
    %s26 = sphi 0, %s30
    %p27 = scmp.ge.s32.totalorder %s26, 17
    %s34 = sphi 0, %s34
    %s36 = sphi 0, %s34
    %s37 = sphi 0, %s36
    %s51 = sphi 0, %s37
    %s55 = sphi 0, %s55
    %s57 = sphi 0, %s55
    %s58 = sphi 0, %s57
    %s72 = sphi 0, %s58
    %s76 = sphi 0, %s76
    %s78 = sphi 0, %s76
    %s79 = sphi 0, %s78
    %s93 = sphi 0, %s79
    %s97 = sphi 0, %s97
    %s99 = sphi 0, %s97
    %s100 = sphi 0, %s99
    %s114 = sphi 0, %s100
    %s120 = sphi 0, %s122
    %s123 = sphi 0, %s120
    %s124 = sphi 0, %s123
    %s140 = sphi 0, %s124
    %s146 = sphi 0, %s148
    %s149 = sphi 0, %s146
    %s150 = sphi 0, %s149
    %s166 = sphi 0, %s150
    %s172 = sphi 0, %s174
    %s175 = sphi 0, %s172
    %s176 = sphi 0, %s175
    %s192 = sphi 0, %s176
    %s198 = sphi 0, %s200
    %s201 = sphi 0, %s198
    %s202 = sphi 0, %s201
    %s218 = sphi 0, %s202
    %s224 = sphi 0, %s226
    %s227 = sphi 0, %s224
    %s228 = sphi 0, %s227
    %s244 = sphi 0, %s228
    %s250 = sphi 0, %s252
    %s253 = sphi 0, %s250
    %s254 = sphi 0, %s253
    %s270 = sphi 0, %s254
    %s274 = sphi 0, %s274
    %s276 = sphi 0, %s274
    %s277 = sphi 0, %s276
    %s291 = sphi 0, %s277
    %s295 = sphi 0, %s295
    %s297 = sphi 0, %s295
    %s298 = sphi 0, %s297
    %s312 = sphi 0, %s298
    %s316 = sphi 0, %s316
    %s318 = sphi 0, %s316
    %s319 = sphi 0, %s318
    %s333 = sphi 0, %s319
    %s337 = sphi 0, %s337
    %s339 = sphi 0, %s337
    %s340 = sphi 0, %s339
    %s354 = sphi 0, %s340
  $region4: #{wavenet_forward.1} parent=0 // loop_header_branch
    %29 = sbr.rel (%p27) target = $region8
  $region5: #{wavenet_forward.1} parent=0 // loop_body
    %s31 = ssub.s32 %s26, 1
    %s32 = ssub.s32 %s26, 2
    %s33 = sadd.s32 %s26, 1
    %s35 = sadd.s32 %s34, 1
    %p38 = scmp.eq.s32.totalorder %s26, 14
    %p39 = scmp.ne.s32.totalorder %s34, %s36
    %p40 = scmp.eq.s32.totalorder %s26, 0
    %p41 = por %p39, %p40
    %p42 = scmp.ne.s32.totalorder %s34, %s36
    %p43 = scmp.eq.s32.totalorder %s31, 14
    %p44 = por %p42, %p43
    %p45 = scmp.ne.s32.totalorder %s36, %s37
    %p46 = scmp.eq.s32.totalorder %s31, 0
    %p47 = por %p45, %p46
    %p48 = scmp.ne.s32.totalorder %s36, %s37
    %p49 = scmp.eq.s32.totalorder %s32, 14
    %p50 = por %p48, %p49
    %p52 = scmp.ne.s32.totalorder %s37, %s51
    %p53 = scmp.eq.s32.totalorder %s32, 0
    %p54 = por %p52, %p53
    %s56 = sadd.s32 %s55, 1
    %p59 = scmp.eq.s32.totalorder %s26, 14
    %p60 = scmp.ne.s32.totalorder %s55, %s57
    %p61 = scmp.eq.s32.totalorder %s26, 0
    %p62 = por %p60, %p61
    %p63 = scmp.ne.s32.totalorder %s55, %s57
    %p64 = scmp.eq.s32.totalorder %s31, 14
    %p65 = por %p63, %p64
    %p66 = scmp.ne.s32.totalorder %s57, %s58
    %p67 = scmp.eq.s32.totalorder %s31, 0
    %p68 = por %p66, %p67
    %p69 = scmp.ne.s32.totalorder %s57, %s58
    %p70 = scmp.eq.s32.totalorder %s32, 14
    %p71 = por %p69, %p70
    %p73 = scmp.ne.s32.totalorder %s58, %s72
    %p74 = scmp.eq.s32.totalorder %s32, 0
    %p75 = por %p73, %p74
    %s77 = sadd.s32 %s76, 1
    %p80 = scmp.eq.s32.totalorder %s26, 14
    %p81 = scmp.ne.s32.totalorder %s76, %s78
    %p82 = scmp.eq.s32.totalorder %s26, 0
    %p83 = por %p81, %p82
    %p84 = scmp.ne.s32.totalorder %s76, %s78
    %p85 = scmp.eq.s32.totalorder %s31, 14
    %p86 = por %p84, %p85
    %p87 = scmp.ne.s32.totalorder %s78, %s79
    %p88 = scmp.eq.s32.totalorder %s31, 0
    %p89 = por %p87, %p88
    %p90 = scmp.ne.s32.totalorder %s78, %s79
    %p91 = scmp.eq.s32.totalorder %s32, 14
    %p92 = por %p90, %p91
    %p94 = scmp.ne.s32.totalorder %s79, %s93
    %p95 = scmp.eq.s32.totalorder %s32, 0
    %p96 = por %p94, %p95
    %s98 = sadd.s32 %s97, 1
    %p101 = scmp.eq.s32.totalorder %s26, 14
    %p102 = scmp.ne.s32.totalorder %s97, %s99
    %p103 = scmp.eq.s32.totalorder %s26, 0
    %p104 = por %p102, %p103
    %p105 = scmp.ne.s32.totalorder %s97, %s99
    %p106 = scmp.eq.s32.totalorder %s31, 14
    %p107 = por %p105, %p106
    %p108 = scmp.ne.s32.totalorder %s99, %s100
    %p109 = scmp.eq.s32.totalorder %s31, 0
    %p110 = por %p108, %p109
    %p111 = scmp.ne.s32.totalorder %s99, %s100
    %p112 = scmp.eq.s32.totalorder %s32, 14
    %p113 = por %p111, %p112
    %p115 = scmp.ne.s32.totalorder %s100, %s114
    %p116 = scmp.eq.s32.totalorder %s32, 0
    %p117 = por %p115, %p116
    %s118 = ssub.s32 %s26, %s33
    %p119 = scmp.eq.s32.totalorder %s118, 0
    %s121 = sadd.s32 %s120, 1
    %s122 = scalar_select %p119, %s120, %s121
    %p125 = pneg %p119
    %p126 = scmp.eq.s32.totalorder %s26, 14
    %p127 = por %p125, %p126
    %p128 = scmp.ne.s32.totalorder %s120, %s123
    %p129 = scmp.eq.s32.totalorder %s26, 0
    %p130 = por %p128, %p129
    %p131 = scmp.ne.s32.totalorder %s120, %s123
    %p132 = scmp.eq.s32.totalorder %s31, 14
    %p133 = por %p131, %p132
    %p134 = scmp.ne.s32.totalorder %s123, %s124
    %p135 = scmp.eq.s32.totalorder %s31, 0
    %p136 = por %p134, %p135
    %p137 = scmp.ne.s32.totalorder %s123, %s124
    %p138 = scmp.eq.s32.totalorder %s32, 14
    %p139 = por %p137, %p138
    %p141 = scmp.ne.s32.totalorder %s124, %s140
    %p142 = scmp.eq.s32.totalorder %s32, 0
    %p143 = por %p141, %p142
    %s144 = ssub.s32 %s26, %s33
    %p145 = scmp.eq.s32.totalorder %s144, 0
    %s147 = sadd.s32 %s146, 1
    %s148 = scalar_select %p145, %s146, %s147
    %p151 = pneg %p145
    %p152 = scmp.eq.s32.totalorder %s26, 14
    %p153 = por %p151, %p152
    %p154 = scmp.ne.s32.totalorder %s146, %s149
    %p155 = scmp.eq.s32.totalorder %s26, 0
    %p156 = por %p154, %p155
    %p157 = scmp.ne.s32.totalorder %s146, %s149
    %p158 = scmp.eq.s32.totalorder %s31, 14
    %p159 = por %p157, %p158
    %p160 = scmp.ne.s32.totalorder %s149, %s150
    %p161 = scmp.eq.s32.totalorder %s31, 0
    %p162 = por %p160, %p161
    %p163 = scmp.ne.s32.totalorder %s149, %s150
    %p164 = scmp.eq.s32.totalorder %s32, 14
    %p165 = por %p163, %p164
    %p167 = scmp.ne.s32.totalorder %s150, %s166
    %p168 = scmp.eq.s32.totalorder %s32, 0
    %p169 = por %p167, %p168
    %s170 = ssub.s32 %s26, %s33
    %p171 = scmp.eq.s32.totalorder %s170, 0
    %s173 = sadd.s32 %s172, 1
    %s174 = scalar_select %p171, %s172, %s173
    %p177 = pneg %p171
    %p178 = scmp.eq.s32.totalorder %s26, 14
    %p179 = por %p177, %p178
    %p180 = scmp.ne.s32.totalorder %s172, %s175
    %p181 = scmp.eq.s32.totalorder %s26, 0
    %p182 = por %p180, %p181
    %p183 = scmp.ne.s32.totalorder %s172, %s175
    %p184 = scmp.eq.s32.totalorder %s31, 14
    %p185 = por %p183, %p184
    %p186 = scmp.ne.s32.totalorder %s175, %s176
    %p187 = scmp.eq.s32.totalorder %s31, 0
    %p188 = por %p186, %p187
    %p189 = scmp.ne.s32.totalorder %s175, %s176
    %p190 = scmp.eq.s32.totalorder %s32, 14
    %p191 = por %p189, %p190
    %p193 = scmp.ne.s32.totalorder %s176, %s192
    %p194 = scmp.eq.s32.totalorder %s32, 0
    %p195 = por %p193, %p194
    %s196 = ssub.s32 %s26, %s33
    %p197 = scmp.eq.s32.totalorder %s196, 0
    %s199 = sadd.s32 %s198, 1
    %s200 = scalar_select %p197, %s198, %s199
    %p203 = pneg %p197
    %p204 = scmp.eq.s32.totalorder %s26, 14
    %p205 = por %p203, %p204
    %p206 = scmp.ne.s32.totalorder %s198, %s201
    %p207 = scmp.eq.s32.totalorder %s26, 0
    %p208 = por %p206, %p207
    %p209 = scmp.ne.s32.totalorder %s198, %s201
    %p210 = scmp.eq.s32.totalorder %s31, 14
    %p211 = por %p209, %p210
    %p212 = scmp.ne.s32.totalorder %s201, %s202
    %p213 = scmp.eq.s32.totalorder %s31, 0
    %p214 = por %p212, %p213
    %p215 = scmp.ne.s32.totalorder %s201, %s202
    %p216 = scmp.eq.s32.totalorder %s32, 14
    %p217 = por %p215, %p216
    %p219 = scmp.ne.s32.totalorder %s202, %s218
    %p220 = scmp.eq.s32.totalorder %s32, 0
    %p221 = por %p219, %p220
    %s222 = ssub.s32 %s26, %s33
    %p223 = scmp.eq.s32.totalorder %s222, 0
    %s225 = sadd.s32 %s224, 1
    %s226 = scalar_select %p223, %s224, %s225
    %p229 = pneg %p223
    %p230 = scmp.eq.s32.totalorder %s26, 14
    %p231 = por %p229, %p230
    %p232 = scmp.ne.s32.totalorder %s224, %s227
    %p233 = scmp.eq.s32.totalorder %s26, 0
    %p234 = por %p232, %p233
    %p235 = scmp.ne.s32.totalorder %s224, %s227
    %p236 = scmp.eq.s32.totalorder %s31, 14
    %p237 = por %p235, %p236
    %p238 = scmp.ne.s32.totalorder %s227, %s228
    %p239 = scmp.eq.s32.totalorder %s31, 0
    %p240 = por %p238, %p239
    %p241 = scmp.ne.s32.totalorder %s227, %s228
    %p242 = scmp.eq.s32.totalorder %s32, 14
    %p243 = por %p241, %p242
    %p245 = scmp.ne.s32.totalorder %s228, %s244
    %p246 = scmp.eq.s32.totalorder %s32, 0
    %p247 = por %p245, %p246
    %s248 = ssub.s32 %s26, %s33
    %p249 = scmp.eq.s32.totalorder %s248, 0
    %s251 = sadd.s32 %s250, 1
    %s252 = scalar_select %p249, %s250, %s251
    %p255 = pneg %p249
    %p256 = scmp.eq.s32.totalorder %s26, 14
    %p257 = por %p255, %p256
    %p258 = scmp.ne.s32.totalorder %s250, %s253
    %p259 = scmp.eq.s32.totalorder %s26, 0
    %p260 = por %p258, %p259
    %p261 = scmp.ne.s32.totalorder %s250, %s253
    %p262 = scmp.eq.s32.totalorder %s31, 14
    %p263 = por %p261, %p262
    %p264 = scmp.ne.s32.totalorder %s253, %s254
    %p265 = scmp.eq.s32.totalorder %s31, 0
    %p266 = por %p264, %p265
    %p267 = scmp.ne.s32.totalorder %s253, %s254
    %p268 = scmp.eq.s32.totalorder %s32, 14
    %p269 = por %p267, %p268
    %p271 = scmp.ne.s32.totalorder %s254, %s270
    %p272 = scmp.eq.s32.totalorder %s32, 0
    %p273 = por %p271, %p272
    %s275 = sadd.s32 %s274, 1
    %p278 = scmp.eq.s32.totalorder %s26, 14
    %p279 = scmp.ne.s32.totalorder %s274, %s276
    %p280 = scmp.eq.s32.totalorder %s26, 0
    %p281 = por %p279, %p280
    %p282 = scmp.ne.s32.totalorder %s274, %s276
    %p283 = scmp.eq.s32.totalorder %s31, 14
    %p284 = por %p282, %p283
    %p285 = scmp.ne.s32.totalorder %s276, %s277
    %p286 = scmp.eq.s32.totalorder %s31, 0
    %p287 = por %p285, %p286
    %p288 = scmp.ne.s32.totalorder %s276, %s277
    %p289 = scmp.eq.s32.totalorder %s32, 14
    %p290 = por %p288, %p289
    %p292 = scmp.ne.s32.totalorder %s277, %s291
    %p293 = scmp.eq.s32.totalorder %s32, 0
    %p294 = por %p292, %p293
    %s296 = sadd.s32 %s295, 1
    %p299 = scmp.eq.s32.totalorder %s26, 14
    %p300 = scmp.ne.s32.totalorder %s295, %s297
    %p301 = scmp.eq.s32.totalorder %s26, 0
    %p302 = por %p300, %p301
    %p303 = scmp.ne.s32.totalorder %s295, %s297
    %p304 = scmp.eq.s32.totalorder %s31, 14
    %p305 = por %p303, %p304
    %p306 = scmp.ne.s32.totalorder %s297, %s298
    %p307 = scmp.eq.s32.totalorder %s31, 0
    %p308 = por %p306, %p307
    %p309 = scmp.ne.s32.totalorder %s297, %s298
    %p310 = scmp.eq.s32.totalorder %s32, 14
    %p311 = por %p309, %p310
    %p313 = scmp.ne.s32.totalorder %s298, %s312
    %p314 = scmp.eq.s32.totalorder %s32, 0
    %p315 = por %p313, %p314
    %s317 = sadd.s32 %s316, 1
    %p320 = scmp.eq.s32.totalorder %s26, 14
    %p321 = scmp.ne.s32.totalorder %s316, %s318
    %p322 = scmp.eq.s32.totalorder %s26, 0
    %p323 = por %p321, %p322
    %p324 = scmp.ne.s32.totalorder %s316, %s318
    %p325 = scmp.eq.s32.totalorder %s31, 14
    %p326 = por %p324, %p325
    %p327 = scmp.ne.s32.totalorder %s318, %s319
    %p328 = scmp.eq.s32.totalorder %s31, 0
    %p329 = por %p327, %p328
    %p330 = scmp.ne.s32.totalorder %s318, %s319
    %p331 = scmp.eq.s32.totalorder %s32, 14
    %p332 = por %p330, %p331
    %p334 = scmp.ne.s32.totalorder %s319, %s333
    %p335 = scmp.eq.s32.totalorder %s32, 0
    %p336 = por %p334, %p335
    %s338 = sadd.s32 %s337, 1
    %p341 = scmp.eq.s32.totalorder %s26, 14
    %p342 = scmp.ne.s32.totalorder %s337, %s339
    %p343 = scmp.eq.s32.totalorder %s26, 0
    %p344 = por %p342, %p343
    %p345 = scmp.ne.s32.totalorder %s337, %s339
    %p346 = scmp.eq.s32.totalorder %s31, 14
    %p347 = por %p345, %p346
    %p348 = scmp.ne.s32.totalorder %s339, %s340
    %p349 = scmp.eq.s32.totalorder %s31, 0
    %p350 = por %p348, %p349
    %p351 = scmp.ne.s32.totalorder %s339, %s340
    %p352 = scmp.eq.s32.totalorder %s32, 14
    %p353 = por %p351, %p352
    %p355 = scmp.ne.s32.totalorder %s340, %s354
    %p356 = scmp.eq.s32.totalorder %s32, 0
    %p357 = por %p355, %p356
    %p358 = scmp.le.s32.totalorder 1, %s26
    %p359 = scmp.lt.s32.totalorder %s26, 16
    %p360 = pnand %p358, %p359
    %p361 = pneg %p360
    // Predicated region
    $region9: #{wavenet_forward.1} parent=5 // pred_check
      _
    $region10: #{wavenet_forward.1} parent=5 // pred_check_branch
      %363 = sbr.rel (%p360) target = $region12
    $region11: #{wavenet_forward.1} parent=5 // pred_region
      %s364 = ssub.s32 %s26, 1
      // Predicated region
      $region13: #{wavenet_forward.1} parent=11 // pred_check
        %p365 = pneg %p47
      $region14: #{wavenet_forward.1} parent=11 // pred_check_branch
        %367 = sbr.rel (%p365) target = $region16
      $region15: #{wavenet_forward.1} parent=11 // pred_region
        _
      $region16: #{wavenet_forward.1} parent=11 // pred_fallthru
        _
      // Predicated region
      $region17: #{wavenet_forward.1} parent=11 // pred_check
        %p368 = pneg %p68
      $region18: #{wavenet_forward.1} parent=11 // pred_check_branch
        %370 = sbr.rel (%p368) target = $region20
      $region19: #{wavenet_forward.1} parent=11 // pred_region
        _
      $region20: #{wavenet_forward.1} parent=11 // pred_fallthru
        _
      // Predicated region
      $region21: #{wavenet_forward.1} parent=11 // pred_check
        %p371 = pneg %p89
      $region22: #{wavenet_forward.1} parent=11 // pred_check_branch
        %373 = sbr.rel (%p371) target = $region24
      $region23: #{wavenet_forward.1} parent=11 // pred_region
        _
      $region24: #{wavenet_forward.1} parent=11 // pred_fallthru
        _
      // Predicated region
      $region25: #{wavenet_forward.1} parent=11 // pred_check
        %p374 = pneg %p110
      $region26: #{wavenet_forward.1} parent=11 // pred_check_branch
        %376 = sbr.rel (%p374) target = $region28
      $region27: #{wavenet_forward.1} parent=11 // pred_region
        _
      $region28: #{wavenet_forward.1} parent=11 // pred_fallthru
        _
      // Predicated region
      $region29: #{wavenet_forward.1} parent=11 // pred_check
        %p377 = pneg %p287
      $region30: #{wavenet_forward.1} parent=11 // pred_check_branch
        %379 = sbr.rel (%p377) target = $region32
      $region31: #{wavenet_forward.1} parent=11 // pred_region
        _
      $region32: #{wavenet_forward.1} parent=11 // pred_fallthru
        _
      // Predicated region
      $region33: #{wavenet_forward.1} parent=11 // pred_check
        %p380 = pneg %p308
      $region34: #{wavenet_forward.1} parent=11 // pred_check_branch
        %382 = sbr.rel (%p380) target = $region36
      $region35: #{wavenet_forward.1} parent=11 // pred_region
        _
      $region36: #{wavenet_forward.1} parent=11 // pred_fallthru
        _
      // Predicated region
      $region37: #{wavenet_forward.1} parent=11 // pred_check
        %p383 = pneg %p329
      $region38: #{wavenet_forward.1} parent=11 // pred_check_branch
        %385 = sbr.rel (%p383) target = $region40
      $region39: #{wavenet_forward.1} parent=11 // pred_region
        _
      $region40: #{wavenet_forward.1} parent=11 // pred_fallthru
        _
    $region12: #{wavenet_forward.1} parent=5 // pred_fallthru
      _
    %p386 = scmp.lt.s32.totalorder %s26, 15
    // Predicated region
    $region41: #{wavenet_forward.1} parent=5 // pred_check
      %p387 = pneg %p386
    $region42: #{wavenet_forward.1} parent=5 // pred_check_branch
      %389 = sbr.rel (%p387) target = $region44
    $region43: #{wavenet_forward.1} parent=5 // pred_region
      // Predicated region
      $region45: #{wavenet_forward.1} parent=43 // pred_check
        %p390 = pneg %p130
      $region46: #{wavenet_forward.1} parent=43 // pred_check_branch
        %392 = sbr.rel (%p390) target = $region48
      $region47: #{wavenet_forward.1} parent=43 // pred_region
        %p393 = scmp.lt.s32.totalorder %s26, 14
        %s394 = scalar_select %p393, %s26, 14
        %s395 = smul.addr %s394, 224
        %s396 = smul.addr %s395, 4
        %s397 = scalar_lea.vmem %s5, %s396
      $region48: #{wavenet_forward.1} parent=43 // pred_fallthru
        _
      // Predicated region
      $region49: #{wavenet_forward.1} parent=43 // pred_check
        %p398 = pneg %p156
      $region50: #{wavenet_forward.1} parent=43 // pred_check_branch
        %400 = sbr.rel (%p398) target = $region52
      $region51: #{wavenet_forward.1} parent=43 // pred_region
        %p401 = scmp.lt.s32.totalorder %s26, 14
        %s402 = scalar_select %p401, %s26, 14
        %s403 = smul.addr %s402, 2
        %s404 = scalar_lea.vmem %s6, %s403
      $region52: #{wavenet_forward.1} parent=43 // pred_fallthru
        _
      // Predicated region
      $region53: #{wavenet_forward.1} parent=43 // pred_check
        %p405 = pneg %p182
      $region54: #{wavenet_forward.1} parent=43 // pred_check_branch
        %407 = sbr.rel (%p405) target = $region56
      $region55: #{wavenet_forward.1} parent=43 // pred_region
        %p408 = scmp.lt.s32.totalorder %s26, 14
        %s409 = scalar_select %p408, %s26, 14
        %s410 = smul.addr %s409, 2
        %s411 = scalar_lea.vmem %s7, %s410
      $region56: #{wavenet_forward.1} parent=43 // pred_fallthru
        _
      // Predicated region
      $region57: #{wavenet_forward.1} parent=43 // pred_check
        %p412 = pneg %p208
      $region58: #{wavenet_forward.1} parent=43 // pred_check_branch
        %414 = sbr.rel (%p412) target = $region60
      $region59: #{wavenet_forward.1} parent=43 // pred_region
        %p415 = scmp.lt.s32.totalorder %s26, 14
        %s416 = scalar_select %p415, %s26, 14
        %s417 = smul.addr %s416, 16
        %s418 = smul.addr %s417, 4
        %s419 = scalar_lea.vmem %s8, %s418
      $region60: #{wavenet_forward.1} parent=43 // pred_fallthru
        _
      // Predicated region
      $region61: #{wavenet_forward.1} parent=43 // pred_check
        %p420 = pneg %p234
      $region62: #{wavenet_forward.1} parent=43 // pred_check_branch
        %422 = sbr.rel (%p420) target = $region64
      $region63: #{wavenet_forward.1} parent=43 // pred_region
        %p423 = scmp.lt.s32.totalorder %s26, 14
        %s424 = scalar_select %p423, %s26, 14
        %s425 = scalar_lea.vmem %s9, %s424
      $region64: #{wavenet_forward.1} parent=43 // pred_fallthru
        _
      // Predicated region
      $region65: #{wavenet_forward.1} parent=43 // pred_check
        %p426 = pneg %p260
      $region66: #{wavenet_forward.1} parent=43 // pred_check_branch
        %428 = sbr.rel (%p426) target = $region68
      $region67: #{wavenet_forward.1} parent=43 // pred_region
        %p429 = scmp.lt.s32.totalorder %s26, 14
        %s430 = scalar_select %p429, %s26, 14
        %s431 = scalar_lea.vmem %s10, %s430
      $region68: #{wavenet_forward.1} parent=43 // pred_fallthru
        _
    $region44: #{wavenet_forward.1} parent=5 // pred_fallthru
      _
    %p432 = scmp.le.s32.totalorder 1, %s26
    %p433 = scmp.lt.s32.totalorder %s26, 16
    %p434 = pnand %p432, %p433
    %p435 = pneg %p434
    // Predicated region
    $region69: #{wavenet_forward.1} parent=5 // pred_check
      _
    $region70: #{wavenet_forward.1} parent=5 // pred_check_branch
      %437 = sbr.rel (%p434) target = $region72
    $region71: #{wavenet_forward.1} parent=5 // pred_region
      %s438 = ssub.s32 %s26, 1
      %p439 = pneg %p47
      %p440 = pneg %p44
      %p441 = pneg %p68
      %p442 = pneg %p65
      %p443 = pneg %p89
      %p444 = pneg %p86
      %p445 = pneg %p110
      %p446 = pneg %p107
      %p447 = scmp.lt.s32.totalorder %s31, 14
      %s448 = scalar_select %p447, %s31, 14
      %s449 = smul.addr %s448, 224
      %s450 = smul.addr %s449, 4
      %s451 = scalar_lea.vmem %s5, %s450
      %p452 = pneg %p136
      %p453 = pneg %p133
      %p454 = scmp.lt.s32.totalorder %s31, 14
      %s455 = scalar_select %p454, %s31, 14
      %s456 = smul.addr %s455, 2
      %s457 = scalar_lea.vmem %s6, %s456
      %p458 = pneg %p162
      %p459 = pneg %p159
      %p460 = scmp.lt.s32.totalorder %s31, 14
      %s461 = scalar_select %p460, %s31, 14
      %s462 = smul.addr %s461, 2
      %s463 = scalar_lea.vmem %s7, %s462
      %p464 = pneg %p188
      %p465 = pneg %p185
      %p466 = scmp.lt.s32.totalorder %s31, 14
      %s467 = scalar_select %p466, %s31, 14
      %s468 = smul.addr %s467, 16
      %s469 = smul.addr %s468, 4
      %s470 = scalar_lea.vmem %s8, %s469
      %p471 = pneg %p214
      %p472 = pneg %p211
      %p473 = scmp.lt.s32.totalorder %s31, 14
      %s474 = scalar_select %p473, %s31, 14
      %s475 = scalar_lea.vmem %s9, %s474
      %p476 = pneg %p240
      %p477 = pneg %p237
      %p478 = scmp.lt.s32.totalorder %s31, 14
      %s479 = scalar_select %p478, %s31, 14
      %s480 = scalar_lea.vmem %s10, %s479
      %p481 = pneg %p266
      %p482 = pneg %p263
      %p483 = pneg %p287
      %p484 = pneg %p284
      %p485 = pneg %p308
      %p486 = pneg %p305
      %p487 = pneg %p329
      %p488 = pneg %p326
      %p489 = pneg %p350
      %p490 = pneg %p347
      %p491 = scmp.lt.s32.totalorder %s31, 14
      %s492 = scalar_select %p491, %s31, 14
      %s493 = smul.addr %s492, 224
      %s494 = smul.addr %s493, 4
      %s495 = scalar_lea.vmem %s5, %s494
      %p496 = scmp.lt.s32.totalorder %s31, 14
      %s497 = scalar_select %p496, %s31, 14
      %s498 = smul.addr %s497, 2
      %s499 = scalar_lea.vmem %s6, %s498
      %p500 = scmp.lt.s32.totalorder %s31, 14
      %s501 = scalar_select %p500, %s31, 14
      %s502 = smul.addr %s501, 2
      %s503 = scalar_lea.vmem %s7, %s502
      %p504 = scmp.lt.s32.totalorder %s31, 14
      %s505 = scalar_select %p504, %s31, 14
      %s506 = smul.addr %s505, 16
      %s507 = smul.addr %s506, 4
      %s508 = scalar_lea.vmem %s8, %s507
      %p509 = scmp.lt.s32.totalorder %s31, 14
      %s510 = scalar_select %p509, %s31, 14
      %s511 = scalar_lea.vmem %s9, %s510
      %p512 = scmp.lt.s32.totalorder %s31, 14
      %s513 = scalar_select %p512, %s31, 14
      %s514 = scalar_lea.vmem %s10, %s513
      %s516 = sld [smem:[#allocation6 + %s31]]
      %p517 = scmp.eq.s32.totalorder %s31, 0
      // Predicated region
      $region73: #{wavenet_forward.1} parent=71 // pred_check
        %p518 = pneg %p517
      $region74: #{wavenet_forward.1} parent=71 // pred_check_branch
        %520 = sbr.rel (%p518) target = $region76
      $region75: #{wavenet_forward.1} parent=71 // pred_region
        %521 = vst [vmem:[#allocation4] sm:$0xff] 0.0
        %522 = vst [vmem:[#allocation4 + $0x8] sm:$0xff] 0.0
        %523 = vst [vmem:[#allocation4 + $0x10] sm:$0xff] 0.0
        %524 = vst [vmem:[#allocation4 + $0x18] sm:$0xff] 0.0
        %525 = vst [vmem:[#allocation4 + $0x20] sm:$0xff] 0.0
        %526 = vst [vmem:[#allocation4 + $0x28] sm:$0xff] 0.0
        %527 = vst [vmem:[#allocation4 + $0xa0] sm:$0xff] 0.0
        %528 = vst [vmem:[#allocation4 + $0xa8] sm:$0xff] 0.0
        %529 = vst [vmem:[#allocation4 + $0xb0] sm:$0xff] 0.0
        %530 = vst [vmem:[#allocation4 + $0xb8] sm:$0xff] 0.0
        %531 = vst [vmem:[#allocation4 + $0xc0] sm:$0xff] 0.0
        %532 = vst [vmem:[#allocation4 + $0xc8] sm:$0xff] 0.0
        %533 = vst [vmem:[#allocation4 + $0x70] sm:$0xff] 0.0
        %534 = vst [vmem:[#allocation4 + $0x78] sm:$0xff] 0.0
        %535 = vst [vmem:[#allocation4 + $0x80] sm:$0xff] 0.0
        %536 = vst [vmem:[#allocation4 + $0x88] sm:$0xff] 0.0
        %537 = vst [vmem:[#allocation4 + $0x90] sm:$0xff] 0.0
        %538 = vst [vmem:[#allocation4 + $0x98] sm:$0xff] 0.0
        %539 = vst [vmem:[#allocation4 + $0x110] sm:$0xff] 0.0
        %540 = vst [vmem:[#allocation4 + $0x118] sm:$0xff] 0.0
        %541 = vst [vmem:[#allocation4 + $0x120] sm:$0xff] 0.0
        %542 = vst [vmem:[#allocation4 + $0x128] sm:$0xff] 0.0
        %543 = vst [vmem:[#allocation4 + $0x130] sm:$0xff] 0.0
        %544 = vst [vmem:[#allocation4 + $0x138] sm:$0xff] 0.0
        %v545 = vld [vmem:[%s1] sm:$0xff]
        %v546 = vld [vmem:[%s1 + $0x8] sm:$0xff]
        %v547 = vld [vmem:[%s1 + $0x10] sm:$0xff]
        %v548 = vld [vmem:[%s1 + $0x18] sm:$0xff]
        %v549 = vld [vmem:[%s1 + $0x20] sm:$0xff]
        %v550 = vld [vmem:[%s1 + $0x28] sm:$0xff]
        %v551 = vld [vmem:[%s1 + $0x30] sm:$0xff]
        %v552 = vld [vmem:[%s1 + $0x38] sm:$0xff]
        %v553 = vld [vmem:[%s1 + $0x40] sm:$0xff]
        %v554 = vld [vmem:[%s1 + $0x48] sm:$0xff]
        %v555 = vld [vmem:[%s1 + $0x50] sm:$0xff]
        %v556 = vld [vmem:[%s1 + $0x58] sm:$0xff]
        %v557 = vld [vmem:[%s1 + $0x60] sm:$0xff]
        %v558 = vld [vmem:[%s1 + $0x68] sm:$0xff]
        %v559 = vld [vmem:[%s1 + $0x70] sm:$0xff]
        %v560 = vld [vmem:[%s1 + $0x78] sm:$0xff]
        %v561 = vpack.c.bf16 %v546, %v545
        %v562 = vpack.c.bf16 %v548, %v547
        %v563 = vpack.c.bf16 %v550, %v549
        %v564 = vpack.c.bf16 %v552, %v551
        %v565 = vpack.c.bf16 %v554, %v553
        %v566 = vpack.c.bf16 %v556, %v555
        %v567 = vpack.c.bf16 %v558, %v557
        %v568 = vpack.c.bf16 %v560, %v559
        %v569 = vld [vmem:[%s2] sm:$0xf]
        %v570 = vld [vmem:[%s2 + $0x4] sm:$0xf]
        %v571 = vld [vmem:[%s2 + $0x8] sm:$0xf]
        %v572 = vld [vmem:[%s2 + $0xc] sm:$0xf]
        %v573 = vld [vmem:[%s2 + $0x10] sm:$0xf]
        %v574 = vld [vmem:[%s2 + $0x14] sm:$0xf]
        %v575 = vld [vmem:[%s2 + $0x18] sm:$0xf]
        %v576 = vld [vmem:[%s2 + $0x1c] sm:$0xf]
        %v585 = vunpack.c.l.b16 %v569
        %v586 = vunpack.c.l.b16 %v570
        %v587 = vunpack.c.l.b16 %v571
        %v588 = vunpack.c.l.b16 %v572
        %v589 = vunpack.c.l.b16 %v573
        %v590 = vunpack.c.l.b16 %v574
        %v591 = vunpack.c.l.b16 %v575
        %v592 = vunpack.c.l.b16 %v576
        %v593 = vpack.c.b16 %v586, %v585
        %v594 = vpack.c.b16 %v588, %v587
        %v595 = vpack.c.b16 %v590, %v589
        %v596 = vpack.c.b16 %v592, %v591
        %vm601 = vcmask 523264
        %v603 = vsel %vm601, %v561, 0
        %v606 = vsel %vm601, %v562, 0
        %v609 = vsel %vm601, %v563, 0
        %v612 = vsel %vm601, %v564, 0
        %v615 = vsel %vm601, %v565, 0
        %v618 = vsel %vm601, %v566, 0
        %v621 = vsel %vm601, %v567, 0
        %v624 = vsel %vm601, %v568, 0
        %626 = vmatprep.subr.bf16.mxu0 0
        %627 = vmatpush1.bf16.msra.mxu0 0
        %628 = vmatprep.subr.bf16.mxu0 0
        %629 = vmatpush1.bf16.msra.mxu0 0
        %630 = vmatprep.subr.bf16.mxu0 0
        %631 = vmatpush1.bf16.msra.mxu0 0
        %632 = vmatprep.subr.bf16.mxu0 0
        %633 = vmatpush1.bf16.msra.mxu0 0
        %634 = vmatprep.subr.bf16.mxu0 0
        %635 = vmatpush1.bf16.msra.mxu0 %v596
        %636 = vmatprep.subr.bf16.mxu0 0
        %637 = vmatpush1.bf16.msra.mxu0 %v595
        %638 = vmatprep.subr.bf16.mxu0 0
        %639 = vmatpush1.bf16.msra.mxu0 %v594
        %640 = vmatprep.subr.bf16.mxu0 0
        %641 = vmatpush1.bf16.msra.mxu0 %v593
        %642 = vmatprep.subr.bf16.mxu0 0
        %643 = vmatpush2.bf16.msra.mxu0 0
        %644 = vmatprep.subr.bf16.mxu0 0
        %645 = vmatpush2.bf16.msra.mxu0 0
        %646 = vmatprep.subr.bf16.mxu0 0
        %647 = vmatpush2.bf16.msra.mxu0 0
        %648 = vmatprep.subr.bf16.mxu0 0
        %649 = vmatpush2.bf16.msra.mxu0 0
        %650 = vmatprep.subr.bf16.mxu0 0
        %651 = vmatpush2.bf16.msra.mxu0 0
        %652 = vmatprep.subr.bf16.mxu0 0
        %653 = vmatpush2.bf16.msra.mxu0 0
        %654 = vmatprep.subr.bf16.mxu0 0
        %655 = vmatpush2.bf16.msra.mxu0 0
        %656 = vmatprep.subr.bf16.mxu0 0
        %657 = vmatpush2.bf16.msra.mxu0 0
        %658 = vmatprep.mubr.bf16.mxu0 0
        %659 = vmatmul.mubr.bf16.gmra.mxu0 %v603
        %v660 = vpop.f32.mrf.mxu0
        %v661 = vadd.f32 0.0, %v660
        %v662 = vpop.f32.mrf.mxu0
        %v663 = vpop.f32.mrf.mxu0
        %v664 = vadd.f32 0.0, %v663
        %v665 = vpop.f32.mrf.mxu0
        %666 = vmatprep.mubr.bf16.mxu0 0
        %667 = vmatmul.mubr.bf16.gmra.mxu0 %v606
        %v668 = vpop.f32.mrf.mxu0
        %v669 = vadd.f32 0.0, %v668
        %v670 = vpop.f32.mrf.mxu0
        %v671 = vpop.f32.mrf.mxu0
        %v672 = vadd.f32 0.0, %v671
        %v673 = vpop.f32.mrf.mxu0
        %674 = vmatprep.mubr.bf16.mxu0 0
        %675 = vmatmul.mubr.bf16.gmra.mxu0 %v609
        %v676 = vpop.f32.mrf.mxu0
        %v677 = vadd.f32 0.0, %v676
        %v678 = vpop.f32.mrf.mxu0
        %v679 = vpop.f32.mrf.mxu0
        %v680 = vadd.f32 0.0, %v679
        %v681 = vpop.f32.mrf.mxu0
        %682 = vmatprep.mubr.bf16.mxu0 0
        %683 = vmatmul.mubr.bf16.gmra.mxu0 %v612
        %v684 = vpop.f32.mrf.mxu0
        %v685 = vadd.f32 0.0, %v684
        %v686 = vpop.f32.mrf.mxu0
        %v687 = vpop.f32.mrf.mxu0
        %v688 = vadd.f32 0.0, %v687
        %v689 = vpop.f32.mrf.mxu0
        %690 = vmatprep.mubr.bf16.mxu0 0
        %691 = vmatmul.mubr.bf16.gmra.mxu0 %v615
        %v692 = vpop.f32.mrf.mxu0
        %v693 = vadd.f32 0.0, %v692
        %v694 = vpop.f32.mrf.mxu0
        %v695 = vpop.f32.mrf.mxu0
        %v696 = vadd.f32 0.0, %v695
        %v697 = vpop.f32.mrf.mxu0
        %698 = vmatprep.mubr.bf16.mxu0 0
        %699 = vmatmul.mubr.bf16.gmra.mxu0 %v618
        %v700 = vpop.f32.mrf.mxu0
        %v701 = vadd.f32 0.0, %v700
        %v702 = vpop.f32.mrf.mxu0
        %v703 = vpop.f32.mrf.mxu0
        %v704 = vadd.f32 0.0, %v703
        %v705 = vpop.f32.mrf.mxu0
        %706 = vmatprep.mubr.bf16.mxu0 0
        %707 = vmatmul.mubr.bf16.gmra.mxu0 %v621
        %v708 = vpop.f32.mrf.mxu0
        %v709 = vadd.f32 0.0, %v708
        %v710 = vpop.f32.mrf.mxu0
        %v711 = vpop.f32.mrf.mxu0
        %v712 = vadd.f32 0.0, %v711
        %v713 = vpop.f32.mrf.mxu0
        %714 = vmatprep.mubr.bf16.mxu0 0
        %715 = vmatmul.mubr.bf16.gmra.mxu0 %v624
        %v716 = vpop.f32.mrf.mxu0
        %v717 = vadd.f32 0.0, %v716
        %v718 = vpop.f32.mrf.mxu0
        %v719 = vpop.f32.mrf.mxu0
        %v720 = vadd.f32 0.0, %v719
        %v721 = vpop.f32.mrf.mxu0
        %722 = vdwg.mxu0
        %v723 = vld [vmem:[%s3] sm:$0x1]
        %v724 = vld [vmem:[%s4] sm:$0x1]
        %v725 = vadd.f32 %v661, %v664
        %v726 = vadd.f32 %v725, %v669
        %v727 = vadd.f32 %v726, %v672
        %v728 = vadd.f32 %v727, %v677
        %v729 = vadd.f32 %v728, %v680
        %v730 = vadd.f32 %v729, %v685
        %v731 = vadd.f32 %v730, %v688
        %v732 = vadd.f32 %v731, %v693
        %v733 = vadd.f32 %v732, %v696
        %v734 = vadd.f32 %v733, %v701
        %v735 = vadd.f32 %v734, %v704
        %v736 = vadd.f32 %v735, %v709
        %v737 = vadd.f32 %v736, %v712
        %v738 = vadd.f32 %v737, %v717
        %v739 = vadd.f32 %v738, %v720
        %v740 = vrot.slane %v739, 4
        %v741 = vadd.f32 %v739, %v740
        %v742 = vrot.slane %v741, 2
        %v743 = vadd.f32 %v741, %v742
        %v744 = vrot.slane %v743, 1
        %v745 = vadd.f32 %v743, %v744
        %v746 = vmul.f32 %v661, %v661
        %v747 = vmul.f32 %v664, %v664
        %v748 = vmul.f32 %v669, %v669
        %v749 = vmul.f32 %v672, %v672
        %v750 = vmul.f32 %v677, %v677
        %v751 = vmul.f32 %v680, %v680
        %v752 = vmul.f32 %v685, %v685
        %v753 = vmul.f32 %v688, %v688
        %v754 = vmul.f32 %v693, %v693
        %v755 = vmul.f32 %v696, %v696
        %v756 = vmul.f32 %v701, %v701
        %v757 = vmul.f32 %v704, %v704
        %v758 = vmul.f32 %v709, %v709
        %v759 = vmul.f32 %v712, %v712
        %v760 = vmul.f32 %v717, %v717
        %v761 = vmul.f32 %v720, %v720
        %v762 = vadd.f32 %v746, %v747
        %v763 = vadd.f32 %v762, %v748
        %v764 = vadd.f32 %v763, %v749
        %v765 = vadd.f32 %v764, %v750
        %v766 = vadd.f32 %v765, %v751
        %v767 = vadd.f32 %v766, %v752
        %v768 = vadd.f32 %v767, %v753
        %v769 = vadd.f32 %v768, %v754
        %v770 = vadd.f32 %v769, %v755
        %v771 = vadd.f32 %v770, %v756
        %v772 = vadd.f32 %v771, %v757
        %v773 = vadd.f32 %v772, %v758
        %v774 = vadd.f32 %v773, %v759
        %v775 = vadd.f32 %v774, %v760
        %v776 = vadd.f32 %v775, %v761
        %v777 = vrot.slane %v776, 4
        %v778 = vadd.f32 %v776, %v777
        %v779 = vrot.slane %v778, 2
        %v780 = vadd.f32 %v778, %v779
        %v781 = vrot.slane %v780, 1
        %v782 = vadd.f32 %v780, %v781
        %v783 = vmul.f32 %v745, 0.0078125
        %v784 = vmul.f32 %v782, 0.0078125
        %v785 = vmul.f32 %v783, %v783
        %v786 = vsub.f32 %v784, %v785
        %v787 = vmax.f32 %v786, 0.0
        %v788 = vadd.f32 %v787, 1e-05
        %v789 = vrsqrt.pop %v788
        %v790 = vmul.f32 %v723, %v789
        %v791 = vmul.f32 %v783, %v790
        %v792 = vsub.f32 %v724, %v791
        %v794 = vlaneseq
        %v795 = vshrl.u32 %v794, 7
        %v796 = vsub.s32 0, %v795
        %v797 = vrot.slane %v790, %v796
        %v799 = vmul.f32 %v661, %v797
        %v800 = vmul.f32 %v664, %v797
        %v801 = vmul.f32 %v669, %v797
        %v802 = vmul.f32 %v672, %v797
        %v803 = vmul.f32 %v677, %v797
        %v804 = vmul.f32 %v680, %v797
        %v805 = vmul.f32 %v685, %v797
        %v806 = vmul.f32 %v688, %v797
        %v807 = vmul.f32 %v693, %v797
        %v808 = vmul.f32 %v696, %v797
        %v809 = vmul.f32 %v701, %v797
        %v810 = vmul.f32 %v704, %v797
        %v811 = vmul.f32 %v709, %v797
        %v812 = vmul.f32 %v712, %v797
        %v813 = vmul.f32 %v717, %v797
        %v814 = vmul.f32 %v720, %v797
        %v816 = vlaneseq
        %v817 = vshrl.u32 %v816, 7
        %v818 = vsub.s32 0, %v817
        %v819 = vrot.slane %v792, %v818
        %v821 = vadd.f32 %v799, %v819
        %v822 = vadd.f32 %v800, %v819
        %v823 = vadd.f32 %v801, %v819
        %v824 = vadd.f32 %v802, %v819
        %v825 = vadd.f32 %v803, %v819
        %v826 = vadd.f32 %v804, %v819
        %v827 = vadd.f32 %v805, %v819
        %v828 = vadd.f32 %v806, %v819
        %v829 = vadd.f32 %v807, %v819
        %v830 = vadd.f32 %v808, %v819
        %v831 = vadd.f32 %v809, %v819
        %v832 = vadd.f32 %v810, %v819
        %v833 = vadd.f32 %v811, %v819
        %v834 = vadd.f32 %v812, %v819
        %v835 = vadd.f32 %v813, %v819
        %v836 = vadd.f32 %v814, %v819
        %v837 = vtanh.pop %v821
        %v838 = vtanh.pop %v822
        %v839 = vtanh.pop %v823
        %v840 = vtanh.pop %v824
        %v841 = vtanh.pop %v825
        %v842 = vtanh.pop %v826
        %v843 = vtanh.pop %v827
        %v844 = vtanh.pop %v828
        %v845 = vtanh.pop %v829
        %v846 = vtanh.pop %v830
        %v847 = vtanh.pop %v831
        %v848 = vtanh.pop %v832
        %v849 = vtanh.pop %v833
        %v850 = vtanh.pop %v834
        %v851 = vtanh.pop %v835
        %v852 = vtanh.pop %v836
        %853 = vst [vmem:[#allocation2] sm:$0xff] %v837
        %854 = vst [vmem:[#allocation2 + $0x8] sm:$0xff] %v838
        %855 = vst [vmem:[#allocation2 + $0x10] sm:$0xff] %v839
        %856 = vst [vmem:[#allocation2 + $0x18] sm:$0xff] %v840
        %857 = vst [vmem:[#allocation2 + $0x20] sm:$0xff] %v841
        %858 = vst [vmem:[#allocation2 + $0x28] sm:$0xff] %v842
        %859 = vst [vmem:[#allocation2 + $0x30] sm:$0xff] %v843
        %860 = vst [vmem:[#allocation2 + $0x38] sm:$0xff] %v844
        %861 = vst [vmem:[#allocation2 + $0x40] sm:$0xff] %v845
        %862 = vst [vmem:[#allocation2 + $0x48] sm:$0xff] %v846
        %863 = vst [vmem:[#allocation2 + $0x50] sm:$0xff] %v847
        %864 = vst [vmem:[#allocation2 + $0x58] sm:$0xff] %v848
        %865 = vst [vmem:[#allocation2 + $0x60] sm:$0xff] %v849
        %866 = vst [vmem:[#allocation2 + $0x68] sm:$0xff] %v850
        %867 = vst [vmem:[#allocation2 + $0x70] sm:$0xff] %v851
        %868 = vst [vmem:[#allocation2 + $0x78] sm:$0xff] %v852
        %869 = vst [vmem:[#allocation3] sm:$0xff] 0.0
        %870 = vst [vmem:[#allocation3 + $0x8] sm:$0xff] 0.0
        %871 = vst [vmem:[#allocation3 + $0x10] sm:$0xff] 0.0
        %872 = vst [vmem:[#allocation3 + $0x18] sm:$0xff] 0.0
        %873 = vst [vmem:[#allocation3 + $0x20] sm:$0xff] 0.0
        %874 = vst [vmem:[#allocation3 + $0x28] sm:$0xff] 0.0
        %875 = vst [vmem:[#allocation3 + $0x30] sm:$0xff] 0.0
        %876 = vst [vmem:[#allocation3 + $0x38] sm:$0xff] 0.0
        %877 = vst [vmem:[#allocation3 + $0x40] sm:$0xff] 0.0
        %878 = vst [vmem:[#allocation3 + $0x48] sm:$0xff] 0.0
        %879 = vst [vmem:[#allocation3 + $0x50] sm:$0xff] 0.0
        %880 = vst [vmem:[#allocation3 + $0x58] sm:$0xff] 0.0
        %881 = vst [vmem:[#allocation3 + $0x60] sm:$0xff] 0.0
        %882 = vst [vmem:[#allocation3 + $0x68] sm:$0xff] 0.0
        %883 = vst [vmem:[#allocation3 + $0x70] sm:$0xff] 0.0
        %884 = vst [vmem:[#allocation3 + $0x78] sm:$0xff] 0.0
      $region76: #{wavenet_forward.1} parent=71 // pred_fallthru
        _
      %v885 = vld [vmem:[#allocation2] sm:$0xff]
      %v886 = vld [vmem:[#allocation2 + $0x8] sm:$0xff]
      %v887 = vld [vmem:[#allocation2 + $0x10] sm:$0xff]
      %v888 = vld [vmem:[#allocation2 + $0x18] sm:$0xff]
      %v889 = vld [vmem:[#allocation2 + $0x20] sm:$0xff]
      %v890 = vld [vmem:[#allocation2 + $0x28] sm:$0xff]
      %v891 = vld [vmem:[#allocation2 + $0x30] sm:$0xff]
      %v892 = vld [vmem:[#allocation2 + $0x38] sm:$0xff]
      %v893 = vld [vmem:[#allocation2 + $0x40] sm:$0xff]
      %v894 = vld [vmem:[#allocation2 + $0x48] sm:$0xff]
      %v895 = vld [vmem:[#allocation2 + $0x50] sm:$0xff]
      %v896 = vld [vmem:[#allocation2 + $0x58] sm:$0xff]
      %v897 = vld [vmem:[#allocation2 + $0x60] sm:$0xff]
      %v898 = vld [vmem:[#allocation2 + $0x68] sm:$0xff]
      %v899 = vld [vmem:[#allocation2 + $0x70] sm:$0xff]
      %v900 = vld [vmem:[#allocation2 + $0x78] sm:$0xff]
      %901 = vst [vmem:[#allocation4 + $0x30] sm:$0xff] %v885
      %902 = vst [vmem:[#allocation4 + $0x38] sm:$0xff] %v886
      %903 = vst [vmem:[#allocation4 + $0x40] sm:$0xff] %v887
      %904 = vst [vmem:[#allocation4 + $0x48] sm:$0xff] %v888
      %905 = vst [vmem:[#allocation4 + $0x50] sm:$0xff] %v889
      %906 = vst [vmem:[#allocation4 + $0x58] sm:$0xff] %v890
      %907 = vst [vmem:[#allocation4 + $0x60] sm:$0xff] %v891
      %908 = vst [vmem:[#allocation4 + $0x68] sm:$0xff] %v892
      %909 = vst [vmem:[#allocation4 + $0xd0] sm:$0xff] %v893
      %910 = vst [vmem:[#allocation4 + $0xd8] sm:$0xff] %v894
      %911 = vst [vmem:[#allocation4 + $0xe0] sm:$0xff] %v895
      %912 = vst [vmem:[#allocation4 + $0xe8] sm:$0xff] %v896
      %913 = vst [vmem:[#allocation4 + $0xf0] sm:$0xff] %v897
      %914 = vst [vmem:[#allocation4 + $0xf8] sm:$0xff] %v898
      %915 = vst [vmem:[#allocation4 + $0x100] sm:$0xff] %v899
      %916 = vst [vmem:[#allocation4 + $0x108] sm:$0xff] %v900
      %s917 = smul.u32 %s516, 4294967293
      %s918 = sadd.s32 %s917, 48
      %s919 = scalar_lea.vmem [#allocation4], %s918
      %v920 = vld [vmem:[%s919] sm:$0xff]
      %v921 = vld [vmem:[%s919 + $0x8] sm:$0xff]
      %v922 = vld [vmem:[%s919 + $0x10] sm:$0xff]
      %v923 = vld [vmem:[%s919 + $0x18] sm:$0xff]
      %v924 = vld [vmem:[%s919 + $0x20] sm:$0xff]
      %v925 = vld [vmem:[%s919 + $0x28] sm:$0xff]
      %v926 = vld [vmem:[%s919 + $0x30] sm:$0xff]
      %v927 = vld [vmem:[%s919 + $0x38] sm:$0xff]
      %v928 = vld [vmem:[%s919 + $0xa0] sm:$0xff]
      %v929 = vld [vmem:[%s919 + $0xa8] sm:$0xff]
      %v930 = vld [vmem:[%s919 + $0xb0] sm:$0xff]
      %v931 = vld [vmem:[%s919 + $0xb8] sm:$0xff]
      %v932 = vld [vmem:[%s919 + $0xc0] sm:$0xff]
      %v933 = vld [vmem:[%s919 + $0xc8] sm:$0xff]
      %v934 = vld [vmem:[%s919 + $0xd0] sm:$0xff]
      %v935 = vld [vmem:[%s919 + $0xd8] sm:$0xff]
      %v936 = vpack.c.bf16 %v921, %v920
      %v937 = vpack.c.bf16 %v923, %v922
      %v938 = vpack.c.bf16 %v925, %v924
      %v939 = vpack.c.bf16 %v927, %v926
      %v940 = vpack.c.bf16 %v929, %v928
      %v941 = vpack.c.bf16 %v931, %v930
      %v942 = vpack.c.bf16 %v933, %v932
      %v943 = vpack.c.bf16 %v935, %v934
      %v944 = vld [vmem:[%s495] sm:$0xff]
      %v945 = vld [vmem:[%s495 + $0x8] sm:$0xff]
      %v946 = vld [vmem:[%s495 + $0x10] sm:$0xff]
      %v947 = vld [vmem:[%s495 + $0x18] sm:$0xff]
      %v948 = vld [vmem:[%s495 + $0x20] sm:$0xff]
      %v949 = vld [vmem:[%s495 + $0x28] sm:$0xff]
      %v950 = vld [vmem:[%s495 + $0x30] sm:$0xff]
      %v951 = vld [vmem:[%s495 + $0x38] sm:$0xff]
      %v952 = vld [vmem:[%s495 + $0x40] sm:$0xff]
      %v953 = vld [vmem:[%s495 + $0x48] sm:$0xff]
      %v954 = vld [vmem:[%s495 + $0x50] sm:$0xff]
      %v955 = vld [vmem:[%s495 + $0x58] sm:$0xff]
      %v956 = vld [vmem:[%s495 + $0x60] sm:$0xff]
      %v957 = vld [vmem:[%s495 + $0x68] sm:$0xff]
      %v958 = vld [vmem:[%s495 + $0x70] sm:$0xff]
      %v959 = vld [vmem:[%s495 + $0x78] sm:$0xff]
      %s960 = smul.u32 %s516, 4294967294
      %s961 = sadd.s32 %s960, 48
      %s962 = scalar_lea.vmem [#allocation4], %s961
      %v963 = vld [vmem:[%s962] sm:$0xff]
      %v964 = vld [vmem:[%s962 + $0x8] sm:$0xff]
      %v965 = vld [vmem:[%s962 + $0x10] sm:$0xff]
      %v966 = vld [vmem:[%s962 + $0x18] sm:$0xff]
      %v967 = vld [vmem:[%s962 + $0x20] sm:$0xff]
      %v968 = vld [vmem:[%s962 + $0x28] sm:$0xff]
      %v969 = vld [vmem:[%s962 + $0x30] sm:$0xff]
      %v970 = vld [vmem:[%s962 + $0x38] sm:$0xff]
      %v971 = vld [vmem:[%s962 + $0xa0] sm:$0xff]
      %v972 = vld [vmem:[%s962 + $0xa8] sm:$0xff]
      %v973 = vld [vmem:[%s962 + $0xb0] sm:$0xff]
      %v974 = vld [vmem:[%s962 + $0xb8] sm:$0xff]
      %v975 = vld [vmem:[%s962 + $0xc0] sm:$0xff]
      %v976 = vld [vmem:[%s962 + $0xc8] sm:$0xff]
      %v977 = vld [vmem:[%s962 + $0xd0] sm:$0xff]
      %v978 = vld [vmem:[%s962 + $0xd8] sm:$0xff]
      %v979 = vpack.c.bf16 %v964, %v963
      %v980 = vpack.c.bf16 %v966, %v965
      %v981 = vpack.c.bf16 %v968, %v967
      %v982 = vpack.c.bf16 %v970, %v969
      %v983 = vpack.c.bf16 %v972, %v971
      %v984 = vpack.c.bf16 %v974, %v973
      %v985 = vpack.c.bf16 %v976, %v975
      %v986 = vpack.c.bf16 %v978, %v977
      %s987 = scalar_lea.vmem %s495, 128
      %v988 = vld [vmem:[%s987] sm:$0xff]
      %v989 = vld [vmem:[%s987 + $0x8] sm:$0xff]
      %v990 = vld [vmem:[%s987 + $0x10] sm:$0xff]
      %v991 = vld [vmem:[%s987 + $0x18] sm:$0xff]
      %v992 = vld [vmem:[%s987 + $0x20] sm:$0xff]
      %v993 = vld [vmem:[%s987 + $0x28] sm:$0xff]
      %v994 = vld [vmem:[%s987 + $0x30] sm:$0xff]
      %v995 = vld [vmem:[%s987 + $0x38] sm:$0xff]
      %v996 = vld [vmem:[%s987 + $0x40] sm:$0xff]
      %v997 = vld [vmem:[%s987 + $0x48] sm:$0xff]
      %v998 = vld [vmem:[%s987 + $0x50] sm:$0xff]
      %v999 = vld [vmem:[%s987 + $0x58] sm:$0xff]
      %v1000 = vld [vmem:[%s987 + $0x60] sm:$0xff]
      %v1001 = vld [vmem:[%s987 + $0x68] sm:$0xff]
      %v1002 = vld [vmem:[%s987 + $0x70] sm:$0xff]
      %v1003 = vld [vmem:[%s987 + $0x78] sm:$0xff]
      %v1020 = vunpack.c.l.b16 %v988
      %v1021 = vunpack.c.h.b16 %v988
      %v1022 = vunpack.c.l.b16 %v989
      %v1023 = vunpack.c.h.b16 %v989
      %v1024 = vunpack.c.l.b16 %v990
      %v1025 = vunpack.c.h.b16 %v990
      %v1026 = vunpack.c.l.b16 %v991
      %v1027 = vunpack.c.h.b16 %v991
      %v1028 = vunpack.c.l.b16 %v992
      %v1029 = vunpack.c.h.b16 %v992
      %v1030 = vunpack.c.l.b16 %v993
      %v1031 = vunpack.c.h.b16 %v993
      %v1032 = vunpack.c.l.b16 %v994
      %v1033 = vunpack.c.h.b16 %v994
      %v1034 = vunpack.c.l.b16 %v995
      %v1035 = vunpack.c.h.b16 %v995
      %v1036 = vunpack.c.l.b16 %v996
      %v1037 = vunpack.c.h.b16 %v996
      %v1038 = vunpack.c.l.b16 %v997
      %v1039 = vunpack.c.h.b16 %v997
      %v1040 = vunpack.c.l.b16 %v998
      %v1041 = vunpack.c.h.b16 %v998
      %v1042 = vunpack.c.l.b16 %v999
      %v1043 = vunpack.c.h.b16 %v999
      %v1044 = vunpack.c.l.b16 %v1000
      %v1045 = vunpack.c.h.b16 %v1000
      %v1046 = vunpack.c.l.b16 %v1001
      %v1047 = vunpack.c.h.b16 %v1001
      %v1048 = vunpack.c.l.b16 %v1002
      %v1049 = vunpack.c.h.b16 %v1002
      %v1050 = vunpack.c.l.b16 %v1003
      %v1051 = vunpack.c.h.b16 %v1003
      %v1052 = vpack.c.b16 %v1022, %v1020
      %v1053 = vpack.c.b16 %v1023, %v1021
      %v1054 = vpack.c.b16 %v1026, %v1024
      %v1055 = vpack.c.b16 %v1027, %v1025
      %v1056 = vpack.c.b16 %v1030, %v1028
      %v1057 = vpack.c.b16 %v1031, %v1029
      %v1058 = vpack.c.b16 %v1034, %v1032
      %v1059 = vpack.c.b16 %v1035, %v1033
      %v1060 = vpack.c.b16 %v1038, %v1036
      %v1061 = vpack.c.b16 %v1039, %v1037
      %v1062 = vpack.c.b16 %v1042, %v1040
      %v1063 = vpack.c.b16 %v1043, %v1041
      %v1064 = vpack.c.b16 %v1046, %v1044
      %v1065 = vpack.c.b16 %v1047, %v1045
      %v1066 = vpack.c.b16 %v1050, %v1048
      %v1067 = vpack.c.b16 %v1051, %v1049
      %1084 = vmatprep.subr.bf16.mxu0 %v1067
      %1085 = vmatpush1.bf16.msra.mxu0 %v1066
      %1086 = vmatprep.subr.bf16.mxu0 %v1065
      %1087 = vmatpush1.bf16.msra.mxu0 %v1064
      %1088 = vmatprep.subr.bf16.mxu0 %v1063
      %1089 = vmatpush1.bf16.msra.mxu0 %v1062
      %1090 = vmatprep.subr.bf16.mxu0 %v1061
      %1091 = vmatpush1.bf16.msra.mxu0 %v1060
      %1092 = vmatprep.subr.bf16.mxu0 %v1059
      %1093 = vmatpush1.bf16.msra.mxu0 %v1058
      %1094 = vmatprep.subr.bf16.mxu0 %v1057
      %1095 = vmatpush1.bf16.msra.mxu0 %v1056
      %1096 = vmatprep.subr.bf16.mxu0 %v1055
      %1097 = vmatpush1.bf16.msra.mxu0 %v1054
      %1098 = vmatprep.subr.bf16.mxu0 %v1053
      %1099 = vmatpush1.bf16.msra.mxu0 %v1052
      %1100 = vmatprep.subr.bf16.mxu0 0
      %1101 = vmatpush2.bf16.msra.mxu0 0
      %1102 = vmatprep.subr.bf16.mxu0 0
      %1103 = vmatpush2.bf16.msra.mxu0 0
      %1104 = vmatprep.subr.bf16.mxu0 0
      %1105 = vmatpush2.bf16.msra.mxu0 0
      %1106 = vmatprep.subr.bf16.mxu0 0
      %1107 = vmatpush2.bf16.msra.mxu0 0
      %1108 = vmatprep.subr.bf16.mxu0 0
      %1109 = vmatpush2.bf16.msra.mxu0 0
      %1110 = vmatprep.subr.bf16.mxu0 0
      %1111 = vmatpush2.bf16.msra.mxu0 0
      %1112 = vmatprep.subr.bf16.mxu0 0
      %1113 = vmatpush2.bf16.msra.mxu0 0
      %1114 = vmatprep.subr.bf16.mxu0 0
      %1115 = vmatpush2.bf16.msra.mxu0 0
      %1116 = vmatprep.mubr.bf16.mxu0 0
      %1117 = vmatmul.mubr.bf16.gmra.mxu0 %v979
      %v1118 = vpop.f32.mrf.mxu0
      %v1119 = vadd.f32 0.0, %v1118
      %v1120 = vpop.f32.mrf.mxu0
      %v1121 = vadd.f32 0.0, %v1120
      %v1122 = vpop.f32.mrf.mxu0
      %v1123 = vadd.f32 0.0, %v1122
      %v1124 = vpop.f32.mrf.mxu0
      %v1125 = vadd.f32 0.0, %v1124
      %1126 = vmatprep.mubr.bf16.mxu0 0
      %1127 = vmatmul.mubr.bf16.gmra.mxu0 %v980
      %v1128 = vpop.f32.mrf.mxu0
      %v1129 = vadd.f32 0.0, %v1128
      %v1130 = vpop.f32.mrf.mxu0
      %v1131 = vadd.f32 0.0, %v1130
      %v1132 = vpop.f32.mrf.mxu0
      %v1133 = vadd.f32 0.0, %v1132
      %v1134 = vpop.f32.mrf.mxu0
      %v1135 = vadd.f32 0.0, %v1134
      %1136 = vmatprep.mubr.bf16.mxu0 0
      %1137 = vmatmul.mubr.bf16.gmra.mxu0 %v981
      %v1138 = vpop.f32.mrf.mxu0
      %v1139 = vadd.f32 0.0, %v1138
      %v1140 = vpop.f32.mrf.mxu0
      %v1141 = vadd.f32 0.0, %v1140
      %v1142 = vpop.f32.mrf.mxu0
      %v1143 = vadd.f32 0.0, %v1142
      %v1144 = vpop.f32.mrf.mxu0
      %v1145 = vadd.f32 0.0, %v1144
      %1146 = vmatprep.mubr.bf16.mxu0 0
      %1147 = vmatmul.mubr.bf16.gmra.mxu0 %v982
      %v1148 = vpop.f32.mrf.mxu0
      %v1149 = vadd.f32 0.0, %v1148
      %v1150 = vpop.f32.mrf.mxu0
      %v1151 = vadd.f32 0.0, %v1150
      %v1152 = vpop.f32.mrf.mxu0
      %v1153 = vadd.f32 0.0, %v1152
      %v1154 = vpop.f32.mrf.mxu0
      %v1155 = vadd.f32 0.0, %v1154
      %1156 = vmatprep.mubr.bf16.mxu0 0
      %1157 = vmatmul.mubr.bf16.gmra.mxu0 %v983
      %v1158 = vpop.f32.mrf.mxu0
      %v1159 = vadd.f32 0.0, %v1158
      %v1160 = vpop.f32.mrf.mxu0
      %v1161 = vadd.f32 0.0, %v1160
      %v1162 = vpop.f32.mrf.mxu0
      %v1163 = vadd.f32 0.0, %v1162
      %v1164 = vpop.f32.mrf.mxu0
      %v1165 = vadd.f32 0.0, %v1164
      %1166 = vmatprep.mubr.bf16.mxu0 0
      %1167 = vmatmul.mubr.bf16.gmra.mxu0 %v984
      %v1168 = vpop.f32.mrf.mxu0
      %v1169 = vadd.f32 0.0, %v1168
      %v1170 = vpop.f32.mrf.mxu0
      %v1171 = vadd.f32 0.0, %v1170
      %v1172 = vpop.f32.mrf.mxu0
      %v1173 = vadd.f32 0.0, %v1172
      %v1174 = vpop.f32.mrf.mxu0
      %v1175 = vadd.f32 0.0, %v1174
      %1176 = vmatprep.mubr.bf16.mxu0 0
      %1177 = vmatmul.mubr.bf16.gmra.mxu0 %v985
      %v1178 = vpop.f32.mrf.mxu0
      %v1179 = vadd.f32 0.0, %v1178
      %v1180 = vpop.f32.mrf.mxu0
      %v1181 = vadd.f32 0.0, %v1180
      %v1182 = vpop.f32.mrf.mxu0
      %v1183 = vadd.f32 0.0, %v1182
      %v1184 = vpop.f32.mrf.mxu0
      %v1185 = vadd.f32 0.0, %v1184
      %1186 = vmatprep.mubr.bf16.mxu0 0
      %1187 = vmatmul.mubr.bf16.gmra.mxu0 %v986
      %v1188 = vpop.f32.mrf.mxu0
      %v1189 = vadd.f32 0.0, %v1188
      %v1190 = vpop.f32.mrf.mxu0
      %v1191 = vadd.f32 0.0, %v1190
      %v1192 = vpop.f32.mrf.mxu0
      %v1193 = vadd.f32 0.0, %v1192
      %v1194 = vpop.f32.mrf.mxu0
      %v1195 = vadd.f32 0.0, %v1194
      %1196 = vdwg.mxu0
      %v1213 = vunpack.c.l.b16 %v944
      %v1214 = vunpack.c.h.b16 %v944
      %v1215 = vunpack.c.l.b16 %v945
      %v1216 = vunpack.c.h.b16 %v945
      %v1217 = vunpack.c.l.b16 %v946
      %v1218 = vunpack.c.h.b16 %v946
      %v1219 = vunpack.c.l.b16 %v947
      %v1220 = vunpack.c.h.b16 %v947
      %v1221 = vunpack.c.l.b16 %v948
      %v1222 = vunpack.c.h.b16 %v948
      %v1223 = vunpack.c.l.b16 %v949
      %v1224 = vunpack.c.h.b16 %v949
      %v1225 = vunpack.c.l.b16 %v950
      %v1226 = vunpack.c.h.b16 %v950
      %v1227 = vunpack.c.l.b16 %v951
      %v1228 = vunpack.c.h.b16 %v951
      %v1229 = vunpack.c.l.b16 %v952
      %v1230 = vunpack.c.h.b16 %v952
      %v1231 = vunpack.c.l.b16 %v953
      %v1232 = vunpack.c.h.b16 %v953
      %v1233 = vunpack.c.l.b16 %v954
      %v1234 = vunpack.c.h.b16 %v954
      %v1235 = vunpack.c.l.b16 %v955
      %v1236 = vunpack.c.h.b16 %v955
      %v1237 = vunpack.c.l.b16 %v956
      %v1238 = vunpack.c.h.b16 %v956
      %v1239 = vunpack.c.l.b16 %v957
      %v1240 = vunpack.c.h.b16 %v957
      %v1241 = vunpack.c.l.b16 %v958
      %v1242 = vunpack.c.h.b16 %v958
      %v1243 = vunpack.c.l.b16 %v959
      %v1244 = vunpack.c.h.b16 %v959
      %v1245 = vpack.c.b16 %v1215, %v1213
      %v1246 = vpack.c.b16 %v1216, %v1214
      %v1247 = vpack.c.b16 %v1219, %v1217
      %v1248 = vpack.c.b16 %v1220, %v1218
      %v1249 = vpack.c.b16 %v1223, %v1221
      %v1250 = vpack.c.b16 %v1224, %v1222
      %v1251 = vpack.c.b16 %v1227, %v1225
      %v1252 = vpack.c.b16 %v1228, %v1226
      %v1253 = vpack.c.b16 %v1231, %v1229
      %v1254 = vpack.c.b16 %v1232, %v1230
      %v1255 = vpack.c.b16 %v1235, %v1233
      %v1256 = vpack.c.b16 %v1236, %v1234
      %v1257 = vpack.c.b16 %v1239, %v1237
      %v1258 = vpack.c.b16 %v1240, %v1238
      %v1259 = vpack.c.b16 %v1243, %v1241
      %v1260 = vpack.c.b16 %v1244, %v1242
      %1277 = vmatprep.subr.bf16.mxu0 %v1260
      %1278 = vmatpush1.bf16.msra.mxu0 %v1259
      %1279 = vmatprep.subr.bf16.mxu0 %v1258
      %1280 = vmatpush1.bf16.msra.mxu0 %v1257
      %1281 = vmatprep.subr.bf16.mxu0 %v1256
      %1282 = vmatpush1.bf16.msra.mxu0 %v1255
      %1283 = vmatprep.subr.bf16.mxu0 %v1254
      %1284 = vmatpush1.bf16.msra.mxu0 %v1253
      %1285 = vmatprep.subr.bf16.mxu0 %v1252
      %1286 = vmatpush1.bf16.msra.mxu0 %v1251
      %1287 = vmatprep.subr.bf16.mxu0 %v1250
      %1288 = vmatpush1.bf16.msra.mxu0 %v1249
      %1289 = vmatprep.subr.bf16.mxu0 %v1248
      %1290 = vmatpush1.bf16.msra.mxu0 %v1247
      %1291 = vmatprep.subr.bf16.mxu0 %v1246
      %1292 = vmatpush1.bf16.msra.mxu0 %v1245
      %1293 = vmatprep.subr.bf16.mxu0 0
      %1294 = vmatpush2.bf16.msra.mxu0 0
      %1295 = vmatprep.subr.bf16.mxu0 0
      %1296 = vmatpush2.bf16.msra.mxu0 0
      %1297 = vmatprep.subr.bf16.mxu0 0
      %1298 = vmatpush2.bf16.msra.mxu0 0
      %1299 = vmatprep.subr.bf16.mxu0 0
      %1300 = vmatpush2.bf16.msra.mxu0 0
      %1301 = vmatprep.subr.bf16.mxu0 0
      %1302 = vmatpush2.bf16.msra.mxu0 0
      %1303 = vmatprep.subr.bf16.mxu0 0
      %1304 = vmatpush2.bf16.msra.mxu0 0
      %1305 = vmatprep.subr.bf16.mxu0 0
      %1306 = vmatpush2.bf16.msra.mxu0 0
      %1307 = vmatprep.subr.bf16.mxu0 0
      %1308 = vmatpush2.bf16.msra.mxu0 0
      %1309 = vmatprep.mubr.bf16.mxu0 0
      %1310 = vmatmul.mubr.bf16.gmra.mxu0 %v936
      %v1311 = vpop.f32.mrf.mxu0
      %v1312 = vadd.f32 %v1119, %v1311
      %v1313 = vpop.f32.mrf.mxu0
      %v1314 = vadd.f32 %v1121, %v1313
      %v1315 = vpop.f32.mrf.mxu0
      %v1316 = vadd.f32 %v1123, %v1315
      %v1317 = vpop.f32.mrf.mxu0
      %v1318 = vadd.f32 %v1125, %v1317
      %1319 = vmatprep.mubr.bf16.mxu0 0
      %1320 = vmatmul.mubr.bf16.gmra.mxu0 %v937
      %v1321 = vpop.f32.mrf.mxu0
      %v1322 = vadd.f32 %v1129, %v1321
      %v1323 = vpop.f32.mrf.mxu0
      %v1324 = vadd.f32 %v1131, %v1323
      %v1325 = vpop.f32.mrf.mxu0
      %v1326 = vadd.f32 %v1133, %v1325
      %v1327 = vpop.f32.mrf.mxu0
      %v1328 = vadd.f32 %v1135, %v1327
      %1329 = vmatprep.mubr.bf16.mxu0 0
      %1330 = vmatmul.mubr.bf16.gmra.mxu0 %v938
      %v1331 = vpop.f32.mrf.mxu0
      %v1332 = vadd.f32 %v1139, %v1331
      %v1333 = vpop.f32.mrf.mxu0
      %v1334 = vadd.f32 %v1141, %v1333
      %v1335 = vpop.f32.mrf.mxu0
      %v1336 = vadd.f32 %v1143, %v1335
      %v1337 = vpop.f32.mrf.mxu0
      %v1338 = vadd.f32 %v1145, %v1337
      %1339 = vmatprep.mubr.bf16.mxu0 0
      %1340 = vmatmul.mubr.bf16.gmra.mxu0 %v939
      %v1341 = vpop.f32.mrf.mxu0
      %v1342 = vadd.f32 %v1149, %v1341
      %v1343 = vpop.f32.mrf.mxu0
      %v1344 = vadd.f32 %v1151, %v1343
      %v1345 = vpop.f32.mrf.mxu0
      %v1346 = vadd.f32 %v1153, %v1345
      %v1347 = vpop.f32.mrf.mxu0
      %v1348 = vadd.f32 %v1155, %v1347
      %1349 = vmatprep.mubr.bf16.mxu0 0
      %1350 = vmatmul.mubr.bf16.gmra.mxu0 %v940
      %v1351 = vpop.f32.mrf.mxu0
      %v1352 = vadd.f32 %v1159, %v1351
      %v1353 = vpop.f32.mrf.mxu0
      %v1354 = vadd.f32 %v1161, %v1353
      %v1355 = vpop.f32.mrf.mxu0
      %v1356 = vadd.f32 %v1163, %v1355
      %v1357 = vpop.f32.mrf.mxu0
      %v1358 = vadd.f32 %v1165, %v1357
      %1359 = vmatprep.mubr.bf16.mxu0 0
      %1360 = vmatmul.mubr.bf16.gmra.mxu0 %v941
      %v1361 = vpop.f32.mrf.mxu0
      %v1362 = vadd.f32 %v1169, %v1361
      %v1363 = vpop.f32.mrf.mxu0
      %v1364 = vadd.f32 %v1171, %v1363
      %v1365 = vpop.f32.mrf.mxu0
      %v1366 = vadd.f32 %v1173, %v1365
      %v1367 = vpop.f32.mrf.mxu0
      %v1368 = vadd.f32 %v1175, %v1367
      %1369 = vmatprep.mubr.bf16.mxu0 0
      %1370 = vmatmul.mubr.bf16.gmra.mxu0 %v942
      %v1371 = vpop.f32.mrf.mxu0
      %v1372 = vadd.f32 %v1179, %v1371
      %v1373 = vpop.f32.mrf.mxu0
      %v1374 = vadd.f32 %v1181, %v1373
      %v1375 = vpop.f32.mrf.mxu0
      %v1376 = vadd.f32 %v1183, %v1375
      %v1377 = vpop.f32.mrf.mxu0
      %v1378 = vadd.f32 %v1185, %v1377
      %1379 = vmatprep.mubr.bf16.mxu0 0
      %1380 = vmatmul.mubr.bf16.gmra.mxu0 %v943
      %v1381 = vpop.f32.mrf.mxu0
      %v1382 = vadd.f32 %v1189, %v1381
      %v1383 = vpop.f32.mrf.mxu0
      %v1384 = vadd.f32 %v1191, %v1383
      %v1385 = vpop.f32.mrf.mxu0
      %v1386 = vadd.f32 %v1193, %v1385
      %v1387 = vpop.f32.mrf.mxu0
      %v1388 = vadd.f32 %v1195, %v1387
      %1389 = vdwg.mxu0
      %s1390 = ssub.s32 48, %s516
      %s1391 = scalar_lea.vmem [#allocation4], %s1390
      %v1392 = vld [vmem:[%s1391] sm:$0xff]
      %v1393 = vld [vmem:[%s1391 + $0x8] sm:$0xff]
      %v1394 = vld [vmem:[%s1391 + $0x10] sm:$0xff]
      %v1395 = vld [vmem:[%s1391 + $0x18] sm:$0xff]
      %v1396 = vld [vmem:[%s1391 + $0x20] sm:$0xff]
      %v1397 = vld [vmem:[%s1391 + $0x28] sm:$0xff]
      %v1398 = vld [vmem:[%s1391 + $0x30] sm:$0xff]
      %v1399 = vld [vmem:[%s1391 + $0x38] sm:$0xff]
      %v1400 = vld [vmem:[%s1391 + $0xa0] sm:$0xff]
      %v1401 = vld [vmem:[%s1391 + $0xa8] sm:$0xff]
      %v1402 = vld [vmem:[%s1391 + $0xb0] sm:$0xff]
      %v1403 = vld [vmem:[%s1391 + $0xb8] sm:$0xff]
      %v1404 = vld [vmem:[%s1391 + $0xc0] sm:$0xff]
      %v1405 = vld [vmem:[%s1391 + $0xc8] sm:$0xff]
      %v1406 = vld [vmem:[%s1391 + $0xd0] sm:$0xff]
      %v1407 = vld [vmem:[%s1391 + $0xd8] sm:$0xff]
      %v1408 = vpack.c.bf16 %v1393, %v1392
      %v1409 = vpack.c.bf16 %v1395, %v1394
      %v1410 = vpack.c.bf16 %v1397, %v1396
      %v1411 = vpack.c.bf16 %v1399, %v1398
      %v1412 = vpack.c.bf16 %v1401, %v1400
      %v1413 = vpack.c.bf16 %v1403, %v1402
      %v1414 = vpack.c.bf16 %v1405, %v1404
      %v1415 = vpack.c.bf16 %v1407, %v1406
      %s1416 = scalar_lea.vmem %s495, 256
      %v1417 = vld [vmem:[%s1416] sm:$0xff]
      %v1418 = vld [vmem:[%s1416 + $0x8] sm:$0xff]
      %v1419 = vld [vmem:[%s1416 + $0x10] sm:$0xff]
      %v1420 = vld [vmem:[%s1416 + $0x18] sm:$0xff]
      %v1421 = vld [vmem:[%s1416 + $0x20] sm:$0xff]
      %v1422 = vld [vmem:[%s1416 + $0x28] sm:$0xff]
      %v1423 = vld [vmem:[%s1416 + $0x30] sm:$0xff]
      %v1424 = vld [vmem:[%s1416 + $0x38] sm:$0xff]
      %v1425 = vld [vmem:[%s1416 + $0x40] sm:$0xff]
      %v1426 = vld [vmem:[%s1416 + $0x48] sm:$0xff]
      %v1427 = vld [vmem:[%s1416 + $0x50] sm:$0xff]
      %v1428 = vld [vmem:[%s1416 + $0x58] sm:$0xff]
      %v1429 = vld [vmem:[%s1416 + $0x60] sm:$0xff]
      %v1430 = vld [vmem:[%s1416 + $0x68] sm:$0xff]
      %v1431 = vld [vmem:[%s1416 + $0x70] sm:$0xff]
      %v1432 = vld [vmem:[%s1416 + $0x78] sm:$0xff]
      %v1449 = vunpack.c.l.b16 %v1417
      %v1450 = vunpack.c.h.b16 %v1417
      %v1451 = vunpack.c.l.b16 %v1418
      %v1452 = vunpack.c.h.b16 %v1418
      %v1453 = vunpack.c.l.b16 %v1419
      %v1454 = vunpack.c.h.b16 %v1419
      %v1455 = vunpack.c.l.b16 %v1420
      %v1456 = vunpack.c.h.b16 %v1420
      %v1457 = vunpack.c.l.b16 %v1421
      %v1458 = vunpack.c.h.b16 %v1421
      %v1459 = vunpack.c.l.b16 %v1422
      %v1460 = vunpack.c.h.b16 %v1422
      %v1461 = vunpack.c.l.b16 %v1423
      %v1462 = vunpack.c.h.b16 %v1423
      %v1463 = vunpack.c.l.b16 %v1424
      %v1464 = vunpack.c.h.b16 %v1424
      %v1465 = vunpack.c.l.b16 %v1425
      %v1466 = vunpack.c.h.b16 %v1425
      %v1467 = vunpack.c.l.b16 %v1426
      %v1468 = vunpack.c.h.b16 %v1426
      %v1469 = vunpack.c.l.b16 %v1427
      %v1470 = vunpack.c.h.b16 %v1427
      %v1471 = vunpack.c.l.b16 %v1428
      %v1472 = vunpack.c.h.b16 %v1428
      %v1473 = vunpack.c.l.b16 %v1429
      %v1474 = vunpack.c.h.b16 %v1429
      %v1475 = vunpack.c.l.b16 %v1430
      %v1476 = vunpack.c.h.b16 %v1430
      %v1477 = vunpack.c.l.b16 %v1431
      %v1478 = vunpack.c.h.b16 %v1431
      %v1479 = vunpack.c.l.b16 %v1432
      %v1480 = vunpack.c.h.b16 %v1432
      %v1481 = vpack.c.b16 %v1451, %v1449
      %v1482 = vpack.c.b16 %v1452, %v1450
      %v1483 = vpack.c.b16 %v1455, %v1453
      %v1484 = vpack.c.b16 %v1456, %v1454
      %v1485 = vpack.c.b16 %v1459, %v1457
      %v1486 = vpack.c.b16 %v1460, %v1458
      %v1487 = vpack.c.b16 %v1463, %v1461
      %v1488 = vpack.c.b16 %v1464, %v1462
      %v1489 = vpack.c.b16 %v1467, %v1465
      %v1490 = vpack.c.b16 %v1468, %v1466
      %v1491 = vpack.c.b16 %v1471, %v1469
      %v1492 = vpack.c.b16 %v1472, %v1470
      %v1493 = vpack.c.b16 %v1475, %v1473
      %v1494 = vpack.c.b16 %v1476, %v1474
      %v1495 = vpack.c.b16 %v1479, %v1477
      %v1496 = vpack.c.b16 %v1480, %v1478
      %1513 = vmatprep.subr.bf16.mxu0 %v1496
      %1514 = vmatpush1.bf16.msra.mxu0 %v1495
      %1515 = vmatprep.subr.bf16.mxu0 %v1494
      %1516 = vmatpush1.bf16.msra.mxu0 %v1493
      %1517 = vmatprep.subr.bf16.mxu0 %v1492
      %1518 = vmatpush1.bf16.msra.mxu0 %v1491
      %1519 = vmatprep.subr.bf16.mxu0 %v1490
      %1520 = vmatpush1.bf16.msra.mxu0 %v1489
      %1521 = vmatprep.subr.bf16.mxu0 %v1488
      %1522 = vmatpush1.bf16.msra.mxu0 %v1487
      %1523 = vmatprep.subr.bf16.mxu0 %v1486
      %1524 = vmatpush1.bf16.msra.mxu0 %v1485
      %1525 = vmatprep.subr.bf16.mxu0 %v1484
      %1526 = vmatpush1.bf16.msra.mxu0 %v1483
      %1527 = vmatprep.subr.bf16.mxu0 %v1482
      %1528 = vmatpush1.bf16.msra.mxu0 %v1481
      %1529 = vmatprep.subr.bf16.mxu0 0
      %1530 = vmatpush2.bf16.msra.mxu0 0
      %1531 = vmatprep.subr.bf16.mxu0 0
      %1532 = vmatpush2.bf16.msra.mxu0 0
      %1533 = vmatprep.subr.bf16.mxu0 0
      %1534 = vmatpush2.bf16.msra.mxu0 0
      %1535 = vmatprep.subr.bf16.mxu0 0
      %1536 = vmatpush2.bf16.msra.mxu0 0
      %1537 = vmatprep.subr.bf16.mxu0 0
      %1538 = vmatpush2.bf16.msra.mxu0 0
      %1539 = vmatprep.subr.bf16.mxu0 0
      %1540 = vmatpush2.bf16.msra.mxu0 0
      %1541 = vmatprep.subr.bf16.mxu0 0
      %1542 = vmatpush2.bf16.msra.mxu0 0
      %1543 = vmatprep.subr.bf16.mxu0 0
      %1544 = vmatpush2.bf16.msra.mxu0 0
      %1545 = vmatprep.mubr.bf16.mxu0 0
      %1546 = vmatmul.mubr.bf16.gmra.mxu0 %v1408
      %v1547 = vpop.f32.mrf.mxu0
      %v1548 = vadd.f32 0.0, %v1547
      %v1549 = vpop.f32.mrf.mxu0
      %v1550 = vadd.f32 0.0, %v1549
      %v1551 = vpop.f32.mrf.mxu0
      %v1552 = vadd.f32 0.0, %v1551
      %v1553 = vpop.f32.mrf.mxu0
      %v1554 = vadd.f32 0.0, %v1553
      %1555 = vmatprep.mubr.bf16.mxu0 0
      %1556 = vmatmul.mubr.bf16.gmra.mxu0 %v1409
      %v1557 = vpop.f32.mrf.mxu0
      %v1558 = vadd.f32 0.0, %v1557
      %v1559 = vpop.f32.mrf.mxu0
      %v1560 = vadd.f32 0.0, %v1559
      %v1561 = vpop.f32.mrf.mxu0
      %v1562 = vadd.f32 0.0, %v1561
      %v1563 = vpop.f32.mrf.mxu0
      %v1564 = vadd.f32 0.0, %v1563
      %1565 = vmatprep.mubr.bf16.mxu0 0
      %1566 = vmatmul.mubr.bf16.gmra.mxu0 %v1410
      %v1567 = vpop.f32.mrf.mxu0
      %v1568 = vadd.f32 0.0, %v1567
      %v1569 = vpop.f32.mrf.mxu0
      %v1570 = vadd.f32 0.0, %v1569
      %v1571 = vpop.f32.mrf.mxu0
      %v1572 = vadd.f32 0.0, %v1571
      %v1573 = vpop.f32.mrf.mxu0
      %v1574 = vadd.f32 0.0, %v1573
      %1575 = vmatprep.mubr.bf16.mxu0 0
      %1576 = vmatmul.mubr.bf16.gmra.mxu0 %v1411
      %v1577 = vpop.f32.mrf.mxu0
      %v1578 = vadd.f32 0.0, %v1577
      %v1579 = vpop.f32.mrf.mxu0
      %v1580 = vadd.f32 0.0, %v1579
      %v1581 = vpop.f32.mrf.mxu0
      %v1582 = vadd.f32 0.0, %v1581
      %v1583 = vpop.f32.mrf.mxu0
      %v1584 = vadd.f32 0.0, %v1583
      %1585 = vmatprep.mubr.bf16.mxu0 0
      %1586 = vmatmul.mubr.bf16.gmra.mxu0 %v1412
      %v1587 = vpop.f32.mrf.mxu0
      %v1588 = vadd.f32 0.0, %v1587
      %v1589 = vpop.f32.mrf.mxu0
      %v1590 = vadd.f32 0.0, %v1589
      %v1591 = vpop.f32.mrf.mxu0
      %v1592 = vadd.f32 0.0, %v1591
      %v1593 = vpop.f32.mrf.mxu0
      %v1594 = vadd.f32 0.0, %v1593
      %1595 = vmatprep.mubr.bf16.mxu0 0
      %1596 = vmatmul.mubr.bf16.gmra.mxu0 %v1413
      %v1597 = vpop.f32.mrf.mxu0
      %v1598 = vadd.f32 0.0, %v1597
      %v1599 = vpop.f32.mrf.mxu0
      %v1600 = vadd.f32 0.0, %v1599
      %v1601 = vpop.f32.mrf.mxu0
      %v1602 = vadd.f32 0.0, %v1601
      %v1603 = vpop.f32.mrf.mxu0
      %v1604 = vadd.f32 0.0, %v1603
      %1605 = vmatprep.mubr.bf16.mxu0 0
      %1606 = vmatmul.mubr.bf16.gmra.mxu0 %v1414
      %v1607 = vpop.f32.mrf.mxu0
      %v1608 = vadd.f32 0.0, %v1607
      %v1609 = vpop.f32.mrf.mxu0
      %v1610 = vadd.f32 0.0, %v1609
      %v1611 = vpop.f32.mrf.mxu0
      %v1612 = vadd.f32 0.0, %v1611
      %v1613 = vpop.f32.mrf.mxu0
      %v1614 = vadd.f32 0.0, %v1613
      %1615 = vmatprep.mubr.bf16.mxu0 0
      %1616 = vmatmul.mubr.bf16.gmra.mxu0 %v1415
      %v1617 = vpop.f32.mrf.mxu0
      %v1618 = vadd.f32 0.0, %v1617
      %v1619 = vpop.f32.mrf.mxu0
      %v1620 = vadd.f32 0.0, %v1619
      %v1621 = vpop.f32.mrf.mxu0
      %v1622 = vadd.f32 0.0, %v1621
      %v1623 = vpop.f32.mrf.mxu0
      %v1624 = vadd.f32 0.0, %v1623
      %1625 = vdwg.mxu0
      %v1626 = vadd.f32 %v1312, %v1548
      %v1627 = vadd.f32 %v1314, %v1550
      %v1628 = vadd.f32 %v1316, %v1552
      %v1629 = vadd.f32 %v1318, %v1554
      %v1630 = vadd.f32 %v1322, %v1558
      %v1631 = vadd.f32 %v1324, %v1560
      %v1632 = vadd.f32 %v1326, %v1562
      %v1633 = vadd.f32 %v1328, %v1564
      %v1634 = vadd.f32 %v1332, %v1568
      %v1635 = vadd.f32 %v1334, %v1570
      %v1636 = vadd.f32 %v1336, %v1572
      %v1637 = vadd.f32 %v1338, %v1574
      %v1638 = vadd.f32 %v1342, %v1578
      %v1639 = vadd.f32 %v1344, %v1580
      %v1640 = vadd.f32 %v1346, %v1582
      %v1641 = vadd.f32 %v1348, %v1584
      %v1642 = vadd.f32 %v1352, %v1588
      %v1643 = vadd.f32 %v1354, %v1590
      %v1644 = vadd.f32 %v1356, %v1592
      %v1645 = vadd.f32 %v1358, %v1594
      %v1646 = vadd.f32 %v1362, %v1598
      %v1647 = vadd.f32 %v1364, %v1600
      %v1648 = vadd.f32 %v1366, %v1602
      %v1649 = vadd.f32 %v1368, %v1604
      %v1650 = vadd.f32 %v1372, %v1608
      %v1651 = vadd.f32 %v1374, %v1610
      %v1652 = vadd.f32 %v1376, %v1612
      %v1653 = vadd.f32 %v1378, %v1614
      %v1654 = vadd.f32 %v1382, %v1618
      %v1655 = vadd.f32 %v1384, %v1620
      %v1656 = vadd.f32 %v1386, %v1622
      %v1657 = vadd.f32 %v1388, %v1624
      %v1658 = vld [vmem:[#allocation4 + $0x30] sm:$0xff]
      %v1659 = vld [vmem:[#allocation4 + $0x38] sm:$0xff]
      %v1660 = vld [vmem:[#allocation4 + $0x40] sm:$0xff]
      %v1661 = vld [vmem:[#allocation4 + $0x48] sm:$0xff]
      %v1662 = vld [vmem:[#allocation4 + $0x50] sm:$0xff]
      %v1663 = vld [vmem:[#allocation4 + $0x58] sm:$0xff]
      %v1664 = vld [vmem:[#allocation4 + $0x60] sm:$0xff]
      %v1665 = vld [vmem:[#allocation4 + $0x68] sm:$0xff]
      %v1666 = vld [vmem:[#allocation4 + $0xd0] sm:$0xff]
      %v1667 = vld [vmem:[#allocation4 + $0xd8] sm:$0xff]
      %v1668 = vld [vmem:[#allocation4 + $0xe0] sm:$0xff]
      %v1669 = vld [vmem:[#allocation4 + $0xe8] sm:$0xff]
      %v1670 = vld [vmem:[#allocation4 + $0xf0] sm:$0xff]
      %v1671 = vld [vmem:[#allocation4 + $0xf8] sm:$0xff]
      %v1672 = vld [vmem:[#allocation4 + $0x100] sm:$0xff]
      %v1673 = vld [vmem:[#allocation4 + $0x108] sm:$0xff]
      %v1674 = vpack.c.bf16 %v1659, %v1658
      %v1675 = vpack.c.bf16 %v1661, %v1660
      %v1676 = vpack.c.bf16 %v1663, %v1662
      %v1677 = vpack.c.bf16 %v1665, %v1664
      %v1678 = vpack.c.bf16 %v1667, %v1666
      %v1679 = vpack.c.bf16 %v1669, %v1668
      %v1680 = vpack.c.bf16 %v1671, %v1670
      %v1681 = vpack.c.bf16 %v1673, %v1672
      %s1682 = scalar_lea.vmem %s495, 384
      %v1683 = vld [vmem:[%s1682] sm:$0xff]
      %v1684 = vld [vmem:[%s1682 + $0x8] sm:$0xff]
      %v1685 = vld [vmem:[%s1682 + $0x10] sm:$0xff]
      %v1686 = vld [vmem:[%s1682 + $0x18] sm:$0xff]
      %v1687 = vld [vmem:[%s1682 + $0x20] sm:$0xff]
      %v1688 = vld [vmem:[%s1682 + $0x28] sm:$0xff]
      %v1689 = vld [vmem:[%s1682 + $0x30] sm:$0xff]
      %v1690 = vld [vmem:[%s1682 + $0x38] sm:$0xff]
      %v1691 = vld [vmem:[%s1682 + $0x40] sm:$0xff]
      %v1692 = vld [vmem:[%s1682 + $0x48] sm:$0xff]
      %v1693 = vld [vmem:[%s1682 + $0x50] sm:$0xff]
      %v1694 = vld [vmem:[%s1682 + $0x58] sm:$0xff]
      %v1695 = vld [vmem:[%s1682 + $0x60] sm:$0xff]
      %v1696 = vld [vmem:[%s1682 + $0x68] sm:$0xff]
      %v1697 = vld [vmem:[%s1682 + $0x70] sm:$0xff]
      %v1698 = vld [vmem:[%s1682 + $0x78] sm:$0xff]
      %v1715 = vunpack.c.l.b16 %v1683
      %v1716 = vunpack.c.h.b16 %v1683
      %v1717 = vunpack.c.l.b16 %v1684
      %v1718 = vunpack.c.h.b16 %v1684
      %v1719 = vunpack.c.l.b16 %v1685
      %v1720 = vunpack.c.h.b16 %v1685
      %v1721 = vunpack.c.l.b16 %v1686
      %v1722 = vunpack.c.h.b16 %v1686
      %v1723 = vunpack.c.l.b16 %v1687
      %v1724 = vunpack.c.h.b16 %v1687
      %v1725 = vunpack.c.l.b16 %v1688
      %v1726 = vunpack.c.h.b16 %v1688
      %v1727 = vunpack.c.l.b16 %v1689
      %v1728 = vunpack.c.h.b16 %v1689
      %v1729 = vunpack.c.l.b16 %v1690
      %v1730 = vunpack.c.h.b16 %v1690
      %v1731 = vunpack.c.l.b16 %v1691
      %v1732 = vunpack.c.h.b16 %v1691
      %v1733 = vunpack.c.l.b16 %v1692
      %v1734 = vunpack.c.h.b16 %v1692
      %v1735 = vunpack.c.l.b16 %v1693
      %v1736 = vunpack.c.h.b16 %v1693
      %v1737 = vunpack.c.l.b16 %v1694
      %v1738 = vunpack.c.h.b16 %v1694
      %v1739 = vunpack.c.l.b16 %v1695
      %v1740 = vunpack.c.h.b16 %v1695
      %v1741 = vunpack.c.l.b16 %v1696
      %v1742 = vunpack.c.h.b16 %v1696
      %v1743 = vunpack.c.l.b16 %v1697
      %v1744 = vunpack.c.h.b16 %v1697
      %v1745 = vunpack.c.l.b16 %v1698
      %v1746 = vunpack.c.h.b16 %v1698
      %v1747 = vpack.c.b16 %v1717, %v1715
      %v1748 = vpack.c.b16 %v1718, %v1716
      %v1749 = vpack.c.b16 %v1721, %v1719
      %v1750 = vpack.c.b16 %v1722, %v1720
      %v1751 = vpack.c.b16 %v1725, %v1723
      %v1752 = vpack.c.b16 %v1726, %v1724
      %v1753 = vpack.c.b16 %v1729, %v1727
      %v1754 = vpack.c.b16 %v1730, %v1728
      %v1755 = vpack.c.b16 %v1733, %v1731
      %v1756 = vpack.c.b16 %v1734, %v1732
      %v1757 = vpack.c.b16 %v1737, %v1735
      %v1758 = vpack.c.b16 %v1738, %v1736
      %v1759 = vpack.c.b16 %v1741, %v1739
      %v1760 = vpack.c.b16 %v1742, %v1740
      %v1761 = vpack.c.b16 %v1745, %v1743
      %v1762 = vpack.c.b16 %v1746, %v1744
      %1779 = vmatprep.subr.bf16.mxu0 %v1762
      %1780 = vmatpush1.bf16.msra.mxu0 %v1761
      %1781 = vmatprep.subr.bf16.mxu0 %v1760
      %1782 = vmatpush1.bf16.msra.mxu0 %v1759
      %1783 = vmatprep.subr.bf16.mxu0 %v1758
      %1784 = vmatpush1.bf16.msra.mxu0 %v1757
      %1785 = vmatprep.subr.bf16.mxu0 %v1756
      %1786 = vmatpush1.bf16.msra.mxu0 %v1755
      %1787 = vmatprep.subr.bf16.mxu0 %v1754
      %1788 = vmatpush1.bf16.msra.mxu0 %v1753
      %1789 = vmatprep.subr.bf16.mxu0 %v1752
      %1790 = vmatpush1.bf16.msra.mxu0 %v1751
      %1791 = vmatprep.subr.bf16.mxu0 %v1750
      %1792 = vmatpush1.bf16.msra.mxu0 %v1749
      %1793 = vmatprep.subr.bf16.mxu0 %v1748
      %1794 = vmatpush1.bf16.msra.mxu0 %v1747
      %1795 = vmatprep.subr.bf16.mxu0 0
      %1796 = vmatpush2.bf16.msra.mxu0 0
      %1797 = vmatprep.subr.bf16.mxu0 0
      %1798 = vmatpush2.bf16.msra.mxu0 0
      %1799 = vmatprep.subr.bf16.mxu0 0
      %1800 = vmatpush2.bf16.msra.mxu0 0
      %1801 = vmatprep.subr.bf16.mxu0 0
      %1802 = vmatpush2.bf16.msra.mxu0 0
      %1803 = vmatprep.subr.bf16.mxu0 0
      %1804 = vmatpush2.bf16.msra.mxu0 0
      %1805 = vmatprep.subr.bf16.mxu0 0
      %1806 = vmatpush2.bf16.msra.mxu0 0
      %1807 = vmatprep.subr.bf16.mxu0 0
      %1808 = vmatpush2.bf16.msra.mxu0 0
      %1809 = vmatprep.subr.bf16.mxu0 0
      %1810 = vmatpush2.bf16.msra.mxu0 0
      %1811 = vmatprep.mubr.bf16.mxu0 0
      %1812 = vmatmul.mubr.bf16.gmra.mxu0 %v1674
      %v1813 = vpop.f32.mrf.mxu0
      %v1814 = vadd.f32 0.0, %v1813
      %v1815 = vpop.f32.mrf.mxu0
      %v1816 = vadd.f32 0.0, %v1815
      %v1817 = vpop.f32.mrf.mxu0
      %v1818 = vadd.f32 0.0, %v1817
      %v1819 = vpop.f32.mrf.mxu0
      %v1820 = vadd.f32 0.0, %v1819
      %1821 = vmatprep.mubr.bf16.mxu0 0
      %1822 = vmatmul.mubr.bf16.gmra.mxu0 %v1675
      %v1823 = vpop.f32.mrf.mxu0
      %v1824 = vadd.f32 0.0, %v1823
      %v1825 = vpop.f32.mrf.mxu0
      %v1826 = vadd.f32 0.0, %v1825
      %v1827 = vpop.f32.mrf.mxu0
      %v1828 = vadd.f32 0.0, %v1827
      %v1829 = vpop.f32.mrf.mxu0
      %v1830 = vadd.f32 0.0, %v1829
      %1831 = vmatprep.mubr.bf16.mxu0 0
      %1832 = vmatmul.mubr.bf16.gmra.mxu0 %v1676
      %v1833 = vpop.f32.mrf.mxu0
      %v1834 = vadd.f32 0.0, %v1833
      %v1835 = vpop.f32.mrf.mxu0
      %v1836 = vadd.f32 0.0, %v1835
      %v1837 = vpop.f32.mrf.mxu0
      %v1838 = vadd.f32 0.0, %v1837
      %v1839 = vpop.f32.mrf.mxu0
      %v1840 = vadd.f32 0.0, %v1839
      %1841 = vmatprep.mubr.bf16.mxu0 0
      %1842 = vmatmul.mubr.bf16.gmra.mxu0 %v1677
      %v1843 = vpop.f32.mrf.mxu0
      %v1844 = vadd.f32 0.0, %v1843
      %v1845 = vpop.f32.mrf.mxu0
      %v1846 = vadd.f32 0.0, %v1845
      %v1847 = vpop.f32.mrf.mxu0
      %v1848 = vadd.f32 0.0, %v1847
      %v1849 = vpop.f32.mrf.mxu0
      %v1850 = vadd.f32 0.0, %v1849
      %1851 = vmatprep.mubr.bf16.mxu0 0
      %1852 = vmatmul.mubr.bf16.gmra.mxu0 %v1678
      %v1853 = vpop.f32.mrf.mxu0
      %v1854 = vadd.f32 0.0, %v1853
      %v1855 = vpop.f32.mrf.mxu0
      %v1856 = vadd.f32 0.0, %v1855
      %v1857 = vpop.f32.mrf.mxu0
      %v1858 = vadd.f32 0.0, %v1857
      %v1859 = vpop.f32.mrf.mxu0
      %v1860 = vadd.f32 0.0, %v1859
      %1861 = vmatprep.mubr.bf16.mxu0 0
      %1862 = vmatmul.mubr.bf16.gmra.mxu0 %v1679
      %v1863 = vpop.f32.mrf.mxu0
      %v1864 = vadd.f32 0.0, %v1863
      %v1865 = vpop.f32.mrf.mxu0
      %v1866 = vadd.f32 0.0, %v1865
      %v1867 = vpop.f32.mrf.mxu0
      %v1868 = vadd.f32 0.0, %v1867
      %v1869 = vpop.f32.mrf.mxu0
      %v1870 = vadd.f32 0.0, %v1869
      %1871 = vmatprep.mubr.bf16.mxu0 0
      %1872 = vmatmul.mubr.bf16.gmra.mxu0 %v1680
      %v1873 = vpop.f32.mrf.mxu0
      %v1874 = vadd.f32 0.0, %v1873
      %v1875 = vpop.f32.mrf.mxu0
      %v1876 = vadd.f32 0.0, %v1875
      %v1877 = vpop.f32.mrf.mxu0
      %v1878 = vadd.f32 0.0, %v1877
      %v1879 = vpop.f32.mrf.mxu0
      %v1880 = vadd.f32 0.0, %v1879
      %1881 = vmatprep.mubr.bf16.mxu0 0
      %1882 = vmatmul.mubr.bf16.gmra.mxu0 %v1681
      %v1883 = vpop.f32.mrf.mxu0
      %v1884 = vadd.f32 0.0, %v1883
      %v1885 = vpop.f32.mrf.mxu0
      %v1886 = vadd.f32 0.0, %v1885
      %v1887 = vpop.f32.mrf.mxu0
      %v1888 = vadd.f32 0.0, %v1887
      %v1889 = vpop.f32.mrf.mxu0
      %v1890 = vadd.f32 0.0, %v1889
      %1891 = vdwg.mxu0
      %v1892 = vadd.f32 %v1626, %v1814
      %v1893 = vadd.f32 %v1627, %v1816
      %v1894 = vadd.f32 %v1628, %v1818
      %v1895 = vadd.f32 %v1629, %v1820
      %v1896 = vadd.f32 %v1630, %v1824
      %v1897 = vadd.f32 %v1631, %v1826
      %v1898 = vadd.f32 %v1632, %v1828
      %v1899 = vadd.f32 %v1633, %v1830
      %v1900 = vadd.f32 %v1634, %v1834
      %v1901 = vadd.f32 %v1635, %v1836
      %v1902 = vadd.f32 %v1636, %v1838
      %v1903 = vadd.f32 %v1637, %v1840
      %v1904 = vadd.f32 %v1638, %v1844
      %v1905 = vadd.f32 %v1639, %v1846
      %v1906 = vadd.f32 %v1640, %v1848
      %v1907 = vadd.f32 %v1641, %v1850
      %v1908 = vadd.f32 %v1642, %v1854
      %v1909 = vadd.f32 %v1643, %v1856
      %v1910 = vadd.f32 %v1644, %v1858
      %v1911 = vadd.f32 %v1645, %v1860
      %v1912 = vadd.f32 %v1646, %v1864
      %v1913 = vadd.f32 %v1647, %v1866
      %v1914 = vadd.f32 %v1648, %v1868
      %v1915 = vadd.f32 %v1649, %v1870
      %v1916 = vadd.f32 %v1650, %v1874
      %v1917 = vadd.f32 %v1651, %v1876
      %v1918 = vadd.f32 %v1652, %v1878
      %v1919 = vadd.f32 %v1653, %v1880
      %v1920 = vadd.f32 %v1654, %v1884
      %v1921 = vadd.f32 %v1655, %v1886
      %v1922 = vadd.f32 %v1656, %v1888
      %v1923 = vadd.f32 %v1657, %v1890
      %s1924 = sadd.s32 %s516, 48
      %s1925 = scalar_lea.vmem [#allocation4], %s1924
      %v1926 = vld [vmem:[%s1925] sm:$0xff]
      %v1927 = vld [vmem:[%s1925 + $0x8] sm:$0xff]
      %v1928 = vld [vmem:[%s1925 + $0x10] sm:$0xff]
      %v1929 = vld [vmem:[%s1925 + $0x18] sm:$0xff]
      %v1930 = vld [vmem:[%s1925 + $0x20] sm:$0xff]
      %v1931 = vld [vmem:[%s1925 + $0x28] sm:$0xff]
      %v1932 = vld [vmem:[%s1925 + $0x30] sm:$0xff]
      %v1933 = vld [vmem:[%s1925 + $0x38] sm:$0xff]
      %v1934 = vld [vmem:[%s1925 + $0xa0] sm:$0xff]
      %v1935 = vld [vmem:[%s1925 + $0xa8] sm:$0xff]
      %v1936 = vld [vmem:[%s1925 + $0xb0] sm:$0xff]
      %v1937 = vld [vmem:[%s1925 + $0xb8] sm:$0xff]
      %v1938 = vld [vmem:[%s1925 + $0xc0] sm:$0xff]
      %v1939 = vld [vmem:[%s1925 + $0xc8] sm:$0xff]
      %v1940 = vld [vmem:[%s1925 + $0xd0] sm:$0xff]
      %v1941 = vld [vmem:[%s1925 + $0xd8] sm:$0xff]
      %v1942 = vpack.c.bf16 %v1927, %v1926
      %v1943 = vpack.c.bf16 %v1929, %v1928
      %v1944 = vpack.c.bf16 %v1931, %v1930
      %v1945 = vpack.c.bf16 %v1933, %v1932
      %v1946 = vpack.c.bf16 %v1935, %v1934
      %v1947 = vpack.c.bf16 %v1937, %v1936
      %v1948 = vpack.c.bf16 %v1939, %v1938
      %v1949 = vpack.c.bf16 %v1941, %v1940
      %s1950 = scalar_lea.vmem %s495, 512
      %v1951 = vld [vmem:[%s1950] sm:$0xff]
      %v1952 = vld [vmem:[%s1950 + $0x8] sm:$0xff]
      %v1953 = vld [vmem:[%s1950 + $0x10] sm:$0xff]
      %v1954 = vld [vmem:[%s1950 + $0x18] sm:$0xff]
      %v1955 = vld [vmem:[%s1950 + $0x20] sm:$0xff]
      %v1956 = vld [vmem:[%s1950 + $0x28] sm:$0xff]
      %v1957 = vld [vmem:[%s1950 + $0x30] sm:$0xff]
      %v1958 = vld [vmem:[%s1950 + $0x38] sm:$0xff]
      %v1959 = vld [vmem:[%s1950 + $0x40] sm:$0xff]
      %v1960 = vld [vmem:[%s1950 + $0x48] sm:$0xff]
      %v1961 = vld [vmem:[%s1950 + $0x50] sm:$0xff]
      %v1962 = vld [vmem:[%s1950 + $0x58] sm:$0xff]
      %v1963 = vld [vmem:[%s1950 + $0x60] sm:$0xff]
      %v1964 = vld [vmem:[%s1950 + $0x68] sm:$0xff]
      %v1965 = vld [vmem:[%s1950 + $0x70] sm:$0xff]
      %v1966 = vld [vmem:[%s1950 + $0x78] sm:$0xff]
      %v1983 = vunpack.c.l.b16 %v1951
      %v1984 = vunpack.c.h.b16 %v1951
      %v1985 = vunpack.c.l.b16 %v1952
      %v1986 = vunpack.c.h.b16 %v1952
      %v1987 = vunpack.c.l.b16 %v1953
      %v1988 = vunpack.c.h.b16 %v1953
      %v1989 = vunpack.c.l.b16 %v1954
      %v1990 = vunpack.c.h.b16 %v1954
      %v1991 = vunpack.c.l.b16 %v1955
      %v1992 = vunpack.c.h.b16 %v1955
      %v1993 = vunpack.c.l.b16 %v1956
      %v1994 = vunpack.c.h.b16 %v1956
      %v1995 = vunpack.c.l.b16 %v1957
      %v1996 = vunpack.c.h.b16 %v1957
      %v1997 = vunpack.c.l.b16 %v1958
      %v1998 = vunpack.c.h.b16 %v1958
      %v1999 = vunpack.c.l.b16 %v1959
      %v2000 = vunpack.c.h.b16 %v1959
      %v2001 = vunpack.c.l.b16 %v1960
      %v2002 = vunpack.c.h.b16 %v1960
      %v2003 = vunpack.c.l.b16 %v1961
      %v2004 = vunpack.c.h.b16 %v1961
      %v2005 = vunpack.c.l.b16 %v1962
      %v2006 = vunpack.c.h.b16 %v1962
      %v2007 = vunpack.c.l.b16 %v1963
      %v2008 = vunpack.c.h.b16 %v1963
      %v2009 = vunpack.c.l.b16 %v1964
      %v2010 = vunpack.c.h.b16 %v1964
      %v2011 = vunpack.c.l.b16 %v1965
      %v2012 = vunpack.c.h.b16 %v1965
      %v2013 = vunpack.c.l.b16 %v1966
      %v2014 = vunpack.c.h.b16 %v1966
      %v2015 = vpack.c.b16 %v1985, %v1983
      %v2016 = vpack.c.b16 %v1986, %v1984
      %v2017 = vpack.c.b16 %v1989, %v1987
      %v2018 = vpack.c.b16 %v1990, %v1988
      %v2019 = vpack.c.b16 %v1993, %v1991
      %v2020 = vpack.c.b16 %v1994, %v1992
      %v2021 = vpack.c.b16 %v1997, %v1995
      %v2022 = vpack.c.b16 %v1998, %v1996
      %v2023 = vpack.c.b16 %v2001, %v1999
      %v2024 = vpack.c.b16 %v2002, %v2000
      %v2025 = vpack.c.b16 %v2005, %v2003
      %v2026 = vpack.c.b16 %v2006, %v2004
      %v2027 = vpack.c.b16 %v2009, %v2007
      %v2028 = vpack.c.b16 %v2010, %v2008
      %v2029 = vpack.c.b16 %v2013, %v2011
      %v2030 = vpack.c.b16 %v2014, %v2012
      %2047 = vmatprep.subr.bf16.mxu0 %v2030
      %2048 = vmatpush1.bf16.msra.mxu0 %v2029
      %2049 = vmatprep.subr.bf16.mxu0 %v2028
      %2050 = vmatpush1.bf16.msra.mxu0 %v2027
      %2051 = vmatprep.subr.bf16.mxu0 %v2026
      %2052 = vmatpush1.bf16.msra.mxu0 %v2025
      %2053 = vmatprep.subr.bf16.mxu0 %v2024
      %2054 = vmatpush1.bf16.msra.mxu0 %v2023
      %2055 = vmatprep.subr.bf16.mxu0 %v2022
      %2056 = vmatpush1.bf16.msra.mxu0 %v2021
      %2057 = vmatprep.subr.bf16.mxu0 %v2020
      %2058 = vmatpush1.bf16.msra.mxu0 %v2019
      %2059 = vmatprep.subr.bf16.mxu0 %v2018
      %2060 = vmatpush1.bf16.msra.mxu0 %v2017
      %2061 = vmatprep.subr.bf16.mxu0 %v2016
      %2062 = vmatpush1.bf16.msra.mxu0 %v2015
      %2063 = vmatprep.subr.bf16.mxu0 0
      %2064 = vmatpush2.bf16.msra.mxu0 0
      %2065 = vmatprep.subr.bf16.mxu0 0
      %2066 = vmatpush2.bf16.msra.mxu0 0
      %2067 = vmatprep.subr.bf16.mxu0 0
      %2068 = vmatpush2.bf16.msra.mxu0 0
      %2069 = vmatprep.subr.bf16.mxu0 0
      %2070 = vmatpush2.bf16.msra.mxu0 0
      %2071 = vmatprep.subr.bf16.mxu0 0
      %2072 = vmatpush2.bf16.msra.mxu0 0
      %2073 = vmatprep.subr.bf16.mxu0 0
      %2074 = vmatpush2.bf16.msra.mxu0 0
      %2075 = vmatprep.subr.bf16.mxu0 0
      %2076 = vmatpush2.bf16.msra.mxu0 0
      %2077 = vmatprep.subr.bf16.mxu0 0
      %2078 = vmatpush2.bf16.msra.mxu0 0
      %2079 = vmatprep.mubr.bf16.mxu0 0
      %2080 = vmatmul.mubr.bf16.gmra.mxu0 %v1942
      %v2081 = vpop.f32.mrf.mxu0
      %v2082 = vadd.f32 0.0, %v2081
      %v2083 = vpop.f32.mrf.mxu0
      %v2084 = vadd.f32 0.0, %v2083
      %v2085 = vpop.f32.mrf.mxu0
      %v2086 = vadd.f32 0.0, %v2085
      %v2087 = vpop.f32.mrf.mxu0
      %v2088 = vadd.f32 0.0, %v2087
      %2089 = vmatprep.mubr.bf16.mxu0 0
      %2090 = vmatmul.mubr.bf16.gmra.mxu0 %v1943
      %v2091 = vpop.f32.mrf.mxu0
      %v2092 = vadd.f32 0.0, %v2091
      %v2093 = vpop.f32.mrf.mxu0
      %v2094 = vadd.f32 0.0, %v2093
      %v2095 = vpop.f32.mrf.mxu0
      %v2096 = vadd.f32 0.0, %v2095
      %v2097 = vpop.f32.mrf.mxu0
      %v2098 = vadd.f32 0.0, %v2097
      %2099 = vmatprep.mubr.bf16.mxu0 0
      %2100 = vmatmul.mubr.bf16.gmra.mxu0 %v1944
      %v2101 = vpop.f32.mrf.mxu0
      %v2102 = vadd.f32 0.0, %v2101
      %v2103 = vpop.f32.mrf.mxu0
      %v2104 = vadd.f32 0.0, %v2103
      %v2105 = vpop.f32.mrf.mxu0
      %v2106 = vadd.f32 0.0, %v2105
      %v2107 = vpop.f32.mrf.mxu0
      %v2108 = vadd.f32 0.0, %v2107
      %2109 = vmatprep.mubr.bf16.mxu0 0
      %2110 = vmatmul.mubr.bf16.gmra.mxu0 %v1945
      %v2111 = vpop.f32.mrf.mxu0
      %v2112 = vadd.f32 0.0, %v2111
      %v2113 = vpop.f32.mrf.mxu0
      %v2114 = vadd.f32 0.0, %v2113
      %v2115 = vpop.f32.mrf.mxu0
      %v2116 = vadd.f32 0.0, %v2115
      %v2117 = vpop.f32.mrf.mxu0
      %v2118 = vadd.f32 0.0, %v2117
      %2119 = vmatprep.mubr.bf16.mxu0 0
      %2120 = vmatmul.mubr.bf16.gmra.mxu0 %v1946
      %v2121 = vpop.f32.mrf.mxu0
      %v2122 = vadd.f32 0.0, %v2121
      %v2123 = vpop.f32.mrf.mxu0
      %v2124 = vadd.f32 0.0, %v2123
      %v2125 = vpop.f32.mrf.mxu0
      %v2126 = vadd.f32 0.0, %v2125
      %v2127 = vpop.f32.mrf.mxu0
      %v2128 = vadd.f32 0.0, %v2127
      %2129 = vmatprep.mubr.bf16.mxu0 0
      %2130 = vmatmul.mubr.bf16.gmra.mxu0 %v1947
      %v2131 = vpop.f32.mrf.mxu0
      %v2132 = vadd.f32 0.0, %v2131
      %v2133 = vpop.f32.mrf.mxu0
      %v2134 = vadd.f32 0.0, %v2133
      %v2135 = vpop.f32.mrf.mxu0
      %v2136 = vadd.f32 0.0, %v2135
      %v2137 = vpop.f32.mrf.mxu0
      %v2138 = vadd.f32 0.0, %v2137
      %2139 = vmatprep.mubr.bf16.mxu0 0
      %2140 = vmatmul.mubr.bf16.gmra.mxu0 %v1948
      %v2141 = vpop.f32.mrf.mxu0
      %v2142 = vadd.f32 0.0, %v2141
      %v2143 = vpop.f32.mrf.mxu0
      %v2144 = vadd.f32 0.0, %v2143
      %v2145 = vpop.f32.mrf.mxu0
      %v2146 = vadd.f32 0.0, %v2145
      %v2147 = vpop.f32.mrf.mxu0
      %v2148 = vadd.f32 0.0, %v2147
      %2149 = vmatprep.mubr.bf16.mxu0 0
      %2150 = vmatmul.mubr.bf16.gmra.mxu0 %v1949
      %v2151 = vpop.f32.mrf.mxu0
      %v2152 = vadd.f32 0.0, %v2151
      %v2153 = vpop.f32.mrf.mxu0
      %v2154 = vadd.f32 0.0, %v2153
      %v2155 = vpop.f32.mrf.mxu0
      %v2156 = vadd.f32 0.0, %v2155
      %v2157 = vpop.f32.mrf.mxu0
      %v2158 = vadd.f32 0.0, %v2157
      %2159 = vdwg.mxu0
      %v2160 = vadd.f32 %v1892, %v2082
      %v2161 = vadd.f32 %v1893, %v2084
      %v2162 = vadd.f32 %v1894, %v2086
      %v2163 = vadd.f32 %v1895, %v2088
      %v2164 = vadd.f32 %v1896, %v2092
      %v2165 = vadd.f32 %v1897, %v2094
      %v2166 = vadd.f32 %v1898, %v2096
      %v2167 = vadd.f32 %v1899, %v2098
      %v2168 = vadd.f32 %v1900, %v2102
      %v2169 = vadd.f32 %v1901, %v2104
      %v2170 = vadd.f32 %v1902, %v2106
      %v2171 = vadd.f32 %v1903, %v2108
      %v2172 = vadd.f32 %v1904, %v2112
      %v2173 = vadd.f32 %v1905, %v2114
      %v2174 = vadd.f32 %v1906, %v2116
      %v2175 = vadd.f32 %v1907, %v2118
      %v2176 = vadd.f32 %v1908, %v2122
      %v2177 = vadd.f32 %v1909, %v2124
      %v2178 = vadd.f32 %v1910, %v2126
      %v2179 = vadd.f32 %v1911, %v2128
      %v2180 = vadd.f32 %v1912, %v2132
      %v2181 = vadd.f32 %v1913, %v2134
      %v2182 = vadd.f32 %v1914, %v2136
      %v2183 = vadd.f32 %v1915, %v2138
      %v2184 = vadd.f32 %v1916, %v2142
      %v2185 = vadd.f32 %v1917, %v2144
      %v2186 = vadd.f32 %v1918, %v2146
      %v2187 = vadd.f32 %v1919, %v2148
      %v2188 = vadd.f32 %v1920, %v2152
      %v2189 = vadd.f32 %v1921, %v2154
      %v2190 = vadd.f32 %v1922, %v2156
      %v2191 = vadd.f32 %v1923, %v2158
      %s2192 = smul.u32 %s516, 2
      %s2193 = sadd.s32 %s2192, 48
      %s2194 = scalar_lea.vmem [#allocation4], %s2193
      %v2195 = vld [vmem:[%s2194] sm:$0xff]
      %v2196 = vld [vmem:[%s2194 + $0x8] sm:$0xff]
      %v2197 = vld [vmem:[%s2194 + $0x10] sm:$0xff]
      %v2198 = vld [vmem:[%s2194 + $0x18] sm:$0xff]
      %v2199 = vld [vmem:[%s2194 + $0x20] sm:$0xff]
      %v2200 = vld [vmem:[%s2194 + $0x28] sm:$0xff]
      %v2201 = vld [vmem:[%s2194 + $0x30] sm:$0xff]
      %v2202 = vld [vmem:[%s2194 + $0x38] sm:$0xff]
      %v2203 = vld [vmem:[%s2194 + $0xa0] sm:$0xff]
      %v2204 = vld [vmem:[%s2194 + $0xa8] sm:$0xff]
      %v2205 = vld [vmem:[%s2194 + $0xb0] sm:$0xff]
      %v2206 = vld [vmem:[%s2194 + $0xb8] sm:$0xff]
      %v2207 = vld [vmem:[%s2194 + $0xc0] sm:$0xff]
      %v2208 = vld [vmem:[%s2194 + $0xc8] sm:$0xff]
      %v2209 = vld [vmem:[%s2194 + $0xd0] sm:$0xff]
      %v2210 = vld [vmem:[%s2194 + $0xd8] sm:$0xff]
      %v2211 = vpack.c.bf16 %v2196, %v2195
      %v2212 = vpack.c.bf16 %v2198, %v2197
      %v2213 = vpack.c.bf16 %v2200, %v2199
      %v2214 = vpack.c.bf16 %v2202, %v2201
      %v2215 = vpack.c.bf16 %v2204, %v2203
      %v2216 = vpack.c.bf16 %v2206, %v2205
      %v2217 = vpack.c.bf16 %v2208, %v2207
      %v2218 = vpack.c.bf16 %v2210, %v2209
      %s2219 = scalar_lea.vmem %s495, 640
      %v2220 = vld [vmem:[%s2219] sm:$0xff]
      %v2221 = vld [vmem:[%s2219 + $0x8] sm:$0xff]
      %v2222 = vld [vmem:[%s2219 + $0x10] sm:$0xff]
      %v2223 = vld [vmem:[%s2219 + $0x18] sm:$0xff]
      %v2224 = vld [vmem:[%s2219 + $0x20] sm:$0xff]
      %v2225 = vld [vmem:[%s2219 + $0x28] sm:$0xff]
      %v2226 = vld [vmem:[%s2219 + $0x30] sm:$0xff]
      %v2227 = vld [vmem:[%s2219 + $0x38] sm:$0xff]
      %v2228 = vld [vmem:[%s2219 + $0x40] sm:$0xff]
      %v2229 = vld [vmem:[%s2219 + $0x48] sm:$0xff]
      %v2230 = vld [vmem:[%s2219 + $0x50] sm:$0xff]
      %v2231 = vld [vmem:[%s2219 + $0x58] sm:$0xff]
      %v2232 = vld [vmem:[%s2219 + $0x60] sm:$0xff]
      %v2233 = vld [vmem:[%s2219 + $0x68] sm:$0xff]
      %v2234 = vld [vmem:[%s2219 + $0x70] sm:$0xff]
      %v2235 = vld [vmem:[%s2219 + $0x78] sm:$0xff]
      %v2252 = vunpack.c.l.b16 %v2220
      %v2253 = vunpack.c.h.b16 %v2220
      %v2254 = vunpack.c.l.b16 %v2221
      %v2255 = vunpack.c.h.b16 %v2221
      %v2256 = vunpack.c.l.b16 %v2222
      %v2257 = vunpack.c.h.b16 %v2222
      %v2258 = vunpack.c.l.b16 %v2223
      %v2259 = vunpack.c.h.b16 %v2223
      %v2260 = vunpack.c.l.b16 %v2224
      %v2261 = vunpack.c.h.b16 %v2224
      %v2262 = vunpack.c.l.b16 %v2225
      %v2263 = vunpack.c.h.b16 %v2225
      %v2264 = vunpack.c.l.b16 %v2226
      %v2265 = vunpack.c.h.b16 %v2226
      %v2266 = vunpack.c.l.b16 %v2227
      %v2267 = vunpack.c.h.b16 %v2227
      %v2268 = vunpack.c.l.b16 %v2228
      %v2269 = vunpack.c.h.b16 %v2228
      %v2270 = vunpack.c.l.b16 %v2229
      %v2271 = vunpack.c.h.b16 %v2229
      %v2272 = vunpack.c.l.b16 %v2230
      %v2273 = vunpack.c.h.b16 %v2230
      %v2274 = vunpack.c.l.b16 %v2231
      %v2275 = vunpack.c.h.b16 %v2231
      %v2276 = vunpack.c.l.b16 %v2232
      %v2277 = vunpack.c.h.b16 %v2232
      %v2278 = vunpack.c.l.b16 %v2233
      %v2279 = vunpack.c.h.b16 %v2233
      %v2280 = vunpack.c.l.b16 %v2234
      %v2281 = vunpack.c.h.b16 %v2234
      %v2282 = vunpack.c.l.b16 %v2235
      %v2283 = vunpack.c.h.b16 %v2235
      %v2284 = vpack.c.b16 %v2254, %v2252
      %v2285 = vpack.c.b16 %v2255, %v2253
      %v2286 = vpack.c.b16 %v2258, %v2256
      %v2287 = vpack.c.b16 %v2259, %v2257
      %v2288 = vpack.c.b16 %v2262, %v2260
      %v2289 = vpack.c.b16 %v2263, %v2261
      %v2290 = vpack.c.b16 %v2266, %v2264
      %v2291 = vpack.c.b16 %v2267, %v2265
      %v2292 = vpack.c.b16 %v2270, %v2268
      %v2293 = vpack.c.b16 %v2271, %v2269
      %v2294 = vpack.c.b16 %v2274, %v2272
      %v2295 = vpack.c.b16 %v2275, %v2273
      %v2296 = vpack.c.b16 %v2278, %v2276
      %v2297 = vpack.c.b16 %v2279, %v2277
      %v2298 = vpack.c.b16 %v2282, %v2280
      %v2299 = vpack.c.b16 %v2283, %v2281
      %2316 = vmatprep.subr.bf16.mxu0 %v2299
      %2317 = vmatpush1.bf16.msra.mxu0 %v2298
      %2318 = vmatprep.subr.bf16.mxu0 %v2297
      %2319 = vmatpush1.bf16.msra.mxu0 %v2296
      %2320 = vmatprep.subr.bf16.mxu0 %v2295
      %2321 = vmatpush1.bf16.msra.mxu0 %v2294
      %2322 = vmatprep.subr.bf16.mxu0 %v2293
      %2323 = vmatpush1.bf16.msra.mxu0 %v2292
      %2324 = vmatprep.subr.bf16.mxu0 %v2291
      %2325 = vmatpush1.bf16.msra.mxu0 %v2290
      %2326 = vmatprep.subr.bf16.mxu0 %v2289
      %2327 = vmatpush1.bf16.msra.mxu0 %v2288
      %2328 = vmatprep.subr.bf16.mxu0 %v2287
      %2329 = vmatpush1.bf16.msra.mxu0 %v2286
      %2330 = vmatprep.subr.bf16.mxu0 %v2285
      %2331 = vmatpush1.bf16.msra.mxu0 %v2284
      %2332 = vmatprep.subr.bf16.mxu0 0
      %2333 = vmatpush2.bf16.msra.mxu0 0
      %2334 = vmatprep.subr.bf16.mxu0 0
      %2335 = vmatpush2.bf16.msra.mxu0 0
      %2336 = vmatprep.subr.bf16.mxu0 0
      %2337 = vmatpush2.bf16.msra.mxu0 0
      %2338 = vmatprep.subr.bf16.mxu0 0
      %2339 = vmatpush2.bf16.msra.mxu0 0
      %2340 = vmatprep.subr.bf16.mxu0 0
      %2341 = vmatpush2.bf16.msra.mxu0 0
      %2342 = vmatprep.subr.bf16.mxu0 0
      %2343 = vmatpush2.bf16.msra.mxu0 0
      %2344 = vmatprep.subr.bf16.mxu0 0
      %2345 = vmatpush2.bf16.msra.mxu0 0
      %2346 = vmatprep.subr.bf16.mxu0 0
      %2347 = vmatpush2.bf16.msra.mxu0 0
      %2348 = vmatprep.mubr.bf16.mxu0 0
      %2349 = vmatmul.mubr.bf16.gmra.mxu0 %v2211
      %v2350 = vpop.f32.mrf.mxu0
      %v2351 = vadd.f32 0.0, %v2350
      %v2352 = vpop.f32.mrf.mxu0
      %v2353 = vadd.f32 0.0, %v2352
      %v2354 = vpop.f32.mrf.mxu0
      %v2355 = vadd.f32 0.0, %v2354
      %v2356 = vpop.f32.mrf.mxu0
      %v2357 = vadd.f32 0.0, %v2356
      %2358 = vmatprep.mubr.bf16.mxu0 0
      %2359 = vmatmul.mubr.bf16.gmra.mxu0 %v2212
      %v2360 = vpop.f32.mrf.mxu0
      %v2361 = vadd.f32 0.0, %v2360
      %v2362 = vpop.f32.mrf.mxu0
      %v2363 = vadd.f32 0.0, %v2362
      %v2364 = vpop.f32.mrf.mxu0
      %v2365 = vadd.f32 0.0, %v2364
      %v2366 = vpop.f32.mrf.mxu0
      %v2367 = vadd.f32 0.0, %v2366
      %2368 = vmatprep.mubr.bf16.mxu0 0
      %2369 = vmatmul.mubr.bf16.gmra.mxu0 %v2213
      %v2370 = vpop.f32.mrf.mxu0
      %v2371 = vadd.f32 0.0, %v2370
      %v2372 = vpop.f32.mrf.mxu0
      %v2373 = vadd.f32 0.0, %v2372
      %v2374 = vpop.f32.mrf.mxu0
      %v2375 = vadd.f32 0.0, %v2374
      %v2376 = vpop.f32.mrf.mxu0
      %v2377 = vadd.f32 0.0, %v2376
      %2378 = vmatprep.mubr.bf16.mxu0 0
      %2379 = vmatmul.mubr.bf16.gmra.mxu0 %v2214
      %v2380 = vpop.f32.mrf.mxu0
      %v2381 = vadd.f32 0.0, %v2380
      %v2382 = vpop.f32.mrf.mxu0
      %v2383 = vadd.f32 0.0, %v2382
      %v2384 = vpop.f32.mrf.mxu0
      %v2385 = vadd.f32 0.0, %v2384
      %v2386 = vpop.f32.mrf.mxu0
      %v2387 = vadd.f32 0.0, %v2386
      %2388 = vmatprep.mubr.bf16.mxu0 0
      %2389 = vmatmul.mubr.bf16.gmra.mxu0 %v2215
      %v2390 = vpop.f32.mrf.mxu0
      %v2391 = vadd.f32 0.0, %v2390
      %v2392 = vpop.f32.mrf.mxu0
      %v2393 = vadd.f32 0.0, %v2392
      %v2394 = vpop.f32.mrf.mxu0
      %v2395 = vadd.f32 0.0, %v2394
      %v2396 = vpop.f32.mrf.mxu0
      %v2397 = vadd.f32 0.0, %v2396
      %2398 = vmatprep.mubr.bf16.mxu0 0
      %2399 = vmatmul.mubr.bf16.gmra.mxu0 %v2216
      %v2400 = vpop.f32.mrf.mxu0
      %v2401 = vadd.f32 0.0, %v2400
      %v2402 = vpop.f32.mrf.mxu0
      %v2403 = vadd.f32 0.0, %v2402
      %v2404 = vpop.f32.mrf.mxu0
      %v2405 = vadd.f32 0.0, %v2404
      %v2406 = vpop.f32.mrf.mxu0
      %v2407 = vadd.f32 0.0, %v2406
      %2408 = vmatprep.mubr.bf16.mxu0 0
      %2409 = vmatmul.mubr.bf16.gmra.mxu0 %v2217
      %v2410 = vpop.f32.mrf.mxu0
      %v2411 = vadd.f32 0.0, %v2410
      %v2412 = vpop.f32.mrf.mxu0
      %v2413 = vadd.f32 0.0, %v2412
      %v2414 = vpop.f32.mrf.mxu0
      %v2415 = vadd.f32 0.0, %v2414
      %v2416 = vpop.f32.mrf.mxu0
      %v2417 = vadd.f32 0.0, %v2416
      %2418 = vmatprep.mubr.bf16.mxu0 0
      %2419 = vmatmul.mubr.bf16.gmra.mxu0 %v2218
      %v2420 = vpop.f32.mrf.mxu0
      %v2421 = vadd.f32 0.0, %v2420
      %v2422 = vpop.f32.mrf.mxu0
      %v2423 = vadd.f32 0.0, %v2422
      %v2424 = vpop.f32.mrf.mxu0
      %v2425 = vadd.f32 0.0, %v2424
      %v2426 = vpop.f32.mrf.mxu0
      %v2427 = vadd.f32 0.0, %v2426
      %2428 = vdwg.mxu0
      %v2429 = vadd.f32 %v2160, %v2351
      %v2430 = vadd.f32 %v2161, %v2353
      %v2431 = vadd.f32 %v2162, %v2355
      %v2432 = vadd.f32 %v2163, %v2357
      %v2433 = vadd.f32 %v2164, %v2361
      %v2434 = vadd.f32 %v2165, %v2363
      %v2435 = vadd.f32 %v2166, %v2365
      %v2436 = vadd.f32 %v2167, %v2367
      %v2437 = vadd.f32 %v2168, %v2371
      %v2438 = vadd.f32 %v2169, %v2373
      %v2439 = vadd.f32 %v2170, %v2375
      %v2440 = vadd.f32 %v2171, %v2377
      %v2441 = vadd.f32 %v2172, %v2381
      %v2442 = vadd.f32 %v2173, %v2383
      %v2443 = vadd.f32 %v2174, %v2385
      %v2444 = vadd.f32 %v2175, %v2387
      %v2445 = vadd.f32 %v2176, %v2391
      %v2446 = vadd.f32 %v2177, %v2393
      %v2447 = vadd.f32 %v2178, %v2395
      %v2448 = vadd.f32 %v2179, %v2397
      %v2449 = vadd.f32 %v2180, %v2401
      %v2450 = vadd.f32 %v2181, %v2403
      %v2451 = vadd.f32 %v2182, %v2405
      %v2452 = vadd.f32 %v2183, %v2407
      %v2453 = vadd.f32 %v2184, %v2411
      %v2454 = vadd.f32 %v2185, %v2413
      %v2455 = vadd.f32 %v2186, %v2415
      %v2456 = vadd.f32 %v2187, %v2417
      %v2457 = vadd.f32 %v2188, %v2421
      %v2458 = vadd.f32 %v2189, %v2423
      %v2459 = vadd.f32 %v2190, %v2425
      %v2460 = vadd.f32 %v2191, %v2427
      %s2461 = smul.u32 %s516, 3
      %s2462 = sadd.s32 %s2461, 48
      %s2463 = scalar_lea.vmem [#allocation4], %s2462
      %v2464 = vld [vmem:[%s2463] sm:$0xff]
      %v2465 = vld [vmem:[%s2463 + $0x8] sm:$0xff]
      %v2466 = vld [vmem:[%s2463 + $0x10] sm:$0xff]
      %v2467 = vld [vmem:[%s2463 + $0x18] sm:$0xff]
      %v2468 = vld [vmem:[%s2463 + $0x20] sm:$0xff]
      %v2469 = vld [vmem:[%s2463 + $0x28] sm:$0xff]
      %v2470 = vld [vmem:[%s2463 + $0x30] sm:$0xff]
      %v2471 = vld [vmem:[%s2463 + $0x38] sm:$0xff]
      %v2472 = vld [vmem:[%s2463 + $0xa0] sm:$0xff]
      %v2473 = vld [vmem:[%s2463 + $0xa8] sm:$0xff]
      %v2474 = vld [vmem:[%s2463 + $0xb0] sm:$0xff]
      %v2475 = vld [vmem:[%s2463 + $0xb8] sm:$0xff]
      %v2476 = vld [vmem:[%s2463 + $0xc0] sm:$0xff]
      %v2477 = vld [vmem:[%s2463 + $0xc8] sm:$0xff]
      %v2478 = vld [vmem:[%s2463 + $0xd0] sm:$0xff]
      %v2479 = vld [vmem:[%s2463 + $0xd8] sm:$0xff]
      %v2480 = vpack.c.bf16 %v2465, %v2464
      %v2481 = vpack.c.bf16 %v2467, %v2466
      %v2482 = vpack.c.bf16 %v2469, %v2468
      %v2483 = vpack.c.bf16 %v2471, %v2470
      %v2484 = vpack.c.bf16 %v2473, %v2472
      %v2485 = vpack.c.bf16 %v2475, %v2474
      %v2486 = vpack.c.bf16 %v2477, %v2476
      %v2487 = vpack.c.bf16 %v2479, %v2478
      %s2488 = scalar_lea.vmem %s495, 768
      %v2489 = vld [vmem:[%s2488] sm:$0xff]
      %v2490 = vld [vmem:[%s2488 + $0x8] sm:$0xff]
      %v2491 = vld [vmem:[%s2488 + $0x10] sm:$0xff]
      %v2492 = vld [vmem:[%s2488 + $0x18] sm:$0xff]
      %v2493 = vld [vmem:[%s2488 + $0x20] sm:$0xff]
      %v2494 = vld [vmem:[%s2488 + $0x28] sm:$0xff]
      %v2495 = vld [vmem:[%s2488 + $0x30] sm:$0xff]
      %v2496 = vld [vmem:[%s2488 + $0x38] sm:$0xff]
      %v2497 = vld [vmem:[%s2488 + $0x40] sm:$0xff]
      %v2498 = vld [vmem:[%s2488 + $0x48] sm:$0xff]
      %v2499 = vld [vmem:[%s2488 + $0x50] sm:$0xff]
      %v2500 = vld [vmem:[%s2488 + $0x58] sm:$0xff]
      %v2501 = vld [vmem:[%s2488 + $0x60] sm:$0xff]
      %v2502 = vld [vmem:[%s2488 + $0x68] sm:$0xff]
      %v2503 = vld [vmem:[%s2488 + $0x70] sm:$0xff]
      %v2504 = vld [vmem:[%s2488 + $0x78] sm:$0xff]
      %v2521 = vunpack.c.l.b16 %v2489
      %v2522 = vunpack.c.h.b16 %v2489
      %v2523 = vunpack.c.l.b16 %v2490
      %v2524 = vunpack.c.h.b16 %v2490
      %v2525 = vunpack.c.l.b16 %v2491
      %v2526 = vunpack.c.h.b16 %v2491
      %v2527 = vunpack.c.l.b16 %v2492
      %v2528 = vunpack.c.h.b16 %v2492
      %v2529 = vunpack.c.l.b16 %v2493
      %v2530 = vunpack.c.h.b16 %v2493
      %v2531 = vunpack.c.l.b16 %v2494
      %v2532 = vunpack.c.h.b16 %v2494
      %v2533 = vunpack.c.l.b16 %v2495
      %v2534 = vunpack.c.h.b16 %v2495
      %v2535 = vunpack.c.l.b16 %v2496
      %v2536 = vunpack.c.h.b16 %v2496
      %v2537 = vunpack.c.l.b16 %v2497
      %v2538 = vunpack.c.h.b16 %v2497
      %v2539 = vunpack.c.l.b16 %v2498
      %v2540 = vunpack.c.h.b16 %v2498
      %v2541 = vunpack.c.l.b16 %v2499
      %v2542 = vunpack.c.h.b16 %v2499
      %v2543 = vunpack.c.l.b16 %v2500
      %v2544 = vunpack.c.h.b16 %v2500
      %v2545 = vunpack.c.l.b16 %v2501
      %v2546 = vunpack.c.h.b16 %v2501
      %v2547 = vunpack.c.l.b16 %v2502
      %v2548 = vunpack.c.h.b16 %v2502
      %v2549 = vunpack.c.l.b16 %v2503
      %v2550 = vunpack.c.h.b16 %v2503
      %v2551 = vunpack.c.l.b16 %v2504
      %v2552 = vunpack.c.h.b16 %v2504
      %v2553 = vpack.c.b16 %v2523, %v2521
      %v2554 = vpack.c.b16 %v2524, %v2522
      %v2555 = vpack.c.b16 %v2527, %v2525
      %v2556 = vpack.c.b16 %v2528, %v2526
      %v2557 = vpack.c.b16 %v2531, %v2529
      %v2558 = vpack.c.b16 %v2532, %v2530
      %v2559 = vpack.c.b16 %v2535, %v2533
      %v2560 = vpack.c.b16 %v2536, %v2534
      %v2561 = vpack.c.b16 %v2539, %v2537
      %v2562 = vpack.c.b16 %v2540, %v2538
      %v2563 = vpack.c.b16 %v2543, %v2541
      %v2564 = vpack.c.b16 %v2544, %v2542
      %v2565 = vpack.c.b16 %v2547, %v2545
      %v2566 = vpack.c.b16 %v2548, %v2546
      %v2567 = vpack.c.b16 %v2551, %v2549
      %v2568 = vpack.c.b16 %v2552, %v2550
      %2585 = vmatprep.subr.bf16.mxu0 %v2568
      %2586 = vmatpush1.bf16.msra.mxu0 %v2567
      %2587 = vmatprep.subr.bf16.mxu0 %v2566
      %2588 = vmatpush1.bf16.msra.mxu0 %v2565
      %2589 = vmatprep.subr.bf16.mxu0 %v2564
      %2590 = vmatpush1.bf16.msra.mxu0 %v2563
      %2591 = vmatprep.subr.bf16.mxu0 %v2562
      %2592 = vmatpush1.bf16.msra.mxu0 %v2561
      %2593 = vmatprep.subr.bf16.mxu0 %v2560
      %2594 = vmatpush1.bf16.msra.mxu0 %v2559
      %2595 = vmatprep.subr.bf16.mxu0 %v2558
      %2596 = vmatpush1.bf16.msra.mxu0 %v2557
      %2597 = vmatprep.subr.bf16.mxu0 %v2556
      %2598 = vmatpush1.bf16.msra.mxu0 %v2555
      %2599 = vmatprep.subr.bf16.mxu0 %v2554
      %2600 = vmatpush1.bf16.msra.mxu0 %v2553
      %2601 = vmatprep.subr.bf16.mxu0 0
      %2602 = vmatpush2.bf16.msra.mxu0 0
      %2603 = vmatprep.subr.bf16.mxu0 0
      %2604 = vmatpush2.bf16.msra.mxu0 0
      %2605 = vmatprep.subr.bf16.mxu0 0
      %2606 = vmatpush2.bf16.msra.mxu0 0
      %2607 = vmatprep.subr.bf16.mxu0 0
      %2608 = vmatpush2.bf16.msra.mxu0 0
      %2609 = vmatprep.subr.bf16.mxu0 0
      %2610 = vmatpush2.bf16.msra.mxu0 0
      %2611 = vmatprep.subr.bf16.mxu0 0
      %2612 = vmatpush2.bf16.msra.mxu0 0
      %2613 = vmatprep.subr.bf16.mxu0 0
      %2614 = vmatpush2.bf16.msra.mxu0 0
      %2615 = vmatprep.subr.bf16.mxu0 0
      %2616 = vmatpush2.bf16.msra.mxu0 0
      %2617 = vmatprep.mubr.bf16.mxu0 0
      %2618 = vmatmul.mubr.bf16.gmra.mxu0 %v2480
      %v2619 = vpop.f32.mrf.mxu0
      %v2620 = vadd.f32 0.0, %v2619
      %v2621 = vpop.f32.mrf.mxu0
      %v2622 = vadd.f32 0.0, %v2621
      %v2623 = vpop.f32.mrf.mxu0
      %v2624 = vadd.f32 0.0, %v2623
      %v2625 = vpop.f32.mrf.mxu0
      %v2626 = vadd.f32 0.0, %v2625
      %2627 = vmatprep.mubr.bf16.mxu0 0
      %2628 = vmatmul.mubr.bf16.gmra.mxu0 %v2481
      %v2629 = vpop.f32.mrf.mxu0
      %v2630 = vadd.f32 0.0, %v2629
      %v2631 = vpop.f32.mrf.mxu0
      %v2632 = vadd.f32 0.0, %v2631
      %v2633 = vpop.f32.mrf.mxu0
      %v2634 = vadd.f32 0.0, %v2633
      %v2635 = vpop.f32.mrf.mxu0
      %v2636 = vadd.f32 0.0, %v2635
      %2637 = vmatprep.mubr.bf16.mxu0 0
      %2638 = vmatmul.mubr.bf16.gmra.mxu0 %v2482
      %v2639 = vpop.f32.mrf.mxu0
      %v2640 = vadd.f32 0.0, %v2639
      %v2641 = vpop.f32.mrf.mxu0
      %v2642 = vadd.f32 0.0, %v2641
      %v2643 = vpop.f32.mrf.mxu0
      %v2644 = vadd.f32 0.0, %v2643
      %v2645 = vpop.f32.mrf.mxu0
      %v2646 = vadd.f32 0.0, %v2645
      %2647 = vmatprep.mubr.bf16.mxu0 0
      %2648 = vmatmul.mubr.bf16.gmra.mxu0 %v2483
      %v2649 = vpop.f32.mrf.mxu0
      %v2650 = vadd.f32 0.0, %v2649
      %v2651 = vpop.f32.mrf.mxu0
      %v2652 = vadd.f32 0.0, %v2651
      %v2653 = vpop.f32.mrf.mxu0
      %v2654 = vadd.f32 0.0, %v2653
      %v2655 = vpop.f32.mrf.mxu0
      %v2656 = vadd.f32 0.0, %v2655
      %2657 = vmatprep.mubr.bf16.mxu0 0
      %2658 = vmatmul.mubr.bf16.gmra.mxu0 %v2484
      %v2659 = vpop.f32.mrf.mxu0
      %v2660 = vadd.f32 0.0, %v2659
      %v2661 = vpop.f32.mrf.mxu0
      %v2662 = vadd.f32 0.0, %v2661
      %v2663 = vpop.f32.mrf.mxu0
      %v2664 = vadd.f32 0.0, %v2663
      %v2665 = vpop.f32.mrf.mxu0
      %v2666 = vadd.f32 0.0, %v2665
      %2667 = vmatprep.mubr.bf16.mxu0 0
      %2668 = vmatmul.mubr.bf16.gmra.mxu0 %v2485
      %v2669 = vpop.f32.mrf.mxu0
      %v2670 = vadd.f32 0.0, %v2669
      %v2671 = vpop.f32.mrf.mxu0
      %v2672 = vadd.f32 0.0, %v2671
      %v2673 = vpop.f32.mrf.mxu0
      %v2674 = vadd.f32 0.0, %v2673
      %v2675 = vpop.f32.mrf.mxu0
      %v2676 = vadd.f32 0.0, %v2675
      %2677 = vmatprep.mubr.bf16.mxu0 0
      %2678 = vmatmul.mubr.bf16.gmra.mxu0 %v2486
      %v2679 = vpop.f32.mrf.mxu0
      %v2680 = vadd.f32 0.0, %v2679
      %v2681 = vpop.f32.mrf.mxu0
      %v2682 = vadd.f32 0.0, %v2681
      %v2683 = vpop.f32.mrf.mxu0
      %v2684 = vadd.f32 0.0, %v2683
      %v2685 = vpop.f32.mrf.mxu0
      %v2686 = vadd.f32 0.0, %v2685
      %2687 = vmatprep.mubr.bf16.mxu0 0
      %2688 = vmatmul.mubr.bf16.gmra.mxu0 %v2487
      %v2689 = vpop.f32.mrf.mxu0
      %v2690 = vadd.f32 0.0, %v2689
      %v2691 = vpop.f32.mrf.mxu0
      %v2692 = vadd.f32 0.0, %v2691
      %v2693 = vpop.f32.mrf.mxu0
      %v2694 = vadd.f32 0.0, %v2693
      %v2695 = vpop.f32.mrf.mxu0
      %v2696 = vadd.f32 0.0, %v2695
      %2697 = vdwg.mxu0
      %v2698 = vadd.f32 %v2429, %v2620
      %v2699 = vadd.f32 %v2430, %v2622
      %v2700 = vadd.f32 %v2431, %v2624
      %v2701 = vadd.f32 %v2432, %v2626
      %v2702 = vadd.f32 %v2433, %v2630
      %v2703 = vadd.f32 %v2434, %v2632
      %v2704 = vadd.f32 %v2435, %v2634
      %v2705 = vadd.f32 %v2436, %v2636
      %v2706 = vadd.f32 %v2437, %v2640
      %v2707 = vadd.f32 %v2438, %v2642
      %v2708 = vadd.f32 %v2439, %v2644
      %v2709 = vadd.f32 %v2440, %v2646
      %v2710 = vadd.f32 %v2441, %v2650
      %v2711 = vadd.f32 %v2442, %v2652
      %v2712 = vadd.f32 %v2443, %v2654
      %v2713 = vadd.f32 %v2444, %v2656
      %v2714 = vadd.f32 %v2445, %v2660
      %v2715 = vadd.f32 %v2446, %v2662
      %v2716 = vadd.f32 %v2447, %v2664
      %v2717 = vadd.f32 %v2448, %v2666
      %v2718 = vadd.f32 %v2449, %v2670
      %v2719 = vadd.f32 %v2450, %v2672
      %v2720 = vadd.f32 %v2451, %v2674
      %v2721 = vadd.f32 %v2452, %v2676
      %v2722 = vadd.f32 %v2453, %v2680
      %v2723 = vadd.f32 %v2454, %v2682
      %v2724 = vadd.f32 %v2455, %v2684
      %v2725 = vadd.f32 %v2456, %v2686
      %v2726 = vadd.f32 %v2457, %v2690
      %v2727 = vadd.f32 %v2458, %v2692
      %v2728 = vadd.f32 %v2459, %v2694
      %v2729 = vadd.f32 %v2460, %v2696
      %v2730 = vld [vmem:[%s499] sm:$0x3]
      %v2731 = vld [vmem:[%s503] sm:$0x3]
      %v2732 = vadd.f32 %v2698, %v2700
      %v2733 = vadd.f32 %v2732, %v2702
      %v2734 = vadd.f32 %v2733, %v2704
      %v2735 = vadd.f32 %v2734, %v2706
      %v2736 = vadd.f32 %v2735, %v2708
      %v2737 = vadd.f32 %v2736, %v2710
      %v2738 = vadd.f32 %v2737, %v2712
      %v2739 = vadd.f32 %v2738, %v2714
      %v2740 = vadd.f32 %v2739, %v2716
      %v2741 = vadd.f32 %v2740, %v2718
      %v2742 = vadd.f32 %v2741, %v2720
      %v2743 = vadd.f32 %v2742, %v2722
      %v2744 = vadd.f32 %v2743, %v2724
      %v2745 = vadd.f32 %v2744, %v2726
      %v2746 = vadd.f32 %v2745, %v2728
      %v2747 = vrot.slane %v2746, 4
      %v2748 = vadd.f32 %v2746, %v2747
      %v2749 = vrot.slane %v2748, 2
      %v2750 = vadd.f32 %v2748, %v2749
      %v2751 = vrot.slane %v2750, 1
      %v2752 = vadd.f32 %v2750, %v2751
      %v2753 = vadd.f32 %v2699, %v2701
      %v2754 = vadd.f32 %v2753, %v2703
      %v2755 = vadd.f32 %v2754, %v2705
      %v2756 = vadd.f32 %v2755, %v2707
      %v2757 = vadd.f32 %v2756, %v2709
      %v2758 = vadd.f32 %v2757, %v2711
      %v2759 = vadd.f32 %v2758, %v2713
      %v2760 = vadd.f32 %v2759, %v2715
      %v2761 = vadd.f32 %v2760, %v2717
      %v2762 = vadd.f32 %v2761, %v2719
      %v2763 = vadd.f32 %v2762, %v2721
      %v2764 = vadd.f32 %v2763, %v2723
      %v2765 = vadd.f32 %v2764, %v2725
      %v2766 = vadd.f32 %v2765, %v2727
      %v2767 = vadd.f32 %v2766, %v2729
      %v2768 = vrot.slane %v2767, 4
      %v2769 = vadd.f32 %v2767, %v2768
      %v2770 = vrot.slane %v2769, 2
      %v2771 = vadd.f32 %v2769, %v2770
      %v2772 = vrot.slane %v2771, 1
      %v2773 = vadd.f32 %v2771, %v2772
      %v2774 = vmul.f32 %v2698, %v2698
      %v2775 = vmul.f32 %v2699, %v2699
      %v2776 = vmul.f32 %v2700, %v2700
      %v2777 = vmul.f32 %v2701, %v2701
      %v2778 = vmul.f32 %v2702, %v2702
      %v2779 = vmul.f32 %v2703, %v2703
      %v2780 = vmul.f32 %v2704, %v2704
      %v2781 = vmul.f32 %v2705, %v2705
      %v2782 = vmul.f32 %v2706, %v2706
      %v2783 = vmul.f32 %v2707, %v2707
      %v2784 = vmul.f32 %v2708, %v2708
      %v2785 = vmul.f32 %v2709, %v2709
      %v2786 = vmul.f32 %v2710, %v2710
      %v2787 = vmul.f32 %v2711, %v2711
      %v2788 = vmul.f32 %v2712, %v2712
      %v2789 = vmul.f32 %v2713, %v2713
      %v2790 = vmul.f32 %v2714, %v2714
      %v2791 = vmul.f32 %v2715, %v2715
      %v2792 = vmul.f32 %v2716, %v2716
      %v2793 = vmul.f32 %v2717, %v2717
      %v2794 = vmul.f32 %v2718, %v2718
      %v2795 = vmul.f32 %v2719, %v2719
      %v2796 = vmul.f32 %v2720, %v2720
      %v2797 = vmul.f32 %v2721, %v2721
      %v2798 = vmul.f32 %v2722, %v2722
      %v2799 = vmul.f32 %v2723, %v2723
      %v2800 = vmul.f32 %v2724, %v2724
      %v2801 = vmul.f32 %v2725, %v2725
      %v2802 = vmul.f32 %v2726, %v2726
      %v2803 = vmul.f32 %v2727, %v2727
      %v2804 = vmul.f32 %v2728, %v2728
      %v2805 = vmul.f32 %v2729, %v2729
      %v2806 = vadd.f32 %v2774, %v2776
      %v2807 = vadd.f32 %v2806, %v2778
      %v2808 = vadd.f32 %v2807, %v2780
      %v2809 = vadd.f32 %v2808, %v2782
      %v2810 = vadd.f32 %v2809, %v2784
      %v2811 = vadd.f32 %v2810, %v2786
      %v2812 = vadd.f32 %v2811, %v2788
      %v2813 = vadd.f32 %v2812, %v2790
      %v2814 = vadd.f32 %v2813, %v2792
      %v2815 = vadd.f32 %v2814, %v2794
      %v2816 = vadd.f32 %v2815, %v2796
      %v2817 = vadd.f32 %v2816, %v2798
      %v2818 = vadd.f32 %v2817, %v2800
      %v2819 = vadd.f32 %v2818, %v2802
      %v2820 = vadd.f32 %v2819, %v2804
      %v2821 = vrot.slane %v2820, 4
      %v2822 = vadd.f32 %v2820, %v2821
      %v2823 = vrot.slane %v2822, 2
      %v2824 = vadd.f32 %v2822, %v2823
      %v2825 = vrot.slane %v2824, 1
      %v2826 = vadd.f32 %v2824, %v2825
      %v2827 = vadd.f32 %v2775, %v2777
      %v2828 = vadd.f32 %v2827, %v2779
      %v2829 = vadd.f32 %v2828, %v2781
      %v2830 = vadd.f32 %v2829, %v2783
      %v2831 = vadd.f32 %v2830, %v2785
      %v2832 = vadd.f32 %v2831, %v2787
      %v2833 = vadd.f32 %v2832, %v2789
      %v2834 = vadd.f32 %v2833, %v2791
      %v2835 = vadd.f32 %v2834, %v2793
      %v2836 = vadd.f32 %v2835, %v2795
      %v2837 = vadd.f32 %v2836, %v2797
      %v2838 = vadd.f32 %v2837, %v2799
      %v2839 = vadd.f32 %v2838, %v2801
      %v2840 = vadd.f32 %v2839, %v2803
      %v2841 = vadd.f32 %v2840, %v2805
      %v2842 = vrot.slane %v2841, 4
      %v2843 = vadd.f32 %v2841, %v2842
      %v2844 = vrot.slane %v2843, 2
      %v2845 = vadd.f32 %v2843, %v2844
      %v2846 = vrot.slane %v2845, 1
      %v2847 = vadd.f32 %v2845, %v2846
      %v2848 = vmul.f32 %v2752, 0.0078125
      %v2849 = vmul.f32 %v2773, 0.0078125
      %v2850 = vmul.f32 %v2826, 0.0078125
      %v2851 = vmul.f32 %v2847, 0.0078125
      %v2852 = vmul.f32 %v2848, %v2848
      %v2853 = vmul.f32 %v2849, %v2849
      %v2854 = vsub.f32 %v2850, %v2852
      %v2855 = vsub.f32 %v2851, %v2853
      %v2856 = vmax.f32 %v2854, 0.0
      %v2857 = vmax.f32 %v2855, 0.0
      %v2858 = vadd.f32 %v2856, 1e-05
      %v2859 = vadd.f32 %v2857, 1e-05
      %v2860 = vrsqrt.pop %v2858
      %v2861 = vrsqrt.pop %v2859
      %v2864 = vcombine.low %v2860, %v2861
      %v2866 = vunpack.c.l.s4 1966171168
      %v2867 = vunpack.c.0.s8 %v2866
      %v2868 = vlaneseq
      %v2869 = vshrl.u32 %v2868, 7
      %v2870 = vsub.s32 %v2867, %v2869
      %v2871 = vrot.slane %v2864, %v2870
      %v2873 = vunpack.c.l.s4 1966171168
      %v2874 = vunpack.c.0.s8 %v2873
      %v2875 = vlaneseq
      %v2876 = vshrl.u32 %v2875, 7
      %v2877 = vsub.s32 %v2874, %v2876
      %v2878 = vrot.slane %v2871, %v2877
      %v2880 = vmul.f32 %v2730, %v2878
      %v2882 = vlaneseq
      %v2883 = vshrl.u32 %v2882, 7
      %v2884 = vsub.s32 0, %v2883
      %v2885 = vrot.slane %v2880, %v2884
      %v2886 = vlaneseq
      %v2887 = vshrl.u32 %v2886, 7
      %v2888 = vsub.s32 1, %v2887
      %v2889 = vrot.slane %v2880, %v2888
      %v2892 = vmul.f32 %v2848, %v2885
      %v2893 = vmul.f32 %v2849, %v2889
      %v2896 = vcombine.low %v2892, %v2893
      %v2898 = vunpack.c.l.s4 1966171168
      %v2899 = vunpack.c.0.s8 %v2898
      %v2900 = vlaneseq
      %v2901 = vshrl.u32 %v2900, 7
      %v2902 = vsub.s32 %v2899, %v2901
      %v2903 = vrot.slane %v2896, %v2902
      %v2905 = vunpack.c.l.s4 1966171168
      %v2906 = vunpack.c.0.s8 %v2905
      %v2907 = vlaneseq
      %v2908 = vshrl.u32 %v2907, 7
      %v2909 = vsub.s32 %v2906, %v2908
      %v2910 = vrot.slane %v2903, %v2909
      %v2912 = vsub.f32 %v2731, %v2910
      %v2913 = vmul.f32 %v2698, %v2885
      %v2914 = vmul.f32 %v2699, %v2889
      %v2915 = vmul.f32 %v2700, %v2885
      %v2916 = vmul.f32 %v2701, %v2889
      %v2917 = vmul.f32 %v2702, %v2885
      %v2918 = vmul.f32 %v2703, %v2889
      %v2919 = vmul.f32 %v2704, %v2885
      %v2920 = vmul.f32 %v2705, %v2889
      %v2921 = vmul.f32 %v2706, %v2885
      %v2922 = vmul.f32 %v2707, %v2889
      %v2923 = vmul.f32 %v2708, %v2885
      %v2924 = vmul.f32 %v2709, %v2889
      %v2925 = vmul.f32 %v2710, %v2885
      %v2926 = vmul.f32 %v2711, %v2889
      %v2927 = vmul.f32 %v2712, %v2885
      %v2928 = vmul.f32 %v2713, %v2889
      %v2929 = vmul.f32 %v2714, %v2885
      %v2930 = vmul.f32 %v2715, %v2889
      %v2931 = vmul.f32 %v2716, %v2885
      %v2932 = vmul.f32 %v2717, %v2889
      %v2933 = vmul.f32 %v2718, %v2885
      %v2934 = vmul.f32 %v2719, %v2889
      %v2935 = vmul.f32 %v2720, %v2885
      %v2936 = vmul.f32 %v2721, %v2889
      %v2937 = vmul.f32 %v2722, %v2885
      %v2938 = vmul.f32 %v2723, %v2889
      %v2939 = vmul.f32 %v2724, %v2885
      %v2940 = vmul.f32 %v2725, %v2889
      %v2941 = vmul.f32 %v2726, %v2885
      %v2942 = vmul.f32 %v2727, %v2889
      %v2943 = vmul.f32 %v2728, %v2885
      %v2944 = vmul.f32 %v2729, %v2889
      %v2946 = vlaneseq
      %v2947 = vshrl.u32 %v2946, 7
      %v2948 = vsub.s32 0, %v2947
      %v2949 = vrot.slane %v2912, %v2948
      %v2950 = vlaneseq
      %v2951 = vshrl.u32 %v2950, 7
      %v2952 = vsub.s32 1, %v2951
      %v2953 = vrot.slane %v2912, %v2952
      %v2956 = vadd.f32 %v2913, %v2949
      %v2957 = vadd.f32 %v2914, %v2953
      %v2958 = vadd.f32 %v2915, %v2949
      %v2959 = vadd.f32 %v2916, %v2953
      %v2960 = vadd.f32 %v2917, %v2949
      %v2961 = vadd.f32 %v2918, %v2953
      %v2962 = vadd.f32 %v2919, %v2949
      %v2963 = vadd.f32 %v2920, %v2953
      %v2964 = vadd.f32 %v2921, %v2949
      %v2965 = vadd.f32 %v2922, %v2953
      %v2966 = vadd.f32 %v2923, %v2949
      %v2967 = vadd.f32 %v2924, %v2953
      %v2968 = vadd.f32 %v2925, %v2949
      %v2969 = vadd.f32 %v2926, %v2953
      %v2970 = vadd.f32 %v2927, %v2949
      %v2971 = vadd.f32 %v2928, %v2953
      %v2972 = vadd.f32 %v2929, %v2949
      %v2973 = vadd.f32 %v2930, %v2953
      %v2974 = vadd.f32 %v2931, %v2949
      %v2975 = vadd.f32 %v2932, %v2953
      %v2976 = vadd.f32 %v2933, %v2949
      %v2977 = vadd.f32 %v2934, %v2953
      %v2978 = vadd.f32 %v2935, %v2949
      %v2979 = vadd.f32 %v2936, %v2953
      %v2980 = vadd.f32 %v2937, %v2949
      %v2981 = vadd.f32 %v2938, %v2953
      %v2982 = vadd.f32 %v2939, %v2949
      %v2983 = vadd.f32 %v2940, %v2953
      %v2984 = vadd.f32 %v2941, %v2949
      %v2985 = vadd.f32 %v2942, %v2953
      %v2986 = vadd.f32 %v2943, %v2949
      %v2987 = vadd.f32 %v2944, %v2953
      %v2988 = vtanh.pop %v2956
      %v2989 = vtanh.pop %v2958
      %v2990 = vtanh.pop %v2960
      %v2991 = vtanh.pop %v2962
      %v2992 = vtanh.pop %v2964
      %v2993 = vtanh.pop %v2966
      %v2994 = vtanh.pop %v2968
      %v2995 = vtanh.pop %v2970
      %v2996 = vtanh.pop %v2972
      %v2997 = vtanh.pop %v2974
      %v2998 = vtanh.pop %v2976
      %v2999 = vtanh.pop %v2978
      %v3000 = vtanh.pop %v2980
      %v3001 = vtanh.pop %v2982
      %v3002 = vtanh.pop %v2984
      %v3003 = vtanh.pop %v2986
      %v3004 = vxor.u32 %v2957, 2147483648
      %v3005 = vxor.u32 %v2959, 2147483648
      %v3006 = vxor.u32 %v2961, 2147483648
      %v3007 = vxor.u32 %v2963, 2147483648
      %v3008 = vxor.u32 %v2965, 2147483648
      %v3009 = vxor.u32 %v2967, 2147483648
      %v3010 = vxor.u32 %v2969, 2147483648
      %v3011 = vxor.u32 %v2971, 2147483648
      %v3012 = vxor.u32 %v2973, 2147483648
      %v3013 = vxor.u32 %v2975, 2147483648
      %v3014 = vxor.u32 %v2977, 2147483648
      %v3015 = vxor.u32 %v2979, 2147483648
      %v3016 = vxor.u32 %v2981, 2147483648
      %v3017 = vxor.u32 %v2983, 2147483648
      %v3018 = vxor.u32 %v2985, 2147483648
      %v3019 = vxor.u32 %v2987, 2147483648
      %v3020 = vmul.f32 %v3004, 1.442695
      %v3021 = vpow.pop %v3020
      %v3022 = vmul.f32 %v3005, 1.442695
      %v3023 = vpow.pop %v3022
      %v3024 = vmul.f32 %v3006, 1.442695
      %v3025 = vpow.pop %v3024
      %v3026 = vmul.f32 %v3007, 1.442695
      %v3027 = vpow.pop %v3026
      %v3028 = vmul.f32 %v3008, 1.442695
      %v3029 = vpow.pop %v3028
      %v3030 = vmul.f32 %v3009, 1.442695
      %v3031 = vpow.pop %v3030
      %v3032 = vmul.f32 %v3010, 1.442695
      %v3033 = vpow.pop %v3032
      %v3034 = vmul.f32 %v3011, 1.442695
      %v3035 = vpow.pop %v3034
      %v3036 = vmul.f32 %v3012, 1.442695
      %v3037 = vpow.pop %v3036
      %v3038 = vmul.f32 %v3013, 1.442695
      %v3039 = vpow.pop %v3038
      %v3040 = vmul.f32 %v3014, 1.442695
      %v3041 = vpow.pop %v3040
      %v3042 = vmul.f32 %v3015, 1.442695
      %v3043 = vpow.pop %v3042
      %v3044 = vmul.f32 %v3016, 1.442695
      %v3045 = vpow.pop %v3044
      %v3046 = vmul.f32 %v3017, 1.442695
      %v3047 = vpow.pop %v3046
      %v3048 = vmul.f32 %v3018, 1.442695
      %v3049 = vpow.pop %v3048
      %v3050 = vmul.f32 %v3019, 1.442695
      %v3051 = vpow.pop %v3050
      %v3052 = vadd.f32 %v3021, 1.0
      %v3053 = vadd.f32 %v3023, 1.0
      %v3054 = vadd.f32 %v3025, 1.0
      %v3055 = vadd.f32 %v3027, 1.0
      %v3056 = vadd.f32 %v3029, 1.0
      %v3057 = vadd.f32 %v3031, 1.0
      %v3058 = vadd.f32 %v3033, 1.0
      %v3059 = vadd.f32 %v3035, 1.0
      %v3060 = vadd.f32 %v3037, 1.0
      %v3061 = vadd.f32 %v3039, 1.0
      %v3062 = vadd.f32 %v3041, 1.0
      %v3063 = vadd.f32 %v3043, 1.0
      %v3064 = vadd.f32 %v3045, 1.0
      %v3065 = vadd.f32 %v3047, 1.0
      %v3066 = vadd.f32 %v3049, 1.0
      %v3067 = vadd.f32 %v3051, 1.0
      %v3068 = vrcp.pop %v3052
      %v3069 = vmul.f32 1.0, %v3068
      %v3070 = vrcp.pop %v3053
      %v3071 = vmul.f32 1.0, %v3070
      %v3072 = vrcp.pop %v3054
      %v3073 = vmul.f32 1.0, %v3072
      %v3074 = vrcp.pop %v3055
      %v3075 = vmul.f32 1.0, %v3074
      %v3076 = vrcp.pop %v3056
      %v3077 = vmul.f32 1.0, %v3076
      %v3078 = vrcp.pop %v3057
      %v3079 = vmul.f32 1.0, %v3078
      %v3080 = vrcp.pop %v3058
      %v3081 = vmul.f32 1.0, %v3080
      %v3082 = vrcp.pop %v3059
      %v3083 = vmul.f32 1.0, %v3082
      %v3084 = vrcp.pop %v3060
      %v3085 = vmul.f32 1.0, %v3084
      %v3086 = vrcp.pop %v3061
      %v3087 = vmul.f32 1.0, %v3086
      %v3088 = vrcp.pop %v3062
      %v3089 = vmul.f32 1.0, %v3088
      %v3090 = vrcp.pop %v3063
      %v3091 = vmul.f32 1.0, %v3090
      %v3092 = vrcp.pop %v3064
      %v3093 = vmul.f32 1.0, %v3092
      %v3094 = vrcp.pop %v3065
      %v3095 = vmul.f32 1.0, %v3094
      %v3096 = vrcp.pop %v3066
      %v3097 = vmul.f32 1.0, %v3096
      %v3098 = vrcp.pop %v3067
      %v3099 = vmul.f32 1.0, %v3098
      %v3100 = vmul.f32 %v2988, %v3069
      %v3101 = vmul.f32 %v2989, %v3071
      %v3102 = vmul.f32 %v2990, %v3073
      %v3103 = vmul.f32 %v2991, %v3075
      %v3104 = vmul.f32 %v2992, %v3077
      %v3105 = vmul.f32 %v2993, %v3079
      %v3106 = vmul.f32 %v2994, %v3081
      %v3107 = vmul.f32 %v2995, %v3083
      %v3108 = vmul.f32 %v2996, %v3085
      %v3109 = vmul.f32 %v2997, %v3087
      %v3110 = vmul.f32 %v2998, %v3089
      %v3111 = vmul.f32 %v2999, %v3091
      %v3112 = vmul.f32 %v3000, %v3093
      %v3113 = vmul.f32 %v3001, %v3095
      %v3114 = vmul.f32 %v3002, %v3097
      %v3115 = vmul.f32 %v3003, %v3099
      %v3116 = vpack.c.bf16 %v3101, %v3100
      %v3117 = vpack.c.bf16 %v3103, %v3102
      %v3118 = vpack.c.bf16 %v3105, %v3104
      %v3119 = vpack.c.bf16 %v3107, %v3106
      %v3120 = vpack.c.bf16 %v3109, %v3108
      %v3121 = vpack.c.bf16 %v3111, %v3110
      %v3122 = vpack.c.bf16 %v3113, %v3112
      %v3123 = vpack.c.bf16 %v3115, %v3114
      %v3124 = vld [vmem:[%s508] sm:$0xf]
      %v3125 = vld [vmem:[%s508 + $0x4] sm:$0xf]
      %v3126 = vld [vmem:[%s508 + $0x8] sm:$0xf]
      %v3127 = vld [vmem:[%s508 + $0xc] sm:$0xf]
      %v3128 = vld [vmem:[%s508 + $0x10] sm:$0xf]
      %v3129 = vld [vmem:[%s508 + $0x14] sm:$0xf]
      %v3130 = vld [vmem:[%s508 + $0x18] sm:$0xf]
      %v3131 = vld [vmem:[%s508 + $0x1c] sm:$0xf]
      %v3132 = vld [vmem:[%s508 + $0x20] sm:$0xf]
      %v3133 = vld [vmem:[%s508 + $0x24] sm:$0xf]
      %v3134 = vld [vmem:[%s508 + $0x28] sm:$0xf]
      %v3135 = vld [vmem:[%s508 + $0x2c] sm:$0xf]
      %v3136 = vld [vmem:[%s508 + $0x30] sm:$0xf]
      %v3137 = vld [vmem:[%s508 + $0x34] sm:$0xf]
      %v3138 = vld [vmem:[%s508 + $0x38] sm:$0xf]
      %v3139 = vld [vmem:[%s508 + $0x3c] sm:$0xf]
      %v3156 = vunpack.c.l.b16 %v3124
      %v3157 = vunpack.c.l.b16 %v3125
      %v3158 = vunpack.c.l.b16 %v3126
      %v3159 = vunpack.c.l.b16 %v3127
      %v3160 = vunpack.c.l.b16 %v3128
      %v3161 = vunpack.c.l.b16 %v3129
      %v3162 = vunpack.c.l.b16 %v3130
      %v3163 = vunpack.c.l.b16 %v3131
      %v3164 = vunpack.c.l.b16 %v3132
      %v3165 = vunpack.c.l.b16 %v3133
      %v3166 = vunpack.c.l.b16 %v3134
      %v3167 = vunpack.c.l.b16 %v3135
      %v3168 = vunpack.c.l.b16 %v3136
      %v3169 = vunpack.c.l.b16 %v3137
      %v3170 = vunpack.c.l.b16 %v3138
      %v3171 = vunpack.c.l.b16 %v3139
      %v3172 = vpack.c.b16 %v3157, %v3156
      %v3173 = vpack.c.b16 %v3159, %v3158
      %v3174 = vpack.c.b16 %v3161, %v3160
      %v3175 = vpack.c.b16 %v3163, %v3162
      %v3176 = vpack.c.b16 %v3165, %v3164
      %v3177 = vpack.c.b16 %v3167, %v3166
      %v3178 = vpack.c.b16 %v3169, %v3168
      %v3179 = vpack.c.b16 %v3171, %v3170
      %3188 = vmatprep.subr.bf16.mxu0 0
      %3189 = vmatpush1.bf16.msra.mxu0 %v3179
      %3190 = vmatprep.subr.bf16.mxu0 0
      %3191 = vmatpush1.bf16.msra.mxu0 %v3178
      %3192 = vmatprep.subr.bf16.mxu0 0
      %3193 = vmatpush1.bf16.msra.mxu0 %v3177
      %3194 = vmatprep.subr.bf16.mxu0 0
      %3195 = vmatpush1.bf16.msra.mxu0 %v3176
      %3196 = vmatprep.subr.bf16.mxu0 0
      %3197 = vmatpush1.bf16.msra.mxu0 %v3175
      %3198 = vmatprep.subr.bf16.mxu0 0
      %3199 = vmatpush1.bf16.msra.mxu0 %v3174
      %3200 = vmatprep.subr.bf16.mxu0 0
      %3201 = vmatpush1.bf16.msra.mxu0 %v3173
      %3202 = vmatprep.subr.bf16.mxu0 0
      %3203 = vmatpush1.bf16.msra.mxu0 %v3172
      %3204 = vmatprep.subr.bf16.mxu0 0
      %3205 = vmatpush2.bf16.msra.mxu0 0
      %3206 = vmatprep.subr.bf16.mxu0 0
      %3207 = vmatpush2.bf16.msra.mxu0 0
      %3208 = vmatprep.subr.bf16.mxu0 0
      %3209 = vmatpush2.bf16.msra.mxu0 0
      %3210 = vmatprep.subr.bf16.mxu0 0
      %3211 = vmatpush2.bf16.msra.mxu0 0
      %3212 = vmatprep.subr.bf16.mxu0 0
      %3213 = vmatpush2.bf16.msra.mxu0 0
      %3214 = vmatprep.subr.bf16.mxu0 0
      %3215 = vmatpush2.bf16.msra.mxu0 0
      %3216 = vmatprep.subr.bf16.mxu0 0
      %3217 = vmatpush2.bf16.msra.mxu0 0
      %3218 = vmatprep.subr.bf16.mxu0 0
      %3219 = vmatpush2.bf16.msra.mxu0 0
      %3220 = vmatprep.mubr.bf16.mxu0 0
      %3221 = vmatmul.mubr.bf16.gmra.mxu0 %v3116
      %v3222 = vpop.f32.mrf.mxu0
      %v3223 = vadd.f32 0.0, %v3222
      %v3224 = vpop.f32.mrf.mxu0
      %v3225 = vpop.f32.mrf.mxu0
      %v3226 = vadd.f32 0.0, %v3225
      %v3227 = vpop.f32.mrf.mxu0
      %3228 = vmatprep.mubr.bf16.mxu0 0
      %3229 = vmatmul.mubr.bf16.gmra.mxu0 %v3117
      %v3230 = vpop.f32.mrf.mxu0
      %v3231 = vadd.f32 0.0, %v3230
      %v3232 = vpop.f32.mrf.mxu0
      %v3233 = vpop.f32.mrf.mxu0
      %v3234 = vadd.f32 0.0, %v3233
      %v3235 = vpop.f32.mrf.mxu0
      %3236 = vmatprep.mubr.bf16.mxu0 0
      %3237 = vmatmul.mubr.bf16.gmra.mxu0 %v3118
      %v3238 = vpop.f32.mrf.mxu0
      %v3239 = vadd.f32 0.0, %v3238
      %v3240 = vpop.f32.mrf.mxu0
      %v3241 = vpop.f32.mrf.mxu0
      %v3242 = vadd.f32 0.0, %v3241
      %v3243 = vpop.f32.mrf.mxu0
      %3244 = vmatprep.mubr.bf16.mxu0 0
      %3245 = vmatmul.mubr.bf16.gmra.mxu0 %v3119
      %v3246 = vpop.f32.mrf.mxu0
      %v3247 = vadd.f32 0.0, %v3246
      %v3248 = vpop.f32.mrf.mxu0
      %v3249 = vpop.f32.mrf.mxu0
      %v3250 = vadd.f32 0.0, %v3249
      %v3251 = vpop.f32.mrf.mxu0
      %3252 = vmatprep.mubr.bf16.mxu0 0
      %3253 = vmatmul.mubr.bf16.gmra.mxu0 %v3120
      %v3254 = vpop.f32.mrf.mxu0
      %v3255 = vadd.f32 0.0, %v3254
      %v3256 = vpop.f32.mrf.mxu0
      %v3257 = vpop.f32.mrf.mxu0
      %v3258 = vadd.f32 0.0, %v3257
      %v3259 = vpop.f32.mrf.mxu0
      %3260 = vmatprep.mubr.bf16.mxu0 0
      %3261 = vmatmul.mubr.bf16.gmra.mxu0 %v3121
      %v3262 = vpop.f32.mrf.mxu0
      %v3263 = vadd.f32 0.0, %v3262
      %v3264 = vpop.f32.mrf.mxu0
      %v3265 = vpop.f32.mrf.mxu0
      %v3266 = vadd.f32 0.0, %v3265
      %v3267 = vpop.f32.mrf.mxu0
      %3268 = vmatprep.mubr.bf16.mxu0 0
      %3269 = vmatmul.mubr.bf16.gmra.mxu0 %v3122
      %v3270 = vpop.f32.mrf.mxu0
      %v3271 = vadd.f32 0.0, %v3270
      %v3272 = vpop.f32.mrf.mxu0
      %v3273 = vpop.f32.mrf.mxu0
      %v3274 = vadd.f32 0.0, %v3273
      %v3275 = vpop.f32.mrf.mxu0
      %3276 = vmatprep.mubr.bf16.mxu0 0
      %3277 = vmatmul.mubr.bf16.gmra.mxu0 %v3123
      %v3278 = vpop.f32.mrf.mxu0
      %v3279 = vadd.f32 0.0, %v3278
      %v3280 = vpop.f32.mrf.mxu0
      %v3281 = vpop.f32.mrf.mxu0
      %v3282 = vadd.f32 0.0, %v3281
      %v3283 = vpop.f32.mrf.mxu0
      %3284 = vdwg.mxu0
      %v3285 = vld [vmem:[%s511] sm:$0x1]
      %v3286 = vld [vmem:[%s514] sm:$0x1]
      %v3287 = vadd.f32 %v3223, %v3226
      %v3288 = vadd.f32 %v3287, %v3231
      %v3289 = vadd.f32 %v3288, %v3234
      %v3290 = vadd.f32 %v3289, %v3239
      %v3291 = vadd.f32 %v3290, %v3242
      %v3292 = vadd.f32 %v3291, %v3247
      %v3293 = vadd.f32 %v3292, %v3250
      %v3294 = vadd.f32 %v3293, %v3255
      %v3295 = vadd.f32 %v3294, %v3258
      %v3296 = vadd.f32 %v3295, %v3263
      %v3297 = vadd.f32 %v3296, %v3266
      %v3298 = vadd.f32 %v3297, %v3271
      %v3299 = vadd.f32 %v3298, %v3274
      %v3300 = vadd.f32 %v3299, %v3279
      %v3301 = vadd.f32 %v3300, %v3282
      %v3302 = vrot.slane %v3301, 4
      %v3303 = vadd.f32 %v3301, %v3302
      %v3304 = vrot.slane %v3303, 2
      %v3305 = vadd.f32 %v3303, %v3304
      %v3306 = vrot.slane %v3305, 1
      %v3307 = vadd.f32 %v3305, %v3306
      %v3308 = vmul.f32 %v3223, %v3223
      %v3309 = vmul.f32 %v3226, %v3226
      %v3310 = vmul.f32 %v3231, %v3231
      %v3311 = vmul.f32 %v3234, %v3234
      %v3312 = vmul.f32 %v3239, %v3239
      %v3313 = vmul.f32 %v3242, %v3242
      %v3314 = vmul.f32 %v3247, %v3247
      %v3315 = vmul.f32 %v3250, %v3250
      %v3316 = vmul.f32 %v3255, %v3255
      %v3317 = vmul.f32 %v3258, %v3258
      %v3318 = vmul.f32 %v3263, %v3263
      %v3319 = vmul.f32 %v3266, %v3266
      %v3320 = vmul.f32 %v3271, %v3271
      %v3321 = vmul.f32 %v3274, %v3274
      %v3322 = vmul.f32 %v3279, %v3279
      %v3323 = vmul.f32 %v3282, %v3282
      %v3324 = vadd.f32 %v3308, %v3309
      %v3325 = vadd.f32 %v3324, %v3310
      %v3326 = vadd.f32 %v3325, %v3311
      %v3327 = vadd.f32 %v3326, %v3312
      %v3328 = vadd.f32 %v3327, %v3313
      %v3329 = vadd.f32 %v3328, %v3314
      %v3330 = vadd.f32 %v3329, %v3315
      %v3331 = vadd.f32 %v3330, %v3316
      %v3332 = vadd.f32 %v3331, %v3317
      %v3333 = vadd.f32 %v3332, %v3318
      %v3334 = vadd.f32 %v3333, %v3319
      %v3335 = vadd.f32 %v3334, %v3320
      %v3336 = vadd.f32 %v3335, %v3321
      %v3337 = vadd.f32 %v3336, %v3322
      %v3338 = vadd.f32 %v3337, %v3323
      %v3339 = vrot.slane %v3338, 4
      %v3340 = vadd.f32 %v3338, %v3339
      %v3341 = vrot.slane %v3340, 2
      %v3342 = vadd.f32 %v3340, %v3341
      %v3343 = vrot.slane %v3342, 1
      %v3344 = vadd.f32 %v3342, %v3343
      %v3345 = vmul.f32 %v3307, 0.0078125
      %v3346 = vmul.f32 %v3344, 0.0078125
      %v3347 = vmul.f32 %v3345, %v3345
      %v3348 = vsub.f32 %v3346, %v3347
      %v3349 = vmax.f32 %v3348, 0.0
      %v3350 = vadd.f32 %v3349, 1e-05
      %v3351 = vrsqrt.pop %v3350
      %v3352 = vmul.f32 %v3285, %v3351
      %v3353 = vmul.f32 %v3345, %v3352
      %v3354 = vsub.f32 %v3286, %v3353
      %v3356 = vlaneseq
      %v3357 = vshrl.u32 %v3356, 7
      %v3358 = vsub.s32 0, %v3357
      %v3359 = vrot.slane %v3352, %v3358
      %v3361 = vmul.f32 %v3223, %v3359
      %v3362 = vmul.f32 %v3226, %v3359
      %v3363 = vmul.f32 %v3231, %v3359
      %v3364 = vmul.f32 %v3234, %v3359
      %v3365 = vmul.f32 %v3239, %v3359
      %v3366 = vmul.f32 %v3242, %v3359
      %v3367 = vmul.f32 %v3247, %v3359
      %v3368 = vmul.f32 %v3250, %v3359
      %v3369 = vmul.f32 %v3255, %v3359
      %v3370 = vmul.f32 %v3258, %v3359
      %v3371 = vmul.f32 %v3263, %v3359
      %v3372 = vmul.f32 %v3266, %v3359
      %v3373 = vmul.f32 %v3271, %v3359
      %v3374 = vmul.f32 %v3274, %v3359
      %v3375 = vmul.f32 %v3279, %v3359
      %v3376 = vmul.f32 %v3282, %v3359
      %v3378 = vlaneseq
      %v3379 = vshrl.u32 %v3378, 7
      %v3380 = vsub.s32 0, %v3379
      %v3381 = vrot.slane %v3354, %v3380
      %v3383 = vadd.f32 %v3361, %v3381
      %v3384 = vadd.f32 %v3362, %v3381
      %v3385 = vadd.f32 %v3363, %v3381
      %v3386 = vadd.f32 %v3364, %v3381
      %v3387 = vadd.f32 %v3365, %v3381
      %v3388 = vadd.f32 %v3366, %v3381
      %v3389 = vadd.f32 %v3367, %v3381
      %v3390 = vadd.f32 %v3368, %v3381
      %v3391 = vadd.f32 %v3369, %v3381
      %v3392 = vadd.f32 %v3370, %v3381
      %v3393 = vadd.f32 %v3371, %v3381
      %v3394 = vadd.f32 %v3372, %v3381
      %v3395 = vadd.f32 %v3373, %v3381
      %v3396 = vadd.f32 %v3374, %v3381
      %v3397 = vadd.f32 %v3375, %v3381
      %v3398 = vadd.f32 %v3376, %v3381
      %v3399 = vtanh.pop %v3383
      %v3400 = vtanh.pop %v3384
      %v3401 = vtanh.pop %v3385
      %v3402 = vtanh.pop %v3386
      %v3403 = vtanh.pop %v3387
      %v3404 = vtanh.pop %v3388
      %v3405 = vtanh.pop %v3389
      %v3406 = vtanh.pop %v3390
      %v3407 = vtanh.pop %v3391
      %v3408 = vtanh.pop %v3392
      %v3409 = vtanh.pop %v3393
      %v3410 = vtanh.pop %v3394
      %v3411 = vtanh.pop %v3395
      %v3412 = vtanh.pop %v3396
      %v3413 = vtanh.pop %v3397
      %v3414 = vtanh.pop %v3398
      %v3415 = vld [vmem:[#allocation2] sm:$0xff]
      %v3416 = vld [vmem:[#allocation2 + $0x8] sm:$0xff]
      %v3417 = vld [vmem:[#allocation2 + $0x10] sm:$0xff]
      %v3418 = vld [vmem:[#allocation2 + $0x18] sm:$0xff]
      %v3419 = vld [vmem:[#allocation2 + $0x20] sm:$0xff]
      %v3420 = vld [vmem:[#allocation2 + $0x28] sm:$0xff]
      %v3421 = vld [vmem:[#allocation2 + $0x30] sm:$0xff]
      %v3422 = vld [vmem:[#allocation2 + $0x38] sm:$0xff]
      %v3423 = vld [vmem:[#allocation2 + $0x40] sm:$0xff]
      %v3424 = vld [vmem:[#allocation2 + $0x48] sm:$0xff]
      %v3425 = vld [vmem:[#allocation2 + $0x50] sm:$0xff]
      %v3426 = vld [vmem:[#allocation2 + $0x58] sm:$0xff]
      %v3427 = vld [vmem:[#allocation2 + $0x60] sm:$0xff]
      %v3428 = vld [vmem:[#allocation2 + $0x68] sm:$0xff]
      %v3429 = vld [vmem:[#allocation2 + $0x70] sm:$0xff]
      %v3430 = vld [vmem:[#allocation2 + $0x78] sm:$0xff]
      %v3431 = vadd.f32 %v3415, %v3399
      %v3432 = vadd.f32 %v3416, %v3400
      %v3433 = vadd.f32 %v3417, %v3401
      %v3434 = vadd.f32 %v3418, %v3402
      %v3435 = vadd.f32 %v3419, %v3403
      %v3436 = vadd.f32 %v3420, %v3404
      %v3437 = vadd.f32 %v3421, %v3405
      %v3438 = vadd.f32 %v3422, %v3406
      %v3439 = vadd.f32 %v3423, %v3407
      %v3440 = vadd.f32 %v3424, %v3408
      %v3441 = vadd.f32 %v3425, %v3409
      %v3442 = vadd.f32 %v3426, %v3410
      %v3443 = vadd.f32 %v3427, %v3411
      %v3444 = vadd.f32 %v3428, %v3412
      %v3445 = vadd.f32 %v3429, %v3413
      %v3446 = vadd.f32 %v3430, %v3414
      %3447 = vst [vmem:[#allocation2] sm:$0xff] %v3431
      %3448 = vst [vmem:[#allocation2 + $0x8] sm:$0xff] %v3432
      %3449 = vst [vmem:[#allocation2 + $0x10] sm:$0xff] %v3433
      %3450 = vst [vmem:[#allocation2 + $0x18] sm:$0xff] %v3434
      %3451 = vst [vmem:[#allocation2 + $0x20] sm:$0xff] %v3435
      %3452 = vst [vmem:[#allocation2 + $0x28] sm:$0xff] %v3436
      %3453 = vst [vmem:[#allocation2 + $0x30] sm:$0xff] %v3437
      %3454 = vst [vmem:[#allocation2 + $0x38] sm:$0xff] %v3438
      %3455 = vst [vmem:[#allocation2 + $0x40] sm:$0xff] %v3439
      %3456 = vst [vmem:[#allocation2 + $0x48] sm:$0xff] %v3440
      %3457 = vst [vmem:[#allocation2 + $0x50] sm:$0xff] %v3441
      %3458 = vst [vmem:[#allocation2 + $0x58] sm:$0xff] %v3442
      %3459 = vst [vmem:[#allocation2 + $0x60] sm:$0xff] %v3443
      %3460 = vst [vmem:[#allocation2 + $0x68] sm:$0xff] %v3444
      %3461 = vst [vmem:[#allocation2 + $0x70] sm:$0xff] %v3445
      %3462 = vst [vmem:[#allocation2 + $0x78] sm:$0xff] %v3446
      %v3463 = vld [vmem:[#allocation3] sm:$0xff]
      %v3464 = vld [vmem:[#allocation3 + $0x8] sm:$0xff]
      %v3465 = vld [vmem:[#allocation3 + $0x10] sm:$0xff]
      %v3466 = vld [vmem:[#allocation3 + $0x18] sm:$0xff]
      %v3467 = vld [vmem:[#allocation3 + $0x20] sm:$0xff]
      %v3468 = vld [vmem:[#allocation3 + $0x28] sm:$0xff]
      %v3469 = vld [vmem:[#allocation3 + $0x30] sm:$0xff]
      %v3470 = vld [vmem:[#allocation3 + $0x38] sm:$0xff]
      %v3471 = vld [vmem:[#allocation3 + $0x40] sm:$0xff]
      %v3472 = vld [vmem:[#allocation3 + $0x48] sm:$0xff]
      %v3473 = vld [vmem:[#allocation3 + $0x50] sm:$0xff]
      %v3474 = vld [vmem:[#allocation3 + $0x58] sm:$0xff]
      %v3475 = vld [vmem:[#allocation3 + $0x60] sm:$0xff]
      %v3476 = vld [vmem:[#allocation3 + $0x68] sm:$0xff]
      %v3477 = vld [vmem:[#allocation3 + $0x70] sm:$0xff]
      %v3478 = vld [vmem:[#allocation3 + $0x78] sm:$0xff]
      %v3479 = vadd.f32 %v3463, %v3399
      %v3480 = vadd.f32 %v3464, %v3400
      %v3481 = vadd.f32 %v3465, %v3401
      %v3482 = vadd.f32 %v3466, %v3402
      %v3483 = vadd.f32 %v3467, %v3403
      %v3484 = vadd.f32 %v3468, %v3404
      %v3485 = vadd.f32 %v3469, %v3405
      %v3486 = vadd.f32 %v3470, %v3406
      %v3487 = vadd.f32 %v3471, %v3407
      %v3488 = vadd.f32 %v3472, %v3408
      %v3489 = vadd.f32 %v3473, %v3409
      %v3490 = vadd.f32 %v3474, %v3410
      %v3491 = vadd.f32 %v3475, %v3411
      %v3492 = vadd.f32 %v3476, %v3412
      %v3493 = vadd.f32 %v3477, %v3413
      %v3494 = vadd.f32 %v3478, %v3414
      %3495 = vst [vmem:[#allocation3] sm:$0xff] %v3479
      %3496 = vst [vmem:[#allocation3 + $0x8] sm:$0xff] %v3480
      %3497 = vst [vmem:[#allocation3 + $0x10] sm:$0xff] %v3481
      %3498 = vst [vmem:[#allocation3 + $0x18] sm:$0xff] %v3482
      %3499 = vst [vmem:[#allocation3 + $0x20] sm:$0xff] %v3483
      %3500 = vst [vmem:[#allocation3 + $0x28] sm:$0xff] %v3484
      %3501 = vst [vmem:[#allocation3 + $0x30] sm:$0xff] %v3485
      %3502 = vst [vmem:[#allocation3 + $0x38] sm:$0xff] %v3486
      %3503 = vst [vmem:[#allocation3 + $0x40] sm:$0xff] %v3487
      %3504 = vst [vmem:[#allocation3 + $0x48] sm:$0xff] %v3488
      %3505 = vst [vmem:[#allocation3 + $0x50] sm:$0xff] %v3489
      %3506 = vst [vmem:[#allocation3 + $0x58] sm:$0xff] %v3490
      %3507 = vst [vmem:[#allocation3 + $0x60] sm:$0xff] %v3491
      %3508 = vst [vmem:[#allocation3 + $0x68] sm:$0xff] %v3492
      %3509 = vst [vmem:[#allocation3 + $0x70] sm:$0xff] %v3493
      %3510 = vst [vmem:[#allocation3 + $0x78] sm:$0xff] %v3494
      %p3511 = scmp.eq.s32.totalorder %s31, 14
      // Predicated region
      $region77: #{wavenet_forward.1} parent=71 // pred_check
        %p3512 = pneg %p3511
      $region78: #{wavenet_forward.1} parent=71 // pred_check_branch
        %3514 = sbr.rel (%p3512) target = $region80
      $region79: #{wavenet_forward.1} parent=71 // pred_region
        %v3515 = vld [vmem:[#allocation3] sm:$0xff]
        %v3516 = vld [vmem:[#allocation3 + $0x8] sm:$0xff]
        %v3517 = vld [vmem:[#allocation3 + $0x10] sm:$0xff]
        %v3518 = vld [vmem:[#allocation3 + $0x18] sm:$0xff]
        %v3519 = vld [vmem:[#allocation3 + $0x20] sm:$0xff]
        %v3520 = vld [vmem:[#allocation3 + $0x28] sm:$0xff]
        %v3521 = vld [vmem:[#allocation3 + $0x30] sm:$0xff]
        %v3522 = vld [vmem:[#allocation3 + $0x38] sm:$0xff]
        %v3523 = vld [vmem:[#allocation3 + $0x40] sm:$0xff]
        %v3524 = vld [vmem:[#allocation3 + $0x48] sm:$0xff]
        %v3525 = vld [vmem:[#allocation3 + $0x50] sm:$0xff]
        %v3526 = vld [vmem:[#allocation3 + $0x58] sm:$0xff]
        %v3527 = vld [vmem:[#allocation3 + $0x60] sm:$0xff]
        %v3528 = vld [vmem:[#allocation3 + $0x68] sm:$0xff]
        %v3529 = vld [vmem:[#allocation3 + $0x70] sm:$0xff]
        %v3530 = vld [vmem:[#allocation3 + $0x78] sm:$0xff]
        %v3531 = vpack.c.bf16 %v3516, %v3515
        %v3532 = vpack.c.bf16 %v3518, %v3517
        %v3533 = vpack.c.bf16 %v3520, %v3519
        %v3534 = vpack.c.bf16 %v3522, %v3521
        %v3535 = vpack.c.bf16 %v3524, %v3523
        %v3536 = vpack.c.bf16 %v3526, %v3525
        %v3537 = vpack.c.bf16 %v3528, %v3527
        %v3538 = vpack.c.bf16 %v3530, %v3529
        %v3539 = vld [vmem:[%s11] sm:$0xf]
        %v3540 = vld [vmem:[%s11 + $0x4] sm:$0xf]
        %v3541 = vld [vmem:[%s11 + $0x8] sm:$0xf]
        %v3542 = vld [vmem:[%s11 + $0xc] sm:$0xf]
        %v3543 = vld [vmem:[%s11 + $0x10] sm:$0xf]
        %v3544 = vld [vmem:[%s11 + $0x14] sm:$0xf]
        %v3545 = vld [vmem:[%s11 + $0x18] sm:$0xf]
        %v3546 = vld [vmem:[%s11 + $0x1c] sm:$0xf]
        %v3547 = vld [vmem:[%s11 + $0x20] sm:$0xf]
        %v3548 = vld [vmem:[%s11 + $0x24] sm:$0xf]
        %v3549 = vld [vmem:[%s11 + $0x28] sm:$0xf]
        %v3550 = vld [vmem:[%s11 + $0x2c] sm:$0xf]
        %v3551 = vld [vmem:[%s11 + $0x30] sm:$0xf]
        %v3552 = vld [vmem:[%s11 + $0x34] sm:$0xf]
        %v3553 = vld [vmem:[%s11 + $0x38] sm:$0xf]
        %v3554 = vld [vmem:[%s11 + $0x3c] sm:$0xf]
        %v3571 = vunpack.c.l.b16 %v3539
        %v3572 = vunpack.c.l.b16 %v3540
        %v3573 = vunpack.c.l.b16 %v3541
        %v3574 = vunpack.c.l.b16 %v3542
        %v3575 = vunpack.c.l.b16 %v3543
        %v3576 = vunpack.c.l.b16 %v3544
        %v3577 = vunpack.c.l.b16 %v3545
        %v3578 = vunpack.c.l.b16 %v3546
        %v3579 = vunpack.c.l.b16 %v3547
        %v3580 = vunpack.c.l.b16 %v3548
        %v3581 = vunpack.c.l.b16 %v3549
        %v3582 = vunpack.c.l.b16 %v3550
        %v3583 = vunpack.c.l.b16 %v3551
        %v3584 = vunpack.c.l.b16 %v3552
        %v3585 = vunpack.c.l.b16 %v3553
        %v3586 = vunpack.c.l.b16 %v3554
        %v3587 = vpack.c.b16 %v3572, %v3571
        %v3588 = vpack.c.b16 %v3574, %v3573
        %v3589 = vpack.c.b16 %v3576, %v3575
        %v3590 = vpack.c.b16 %v3578, %v3577
        %v3591 = vpack.c.b16 %v3580, %v3579
        %v3592 = vpack.c.b16 %v3582, %v3581
        %v3593 = vpack.c.b16 %v3584, %v3583
        %v3594 = vpack.c.b16 %v3586, %v3585
        %3603 = vmatprep.subr.bf16.mxu0 0
        %3604 = vmatpush1.bf16.msra.mxu0 %v3594
        %3605 = vmatprep.subr.bf16.mxu0 0
        %3606 = vmatpush1.bf16.msra.mxu0 %v3593
        %3607 = vmatprep.subr.bf16.mxu0 0
        %3608 = vmatpush1.bf16.msra.mxu0 %v3592
        %3609 = vmatprep.subr.bf16.mxu0 0
        %3610 = vmatpush1.bf16.msra.mxu0 %v3591
        %3611 = vmatprep.subr.bf16.mxu0 0
        %3612 = vmatpush1.bf16.msra.mxu0 %v3590
        %3613 = vmatprep.subr.bf16.mxu0 0
        %3614 = vmatpush1.bf16.msra.mxu0 %v3589
        %3615 = vmatprep.subr.bf16.mxu0 0
        %3616 = vmatpush1.bf16.msra.mxu0 %v3588
        %3617 = vmatprep.subr.bf16.mxu0 0
        %3618 = vmatpush1.bf16.msra.mxu0 %v3587
        %3619 = vmatprep.subr.bf16.mxu0 0
        %3620 = vmatpush2.bf16.msra.mxu0 0
        %3621 = vmatprep.subr.bf16.mxu0 0
        %3622 = vmatpush2.bf16.msra.mxu0 0
        %3623 = vmatprep.subr.bf16.mxu0 0
        %3624 = vmatpush2.bf16.msra.mxu0 0
        %3625 = vmatprep.subr.bf16.mxu0 0
        %3626 = vmatpush2.bf16.msra.mxu0 0
        %3627 = vmatprep.subr.bf16.mxu0 0
        %3628 = vmatpush2.bf16.msra.mxu0 0
        %3629 = vmatprep.subr.bf16.mxu0 0
        %3630 = vmatpush2.bf16.msra.mxu0 0
        %3631 = vmatprep.subr.bf16.mxu0 0
        %3632 = vmatpush2.bf16.msra.mxu0 0
        %3633 = vmatprep.subr.bf16.mxu0 0
        %3634 = vmatpush2.bf16.msra.mxu0 0
        %3635 = vmatprep.mubr.bf16.mxu0 0
        %3636 = vmatmul.mubr.bf16.gmra.mxu0 %v3531
        %v3637 = vpop.f32.mrf.mxu0
        %v3638 = vadd.f32 0.0, %v3637
        %v3639 = vpop.f32.mrf.mxu0
        %v3640 = vpop.f32.mrf.mxu0
        %v3641 = vadd.f32 0.0, %v3640
        %v3642 = vpop.f32.mrf.mxu0
        %3643 = vmatprep.mubr.bf16.mxu0 0
        %3644 = vmatmul.mubr.bf16.gmra.mxu0 %v3532
        %v3645 = vpop.f32.mrf.mxu0
        %v3646 = vadd.f32 0.0, %v3645
        %v3647 = vpop.f32.mrf.mxu0
        %v3648 = vpop.f32.mrf.mxu0
        %v3649 = vadd.f32 0.0, %v3648
        %v3650 = vpop.f32.mrf.mxu0
        %3651 = vmatprep.mubr.bf16.mxu0 0
        %3652 = vmatmul.mubr.bf16.gmra.mxu0 %v3533
        %v3653 = vpop.f32.mrf.mxu0
        %v3654 = vadd.f32 0.0, %v3653
        %v3655 = vpop.f32.mrf.mxu0
        %v3656 = vpop.f32.mrf.mxu0
        %v3657 = vadd.f32 0.0, %v3656
        %v3658 = vpop.f32.mrf.mxu0
        %3659 = vmatprep.mubr.bf16.mxu0 0
        %3660 = vmatmul.mubr.bf16.gmra.mxu0 %v3534
        %v3661 = vpop.f32.mrf.mxu0
        %v3662 = vadd.f32 0.0, %v3661
        %v3663 = vpop.f32.mrf.mxu0
        %v3664 = vpop.f32.mrf.mxu0
        %v3665 = vadd.f32 0.0, %v3664
        %v3666 = vpop.f32.mrf.mxu0
        %3667 = vmatprep.mubr.bf16.mxu0 0
        %3668 = vmatmul.mubr.bf16.gmra.mxu0 %v3535
        %v3669 = vpop.f32.mrf.mxu0
        %v3670 = vadd.f32 0.0, %v3669
        %v3671 = vpop.f32.mrf.mxu0
        %v3672 = vpop.f32.mrf.mxu0
        %v3673 = vadd.f32 0.0, %v3672
        %v3674 = vpop.f32.mrf.mxu0
        %3675 = vmatprep.mubr.bf16.mxu0 0
        %3676 = vmatmul.mubr.bf16.gmra.mxu0 %v3536
        %v3677 = vpop.f32.mrf.mxu0
        %v3678 = vadd.f32 0.0, %v3677
        %v3679 = vpop.f32.mrf.mxu0
        %v3680 = vpop.f32.mrf.mxu0
        %v3681 = vadd.f32 0.0, %v3680
        %v3682 = vpop.f32.mrf.mxu0
        %3683 = vmatprep.mubr.bf16.mxu0 0
        %3684 = vmatmul.mubr.bf16.gmra.mxu0 %v3537
        %v3685 = vpop.f32.mrf.mxu0
        %v3686 = vadd.f32 0.0, %v3685
        %v3687 = vpop.f32.mrf.mxu0
        %v3688 = vpop.f32.mrf.mxu0
        %v3689 = vadd.f32 0.0, %v3688
        %v3690 = vpop.f32.mrf.mxu0
        %3691 = vmatprep.mubr.bf16.mxu0 0
        %3692 = vmatmul.mubr.bf16.gmra.mxu0 %v3538
        %v3693 = vpop.f32.mrf.mxu0
        %v3694 = vadd.f32 0.0, %v3693
        %v3695 = vpop.f32.mrf.mxu0
        %v3696 = vpop.f32.mrf.mxu0
        %v3697 = vadd.f32 0.0, %v3696
        %v3698 = vpop.f32.mrf.mxu0
        %3699 = vdwg.mxu0
        %v3700 = vld [vmem:[%s3] sm:$0x1]
        %v3701 = vld [vmem:[%s4] sm:$0x1]
        %v3702 = vadd.f32 %v3638, %v3641
        %v3703 = vadd.f32 %v3702, %v3646
        %v3704 = vadd.f32 %v3703, %v3649
        %v3705 = vadd.f32 %v3704, %v3654
        %v3706 = vadd.f32 %v3705, %v3657
        %v3707 = vadd.f32 %v3706, %v3662
        %v3708 = vadd.f32 %v3707, %v3665
        %v3709 = vadd.f32 %v3708, %v3670
        %v3710 = vadd.f32 %v3709, %v3673
        %v3711 = vadd.f32 %v3710, %v3678
        %v3712 = vadd.f32 %v3711, %v3681
        %v3713 = vadd.f32 %v3712, %v3686
        %v3714 = vadd.f32 %v3713, %v3689
        %v3715 = vadd.f32 %v3714, %v3694
        %v3716 = vadd.f32 %v3715, %v3697
        %v3717 = vrot.slane %v3716, 4
        %v3718 = vadd.f32 %v3716, %v3717
        %v3719 = vrot.slane %v3718, 2
        %v3720 = vadd.f32 %v3718, %v3719
        %v3721 = vrot.slane %v3720, 1
        %v3722 = vadd.f32 %v3720, %v3721
        %v3723 = vmul.f32 %v3638, %v3638
        %v3724 = vmul.f32 %v3641, %v3641
        %v3725 = vmul.f32 %v3646, %v3646
        %v3726 = vmul.f32 %v3649, %v3649
        %v3727 = vmul.f32 %v3654, %v3654
        %v3728 = vmul.f32 %v3657, %v3657
        %v3729 = vmul.f32 %v3662, %v3662
        %v3730 = vmul.f32 %v3665, %v3665
        %v3731 = vmul.f32 %v3670, %v3670
        %v3732 = vmul.f32 %v3673, %v3673
        %v3733 = vmul.f32 %v3678, %v3678
        %v3734 = vmul.f32 %v3681, %v3681
        %v3735 = vmul.f32 %v3686, %v3686
        %v3736 = vmul.f32 %v3689, %v3689
        %v3737 = vmul.f32 %v3694, %v3694
        %v3738 = vmul.f32 %v3697, %v3697
        %v3739 = vadd.f32 %v3723, %v3724
        %v3740 = vadd.f32 %v3739, %v3725
        %v3741 = vadd.f32 %v3740, %v3726
        %v3742 = vadd.f32 %v3741, %v3727
        %v3743 = vadd.f32 %v3742, %v3728
        %v3744 = vadd.f32 %v3743, %v3729
        %v3745 = vadd.f32 %v3744, %v3730
        %v3746 = vadd.f32 %v3745, %v3731
        %v3747 = vadd.f32 %v3746, %v3732
        %v3748 = vadd.f32 %v3747, %v3733
        %v3749 = vadd.f32 %v3748, %v3734
        %v3750 = vadd.f32 %v3749, %v3735
        %v3751 = vadd.f32 %v3750, %v3736
        %v3752 = vadd.f32 %v3751, %v3737
        %v3753 = vadd.f32 %v3752, %v3738
        %v3754 = vrot.slane %v3753, 4
        %v3755 = vadd.f32 %v3753, %v3754
        %v3756 = vrot.slane %v3755, 2
        %v3757 = vadd.f32 %v3755, %v3756
        %v3758 = vrot.slane %v3757, 1
        %v3759 = vadd.f32 %v3757, %v3758
        %v3760 = vmul.f32 %v3722, 0.0078125
        %v3761 = vmul.f32 %v3759, 0.0078125
        %v3762 = vmul.f32 %v3760, %v3760
        %v3763 = vsub.f32 %v3761, %v3762
        %v3764 = vmax.f32 %v3763, 0.0
        %v3765 = vadd.f32 %v3764, 1e-05
        %v3766 = vrsqrt.pop %v3765
        %v3767 = vmul.f32 %v3700, %v3766
        %v3768 = vmul.f32 %v3760, %v3767
        %v3769 = vsub.f32 %v3701, %v3768
        %v3771 = vlaneseq
        %v3772 = vshrl.u32 %v3771, 7
        %v3773 = vsub.s32 0, %v3772
        %v3774 = vrot.slane %v3767, %v3773
        %v3776 = vmul.f32 %v3638, %v3774
        %v3777 = vmul.f32 %v3641, %v3774
        %v3778 = vmul.f32 %v3646, %v3774
        %v3779 = vmul.f32 %v3649, %v3774
        %v3780 = vmul.f32 %v3654, %v3774
        %v3781 = vmul.f32 %v3657, %v3774
        %v3782 = vmul.f32 %v3662, %v3774
        %v3783 = vmul.f32 %v3665, %v3774
        %v3784 = vmul.f32 %v3670, %v3774
        %v3785 = vmul.f32 %v3673, %v3774
        %v3786 = vmul.f32 %v3678, %v3774
        %v3787 = vmul.f32 %v3681, %v3774
        %v3788 = vmul.f32 %v3686, %v3774
        %v3789 = vmul.f32 %v3689, %v3774
        %v3790 = vmul.f32 %v3694, %v3774
        %v3791 = vmul.f32 %v3697, %v3774
        %v3793 = vlaneseq
        %v3794 = vshrl.u32 %v3793, 7
        %v3795 = vsub.s32 0, %v3794
        %v3796 = vrot.slane %v3769, %v3795
        %v3798 = vadd.f32 %v3776, %v3796
        %v3799 = vadd.f32 %v3777, %v3796
        %v3800 = vadd.f32 %v3778, %v3796
        %v3801 = vadd.f32 %v3779, %v3796
        %v3802 = vadd.f32 %v3780, %v3796
        %v3803 = vadd.f32 %v3781, %v3796
        %v3804 = vadd.f32 %v3782, %v3796
        %v3805 = vadd.f32 %v3783, %v3796
        %v3806 = vadd.f32 %v3784, %v3796
        %v3807 = vadd.f32 %v3785, %v3796
        %v3808 = vadd.f32 %v3786, %v3796
        %v3809 = vadd.f32 %v3787, %v3796
        %v3810 = vadd.f32 %v3788, %v3796
        %v3811 = vadd.f32 %v3789, %v3796
        %v3812 = vadd.f32 %v3790, %v3796
        %v3813 = vadd.f32 %v3791, %v3796
        %v3814 = vtanh.pop %v3798
        %v3815 = vtanh.pop %v3799
        %v3816 = vtanh.pop %v3800
        %v3817 = vtanh.pop %v3801
        %v3818 = vtanh.pop %v3802
        %v3819 = vtanh.pop %v3803
        %v3820 = vtanh.pop %v3804
        %v3821 = vtanh.pop %v3805
        %v3822 = vtanh.pop %v3806
        %v3823 = vtanh.pop %v3807
        %v3824 = vtanh.pop %v3808
        %v3825 = vtanh.pop %v3809
        %v3826 = vtanh.pop %v3810
        %v3827 = vtanh.pop %v3811
        %v3828 = vtanh.pop %v3812
        %v3829 = vtanh.pop %v3813
        %v3830 = vpack.c.bf16 %v3815, %v3814
        %v3831 = vpack.c.bf16 %v3817, %v3816
        %v3832 = vpack.c.bf16 %v3819, %v3818
        %v3833 = vpack.c.bf16 %v3821, %v3820
        %v3834 = vpack.c.bf16 %v3823, %v3822
        %v3835 = vpack.c.bf16 %v3825, %v3824
        %v3836 = vpack.c.bf16 %v3827, %v3826
        %v3837 = vpack.c.bf16 %v3829, %v3828
        %v3838 = vld [vmem:[%s12] sm:$0xf]
        %v3839 = vld [vmem:[%s12 + $0x4] sm:$0xf]
        %v3840 = vld [vmem:[%s12 + $0x8] sm:$0xf]
        %v3841 = vld [vmem:[%s12 + $0xc] sm:$0xf]
        %v3842 = vld [vmem:[%s12 + $0x10] sm:$0xf]
        %v3843 = vld [vmem:[%s12 + $0x14] sm:$0xf]
        %v3844 = vld [vmem:[%s12 + $0x18] sm:$0xf]
        %v3845 = vld [vmem:[%s12 + $0x1c] sm:$0xf]
        %v3846 = vld [vmem:[%s12 + $0x20] sm:$0xf]
        %v3847 = vld [vmem:[%s12 + $0x24] sm:$0xf]
        %v3848 = vld [vmem:[%s12 + $0x28] sm:$0xf]
        %v3849 = vld [vmem:[%s12 + $0x2c] sm:$0xf]
        %v3850 = vld [vmem:[%s12 + $0x30] sm:$0xf]
        %v3851 = vld [vmem:[%s12 + $0x34] sm:$0xf]
        %v3852 = vld [vmem:[%s12 + $0x38] sm:$0xf]
        %v3853 = vld [vmem:[%s12 + $0x3c] sm:$0xf]
        %v3854 = vld [vmem:[%s13] sm:$0x1]
        %v3856 = vlaneseq
        %v3857 = vshrl.u32 %v3856, 7
        %v3858 = vsub.s32 0, %v3857
        %v3859 = vrot.slane %v3854, %v3858
        %v3877 = vunpack.c.l.b16 %v3838
        %v3878 = vunpack.c.l.b16 %v3839
        %v3879 = vunpack.c.l.b16 %v3840
        %v3880 = vunpack.c.l.b16 %v3841
        %v3881 = vunpack.c.l.b16 %v3842
        %v3882 = vunpack.c.l.b16 %v3843
        %v3883 = vunpack.c.l.b16 %v3844
        %v3884 = vunpack.c.l.b16 %v3845
        %v3885 = vunpack.c.l.b16 %v3846
        %v3886 = vunpack.c.l.b16 %v3847
        %v3887 = vunpack.c.l.b16 %v3848
        %v3888 = vunpack.c.l.b16 %v3849
        %v3889 = vunpack.c.l.b16 %v3850
        %v3890 = vunpack.c.l.b16 %v3851
        %v3891 = vunpack.c.l.b16 %v3852
        %v3892 = vunpack.c.l.b16 %v3853
        %v3893 = vpack.c.b16 %v3878, %v3877
        %v3894 = vpack.c.b16 %v3880, %v3879
        %v3895 = vpack.c.b16 %v3882, %v3881
        %v3896 = vpack.c.b16 %v3884, %v3883
        %v3897 = vpack.c.b16 %v3886, %v3885
        %v3898 = vpack.c.b16 %v3888, %v3887
        %v3899 = vpack.c.b16 %v3890, %v3889
        %v3900 = vpack.c.b16 %v3892, %v3891
        %3909 = vmatprep.subr.bf16.mxu0 0
        %3910 = vmatpush1.bf16.msra.mxu0 %v3900
        %3911 = vmatprep.subr.bf16.mxu0 0
        %3912 = vmatpush1.bf16.msra.mxu0 %v3899
        %3913 = vmatprep.subr.bf16.mxu0 0
        %3914 = vmatpush1.bf16.msra.mxu0 %v3898
        %3915 = vmatprep.subr.bf16.mxu0 0
        %3916 = vmatpush1.bf16.msra.mxu0 %v3897
        %3917 = vmatprep.subr.bf16.mxu0 0
        %3918 = vmatpush1.bf16.msra.mxu0 %v3896
        %3919 = vmatprep.subr.bf16.mxu0 0
        %3920 = vmatpush1.bf16.msra.mxu0 %v3895
        %3921 = vmatprep.subr.bf16.mxu0 0
        %3922 = vmatpush1.bf16.msra.mxu0 %v3894
        %3923 = vmatprep.subr.bf16.mxu0 0
        %3924 = vmatpush1.bf16.msra.mxu0 %v3893
        %3925 = vmatprep.subr.bf16.mxu0 0
        %3926 = vmatpush2.bf16.msra.mxu0 0
        %3927 = vmatprep.subr.bf16.mxu0 0
        %3928 = vmatpush2.bf16.msra.mxu0 0
        %3929 = vmatprep.subr.bf16.mxu0 0
        %3930 = vmatpush2.bf16.msra.mxu0 0
        %3931 = vmatprep.subr.bf16.mxu0 0
        %3932 = vmatpush2.bf16.msra.mxu0 0
        %3933 = vmatprep.subr.bf16.mxu0 0
        %3934 = vmatpush2.bf16.msra.mxu0 0
        %3935 = vmatprep.subr.bf16.mxu0 0
        %3936 = vmatpush2.bf16.msra.mxu0 0
        %3937 = vmatprep.subr.bf16.mxu0 0
        %3938 = vmatpush2.bf16.msra.mxu0 0
        %3939 = vmatprep.subr.bf16.mxu0 0
        %3940 = vmatpush2.bf16.msra.mxu0 0
        %3941 = vmatprep.mubr.bf16.mxu0 0
        %3942 = vmatmul.mubr.bf16.gmra.mxu0 %v3830
        %v3943 = vpop.f32.mrf.mxu0
        %v3944 = vadd.f32 %v3859, %v3943
        %v3945 = vpop.f32.mrf.mxu0
        %v3946 = vpop.f32.mrf.mxu0
        %v3947 = vadd.f32 %v3859, %v3946
        %v3948 = vpop.f32.mrf.mxu0
        %3949 = vmatprep.mubr.bf16.mxu0 0
        %3950 = vmatmul.mubr.bf16.gmra.mxu0 %v3831
        %v3951 = vpop.f32.mrf.mxu0
        %v3952 = vadd.f32 %v3859, %v3951
        %v3953 = vpop.f32.mrf.mxu0
        %v3954 = vpop.f32.mrf.mxu0
        %v3955 = vadd.f32 %v3859, %v3954
        %v3956 = vpop.f32.mrf.mxu0
        %3957 = vmatprep.mubr.bf16.mxu0 0
        %3958 = vmatmul.mubr.bf16.gmra.mxu0 %v3832
        %v3959 = vpop.f32.mrf.mxu0
        %v3960 = vadd.f32 %v3859, %v3959
        %v3961 = vpop.f32.mrf.mxu0
        %v3962 = vpop.f32.mrf.mxu0
        %v3963 = vadd.f32 %v3859, %v3962
        %v3964 = vpop.f32.mrf.mxu0
        %3965 = vmatprep.mubr.bf16.mxu0 0
        %3966 = vmatmul.mubr.bf16.gmra.mxu0 %v3833
        %v3967 = vpop.f32.mrf.mxu0
        %v3968 = vadd.f32 %v3859, %v3967
        %v3969 = vpop.f32.mrf.mxu0
        %v3970 = vpop.f32.mrf.mxu0
        %v3971 = vadd.f32 %v3859, %v3970
        %v3972 = vpop.f32.mrf.mxu0
        %3973 = vmatprep.mubr.bf16.mxu0 0
        %3974 = vmatmul.mubr.bf16.gmra.mxu0 %v3834
        %v3975 = vpop.f32.mrf.mxu0
        %v3976 = vadd.f32 %v3859, %v3975
        %v3977 = vpop.f32.mrf.mxu0
        %v3978 = vpop.f32.mrf.mxu0
        %v3979 = vadd.f32 %v3859, %v3978
        %v3980 = vpop.f32.mrf.mxu0
        %3981 = vmatprep.mubr.bf16.mxu0 0
        %3982 = vmatmul.mubr.bf16.gmra.mxu0 %v3835
        %v3983 = vpop.f32.mrf.mxu0
        %v3984 = vadd.f32 %v3859, %v3983
        %v3985 = vpop.f32.mrf.mxu0
        %v3986 = vpop.f32.mrf.mxu0
        %v3987 = vadd.f32 %v3859, %v3986
        %v3988 = vpop.f32.mrf.mxu0
        %3989 = vmatprep.mubr.bf16.mxu0 0
        %3990 = vmatmul.mubr.bf16.gmra.mxu0 %v3836
        %v3991 = vpop.f32.mrf.mxu0
        %v3992 = vadd.f32 %v3859, %v3991
        %v3993 = vpop.f32.mrf.mxu0
        %v3994 = vpop.f32.mrf.mxu0
        %v3995 = vadd.f32 %v3859, %v3994
        %v3996 = vpop.f32.mrf.mxu0
        %3997 = vmatprep.mubr.bf16.mxu0 0
        %3998 = vmatmul.mubr.bf16.gmra.mxu0 %v3837
        %v3999 = vpop.f32.mrf.mxu0
        %v4000 = vadd.f32 %v3859, %v3999
        %v4001 = vpop.f32.mrf.mxu0
        %v4002 = vpop.f32.mrf.mxu0
        %v4003 = vadd.f32 %v3859, %v4002
        %v4004 = vpop.f32.mrf.mxu0
        %4005 = vdwg.mxu0
        %4006 = vst [vmem:[%s14] sm:$0xff] %v3944
        %4007 = vst [vmem:[%s14 + $0x8] sm:$0xff] %v3947
        %4008 = vst [vmem:[%s14 + $0x10] sm:$0xff] %v3952
        %4009 = vst [vmem:[%s14 + $0x18] sm:$0xff] %v3955
        %4010 = vst [vmem:[%s14 + $0x20] sm:$0xff] %v3960
        %4011 = vst [vmem:[%s14 + $0x28] sm:$0xff] %v3963
        %4012 = vst [vmem:[%s14 + $0x30] sm:$0xff] %v3968
        %4013 = vst [vmem:[%s14 + $0x38] sm:$0xff] %v3971
        %4014 = vst [vmem:[%s14 + $0x40] sm:$0xff] %v3976
        %4015 = vst [vmem:[%s14 + $0x48] sm:$0xff] %v3979
        %4016 = vst [vmem:[%s14 + $0x50] sm:$0xff] %v3984
        %4017 = vst [vmem:[%s14 + $0x58] sm:$0xff] %v3987
        %4018 = vst [vmem:[%s14 + $0x60] sm:$0xff] %v3992
        %4019 = vst [vmem:[%s14 + $0x68] sm:$0xff] %v3995
        %4020 = vst [vmem:[%s14 + $0x70] sm:$0xff] %v4000
        %4021 = vst [vmem:[%s14 + $0x78] sm:$0xff] %v4003
      $region80: #{wavenet_forward.1} parent=71 // pred_fallthru
        _
      // Predicated region
      $region81: #{wavenet_forward.1} parent=71 // pred_check
        %p4022 = pneg %p347
      $region82: #{wavenet_forward.1} parent=71 // pred_check_branch
        %4024 = sbr.rel (%p4022) target = $region84
      $region83: #{wavenet_forward.1} parent=71 // pred_region
        _
      $region84: #{wavenet_forward.1} parent=71 // pred_fallthru
        _
      // Predicated region
      $region85: #{wavenet_forward.1} parent=71 // pred_check
        %p4025 = pneg %p347
      $region86: #{wavenet_forward.1} parent=71 // pred_check_branch
        %4027 = sbr.rel (%p4025) target = $region88
      $region87: #{wavenet_forward.1} parent=71 // pred_region
        _
      $region88: #{wavenet_forward.1} parent=71 // pred_fallthru
        _
    $region72: #{wavenet_forward.1} parent=5 // pred_fallthru
      _
    %p4028 = scmp.le.s32.totalorder 2, %s26
    // Predicated region
    $region89: #{wavenet_forward.1} parent=5 // pred_check
      %p4029 = pneg %p4028
    $region90: #{wavenet_forward.1} parent=5 // pred_check_branch
      %4031 = sbr.rel (%p4029) target = $region92
    $region91: #{wavenet_forward.1} parent=5 // pred_region
      %s4032 = ssub.s32 %s26, 2
    $region92: #{wavenet_forward.1} parent=5 // pred_fallthru
      _
  $region6: #{wavenet_forward.1} parent=0 // loop_footer
    %s30 = sadd.s32 1, %s26
  $region7: #{wavenet_forward.1} parent=0 // loop_footer_branch
    %25 = sbr.rel target = $region3
  $region8: #{wavenet_forward.1} parent=0 // loop_exit
    _

</llo_original>
